<compile_context>
chip_gen: v7x
topology: tpu7x:2x2x1
jax: 0.10.0
libtpu: 0.0.40
codegen_flags: <defaults>
</compile_context>

<pallas_src>
import functools
import math

import jax
import jax.numpy as jnp
from jax.experimental import pallas as pl
from jax.experimental.pallas import tpu as pltpu

LN_EPS = 1e-5
NEG_INF = -1e30


# ------------------------------ helpers ------------------------------------
def _layernorm_f32(x, g, b):
    """LayerNorm with statistics in f32 (inputs may be bf16)."""
    x = x.astype(jnp.float32)
    mu = jnp.mean(x, axis=-1, keepdims=True)
    var = jnp.mean(jnp.square(x - mu), axis=-1, keepdims=True)
    return (x - mu) * jax.lax.rsqrt(var + LN_EPS) * g.astype(jnp.float32) \
        + b.astype(jnp.float32)


def _pick_tile(full_dim, target, unit=128):
    """Largest multiple-of-`unit` tile <= target dividing full_dim, falling
    back to the full dimension (full-extent blocks are always legal)."""
    if full_dim <= target:
        return full_dim
    t = (target // unit) * unit
    while t >= unit:
        if full_dim % t == 0:
            return t
        t -= unit
    return full_dim


def _compiler_params(dimension_semantics, blocks, scratch=()):
    """CompilerParams with an explicit VMEM budget: double-buffered blocks +
    scratch + headroom, clamped to [4 MiB, 64 MiB] (safe on v5e/v6e/v7x)."""
    blk = sum(math.prod(s) * jnp.dtype(d).itemsize for s, d in blocks)
    scr = sum(math.prod(s) * jnp.dtype(d).itemsize for s, d in scratch)
    limit = int(min(max(2 * blk + scr + (2 << 20), 4 << 20), 64 << 20))
    return pltpu.CompilerParams(dimension_semantics=dimension_semantics,
                                vmem_limit_bytes=limit)


# --------------------- kernel 1: LN1 + fused per-head QKV -------------------
def qkv_proj_kernel(x_ref, g_ref, b_ref, w_ref, q_ref, k_ref, v_ref, xn_ref,
                    *, head_dim):
    # LN1 once per (batch, token-tile); reused across the (arbitrary) head axis.
    @pl.when(pl.program_id(2) == 0)
    def _():
        xn_ref[...] = _layernorm_f32(x_ref[0], g_ref[...],
                                     b_ref[...]).astype(xn_ref.dtype)

    # Per-head fused [q|k|v] projection: (ts, D) @ (D, 3*hd).
    qkv = jnp.dot(xn_ref[...], w_ref[0],
                  preferred_element_type=jnp.float32).astype(q_ref.dtype)
    q_ref[0] = qkv[:, :head_dim]
    k_ref[0] = qkv[:, head_dim:2 * head_dim]
    v_ref[0] = qkv[:, 2 * head_dim:]


def run_qkv_proj(x, ln_g, ln_b, wqkv_h, *, num_heads, ts):
    B, S, D = x.shape
    H = num_heads
    hd = wqkv_h.shape[-1] // 3
    cd = x.dtype
    out = jax.ShapeDtypeStruct((B * H, S, hd), cd)   # head-major, no glue needed
    qkv_map = lambda b, si, h: (b * H + h, si, 0)
    return pl.pallas_call(
        functools.partial(qkv_proj_kernel, head_dim=hd),
        out_shape=(out, out, out),
        grid=(B, S // ts, H),
        in_specs=[
            pl.BlockSpec((1, ts, D), lambda b, si, h: (b, si, 0)),
            pl.BlockSpec((1, D), lambda b, si, h: (0, 0)),
            pl.BlockSpec((1, D), lambda b, si, h: (0, 0)),
            pl.BlockSpec((1, D, 3 * hd), lambda b, si, h: (h, 0, 0)),
        ],
        out_specs=(pl.BlockSpec((1, ts, hd), qkv_map),
                   pl.BlockSpec((1, ts, hd), qkv_map),
                   pl.BlockSpec((1, ts, hd), qkv_map)),
        scratch_shapes=[pltpu.VMEM((ts, D), cd)],         # cached LN1 output
        compiler_params=_compiler_params(
            ("parallel", "parallel", "arbitrary"),
            [((1, ts, D), cd), ((1, D), cd), ((1, D), cd),
             ((1, D, 3 * hd), cd)] + [((1, ts, hd), cd)] * 3,
            [((ts, D), cd)]),
    )(x, ln_g, ln_b, wqkv_h)


# ---- kernel 2: flash attention + per-head output projection + residual ----
def flash_attn_kernel(x_ref, q_ref, k_ref, v_ref, wo_ref, bo_ref, o_ref,
                      m_ref, l_ref, acc_ref, oacc_ref, *,
                      num_heads, approx_recip):
    qi = pl.program_id(1)
    h = pl.program_id(2)
    ki = pl.program_id(3)
    nk = pl.num_programs(3)

    @pl.when(ki == 0)                                  # per-head flash state
    def _():
        m_ref[...] = jnp.full(m_ref.shape, NEG_INF, jnp.float32)
        l_ref[...] = jnp.zeros(l_ref.shape, jnp.float32)
        acc_ref[...] = jnp.zeros(acc_ref.shape, jnp.float32)

    @pl.when((ki == 0) & (h == 0))                     # per-(b,q-tile) out acc
    def _():
        oacc_ref[...] = jnp.zeros(oacc_ref.shape, jnp.float32)

    def scores():
        # q . k^T via dot_general contracting hd of both operands (no k.T);
        # sm_scale is already folded into the q weights.
        return jax.lax.dot_general(q_ref[0], k_ref[0],
                                   (((1,), (1,)), ((), ())),
                                   preferred_element_type=jnp.float32)

    def flash_update(s):
        m_prev = m_ref[...]
        m_new = jnp.maximum(m_prev, jnp.max(s, axis=-1, keepdims=True))
        alpha = jnp.exp(m_prev - m_new)
        p = jnp.exp(s - m_new)
        l_ref[...] = alpha * l_ref[...] + jnp.sum(p, axis=-1, keepdims=True)
        acc_ref[...] = alpha * acc_ref[...] + jnp.dot(
            p.astype(v_ref.dtype), v_ref[0], preferred_element_type=jnp.float32)
        m_ref[...] = m_new

    # Interior tiles (ki < qi) are fully unmasked: no iota/where VPU work.
    @pl.when(ki < qi)
    def _():
        flash_update(scores())

    # Diagonal tile (ki == qi, tq == tkv): local causal mask.
    @pl.when(ki == qi)
    def _():
        s = scores()
        tq_, tkv_ = s.shape
        r = jax.lax.broadcasted_iota(jnp.int32, (tq_, tkv_), 0)
        c = jax.lax.broadcasted_iota(jnp.int32, (tq_, tkv_), 1)
        flash_update(s + jnp.where(c <= r, 0.0, NEG_INF))
    # Tiles with ki > qi do no compute AND no DMA (k/v index_map clamps to qi).

    @pl.when(ki == nk - 1)                             # fold head into out-proj
    def _():
        inv_l = pl.reciprocal(l_ref[...], approx=approx_recip)
        att_h = acc_ref[...] * inv_l                   # (tq, hd) f32
        oacc_ref[...] += jnp.dot(att_h.astype(wo_ref.dtype), wo_ref[0],
                                 preferred_element_type=jnp.float32)

    @pl.when((ki == nk - 1) & (h == num_heads - 1))    # residual + bias, store
    def _():
        o_ref[0] = (x_ref[0].astype(jnp.float32) + oacc_ref[...]
                    + bo_ref[...].astype(jnp.float32)).astype(o_ref.dtype)


def run_flash_attention(x, q, k, v, wo_h, bo, *, num_heads, tq, tkv,
                        approx_recip):
    assert tq == tkv, "diagonal-tile masking / DMA clamp require tq == tkv"
    B, S, D = x.shape
    H = num_heads
    hd = q.shape[-1]
    cd = x.dtype
    kernel = functools.partial(flash_attn_kernel, num_heads=H,
                               approx_recip=approx_recip)
    # Clamp to the diagonal: above-diagonal steps alias the previous block
    # index, so no new K/V DMA is issued for causally-skipped tiles.
    kv_map = lambda b, qi, h, ki: (b * H + h, jnp.minimum(ki, qi), 0)
    return pl.pallas_call(
        kernel,
        out_shape=jax.ShapeDtypeStruct((B, S, D), cd),
        grid=(B, S // tq, H, S // tkv),
        in_specs=[
            pl.BlockSpec((1, tq, D), lambda b, qi, h, ki: (b, qi, 0)),       # residual
            pl.BlockSpec((1, tq, hd), lambda b, qi, h, ki: (b * H + h, qi, 0)),
            pl.BlockSpec((1, tkv, hd), kv_map),                              # k
            pl.BlockSpec((1, tkv, hd), kv_map),                              # v
            pl.BlockSpec((1, hd, D), lambda b, qi, h, ki: (h, 0, 0)),        # wo[h]
            pl.BlockSpec((1, D), lambda b, qi, h, ki: (0, 0)),               # bo
        ],
        out_specs=pl.BlockSpec((1, tq, D), lambda b, qi, h, ki: (b, qi, 0)),
        scratch_shapes=[
            pltpu.VMEM((tq, 1), jnp.float32),      # running max  m
            pltpu.VMEM((tq, 1), jnp.float32),      # running sum  l
            pltpu.VMEM((tq, hd), jnp.float32),     # per-head accumulator
            pltpu.VMEM((tq, D), jnp.float32),      # output-projection accumulator
        ],
        input_output_aliases={0: 0},               # residual stream in-place
        compiler_params=_compiler_params(
            ("parallel", "parallel", "arbitrary", "arbitrary"),
            [((1, tq, D), cd), ((1, tq, hd), cd), ((1, tkv, hd), cd),
             ((1, tkv, hd), cd), ((1, hd, D), cd), ((1, D), cd),
             ((1, tq, D), cd)],
            [((tq, 1), jnp.float32), ((tq, 1), jnp.float32),
             ((tq, hd), jnp.float32), ((tq, D), jnp.float32)]),
    )(x, q, k, v, wo_h, bo)


# ---------------- kernel 3: LN2 + FFN (hidden dim tiled) --------------------
def ffn_kernel(y_ref, g_ref, b_ref, w1_ref, b1_ref, w2_ref, b2_ref, o_ref,
               xn_ref, acc_ref):
    kf = pl.program_id(1)

    @pl.when(kf == 0)
    def _():
        xn_ref[...] = _layernorm_f32(y_ref[...], g_ref[...],
                                     b_ref[...]).astype(xn_ref.dtype)
        acc_ref[...] = jnp.zeros(acc_ref.shape, jnp.float32)

    h1 = jnp.dot(xn_ref[...], w1_ref[...], preferred_element_type=jnp.float32)
    h1 = jnp.maximum(h1 + b1_ref[...].astype(jnp.float32), 0.0)
    acc_ref[...] += jnp.dot(h1.astype(w2_ref.dtype), w2_ref[...],
                            preferred_element_type=jnp.float32)

    @pl.when(kf == pl.num_programs(1) - 1)
    def _():
        o_ref[...] = (y_ref[...].astype(jnp.float32) + acc_ref[...]
                      + b2_ref[...].astype(jnp.float32)).astype(o_ref.dtype)


def run_ffn(y2, ln_g, ln_b, w1, b1, w2, b2):
    BS, D = y2.shape
    F = w1.shape[1]
    cd = y2.dtype
    ts = _pick_tile(BS, 512)     # big token tiles amortize w1/w2 streaming
    tk = _pick_tile(F, 512)      # TODO(synk): cap at 256 on v7x for D >= 8192
    return pl.pallas_call(
        ffn_kernel,
        out_shape=jax.ShapeDtypeStruct((BS, D), cd),
        grid=(BS // ts, F // tk),
        in_specs=[
            pl.BlockSpec((ts, D), lambda si, kf: (si, 0)),
            pl.BlockSpec((1, D), lambda si, kf: (0, 0)),
            pl.BlockSpec((1, D), lambda si, kf: (0, 0)),
            pl.BlockSpec((D, tk), lambda si, kf: (0, kf)),
            pl.BlockSpec((1, tk), lambda si, kf: (0, kf)),
            pl.BlockSpec((tk, D), lambda si, kf: (kf, 0)),
            pl.BlockSpec((1, D), lambda si, kf: (0, 0)),
        ],
        out_specs=pl.BlockSpec((ts, D), lambda si, kf: (si, 0)),
        scratch_shapes=[pltpu.VMEM((ts, D), cd),            # LN2(y) cache (compute dtype)
                        pltpu.VMEM((ts, D), jnp.float32)],  # FFN accumulator
        input_output_aliases={0: 0},
        compiler_params=_compiler_params(
            ("parallel", "arbitrary"),
            [((ts, D), cd), ((1, D), cd), ((1, D), cd), ((D, tk), cd),
             ((1, tk), cd), ((tk, D), cd), ((1, D), cd), ((ts, D), cd)],
            [((ts, D), cd), ((ts, D), jnp.float32)]),
    )(y2, ln_g, ln_b, w1, b1, w2, b2)


# ------------------- kernel 4a: final LayerNorm (one pass) ------------------
def final_ln_kernel(x_ref, g_ref, b_ref, o_ref):
    o_ref[...] = _layernorm_f32(x_ref[...], g_ref[...],
                                b_ref[...]).astype(o_ref.dtype)


def run_final_ln(x2, ln_g, ln_b):
    BS, D = x2.shape
    cd = x2.dtype
    ts = _pick_tile(BS, 512)
    return pl.pallas_call(
        final_ln_kernel,
        out_shape=jax.ShapeDtypeStruct((BS, D), cd),
        grid=(BS // ts,),
        in_specs=[pl.BlockSpec((ts, D), lambda si: (si, 0)),
                  pl.BlockSpec((1, D), lambda si: (0, 0)),
                  pl.BlockSpec((1, D), lambda si: (0, 0))],
        out_specs=pl.BlockSpec((ts, D), lambda si: (si, 0)),
        compiler_params=_compiler_params(
            ("parallel",),
            [((ts, D), cd), ((1, D), cd), ((1, D), cd), ((ts, D), cd)]),
    )(x2, ln_g, ln_b)


# ------------- kernel 4b: vocab projection (weight-stationary) --------------
def lm_head_kernel(xn_ref, w_ref, bv_ref, o_ref):
    o_ref[...] = (jnp.dot(xn_ref[...], w_ref[...],
                          preferred_element_type=jnp.float32)
                  + bv_ref[...].astype(jnp.float32)).astype(o_ref.dtype)


def run_lm_head(xn2, w_vocab, b_vocab):
    BS, D = xn2.shape
    V = w_vocab.shape[1]
    cd = xn2.dtype
    ts = _pick_tile(BS, 256)
    tv = _pick_tile(V, 512)
    return pl.pallas_call(
        lm_head_kernel,
        out_shape=jax.ShapeDtypeStruct((BS, V), cd),
        grid=(V // tv, BS // ts),            # vocab-tile OUTER: weight-stationary
        in_specs=[pl.BlockSpec((ts, D), lambda vi, si: (si, 0)),
                  pl.BlockSpec((D, tv), lambda vi, si: (0, vi)),
                  pl.BlockSpec((1, tv), lambda vi, si: (0, vi))],
        out_specs=pl.BlockSpec((ts, tv), lambda vi, si: (si, vi)),
        compiler_params=_compiler_params(
            ("parallel", "parallel"),
            [((ts, D), cd), ((D, tv), cd), ((1, tv), cd), ((ts, tv), cd)]),
    )(xn2, w_vocab, b_vocab)


# ------------------------------ wrappers ------------------------------------
def run_transformer_block(x, blk, num_heads, *, approx_recip):
    B, S, D = x.shape
    ts = _pick_tile(S, 256)

    q, k, v = run_qkv_proj(x, blk["ln1_g"], blk["ln1_b"], blk["wqkv_h"],
                           num_heads=num_heads, ts=ts)
    y = run_flash_attention(x, q, k, v, blk["wo_h"], blk["bo"],
                            num_heads=num_heads, tq=ts, tkv=ts,
                            approx_recip=approx_recip)
    # FFN over flattened tokens (contiguous reshape, no HBM relayout).
    out2 = run_ffn(y.reshape(B * S, D), blk["ln2_g"], blk["ln2_b"],
                   blk["w1"], blk["b1"], blk["w2"], blk["b2"])
    return out2.reshape(B, S, D)


def gpt_forward(kparams, context, num_heads):
    B, S = context.shape
    cd = kparams["tok_emb"].dtype
    approx_recip = cd != jnp.float32
    tok = kparams["tok_emb"][context]                    # gather glue (JAX)
    pos = kparams["pos_emb"][jnp.arange(S)][None]
    x = (tok + pos).astype(cd)
    for blk in kparams["blocks"]:
        x = run_transformer_block(x, blk, num_heads, approx_recip=approx_recip)
    D = x.shape[-1]
    V = kparams["w_vocab"].shape[1]
    xn2 = run_final_ln(x.reshape(B * S, D), kparams["final_g"],
                       kparams["final_b"])
    logits2 = run_lm_head(xn2, kparams["w_vocab"], kparams["b_vocab"])
    return logits2.reshape(B, S, V)


# ------------------------ parameter construction ----------------------------
def init_params(key, vocab_size, context_length, model_dim, num_blocks):
    D = model_dim
    keys = iter(jax.random.split(key, 8 + 10 * num_blocks))

    def nrm(shape, scale=0.02):
        return (scale * jax.random.normal(next(keys), shape)).astype(jnp.float32)

    params = {
        "tok_emb": nrm((vocab_size, D)),
        "pos_emb": nrm((context_length, D)),
        "blocks": [],
        "final_g": jnp.ones((1, D), jnp.float32),
        "final_b": jnp.zeros((1, D), jnp.float32),
        "w_vocab": nrm((D, vocab_size)),
        "b_vocab": nrm((1, vocab_size)),
    }
    for _ in range(num_blocks):
        params["blocks"].append(dict(
            ln1_g=jnp.ones((1, D), jnp.float32),
            ln1_b=jnp.zeros((1, D), jnp.float32),
            wq=nrm((D, D)), wk=nrm((D, D)), wv=nrm((D, D)),
            wo=nrm((D, D)), bo=nrm((1, D)),
            ln2_g=jnp.ones((1, D), jnp.float32),
            ln2_b=jnp.zeros((1, D), jnp.float32),
            w1=nrm((D, 4 * D)), b1=nrm((1, 4 * D)),
            w2=nrm((4 * D, D)), b2=nrm((1, D)),
        ))
    return params


def prepare_params(params, num_heads, compute_dtype):
    """Kernel-side parameter tree: per-head fused QKV weights (head-major,
    softmax scale folded into q), per-head Wo, weights cast to compute dtype."""
    cd = compute_dtype

    def prep_block(blk):
        D = blk["wq"].shape[0]
        assert D % num_heads == 0
        hd = D // num_heads
        sm_scale = 1.0 / (hd ** 0.5)
        wq = blk["wq"].reshape(D, num_heads, hd) * sm_scale   # fold 1/sqrt(hd)
        wk = blk["wk"].reshape(D, num_heads, hd)
        wv = blk["wv"].reshape(D, num_heads, hd)
        wqkv_h = jnp.transpose(jnp.concatenate([wq, wk, wv], axis=-1),
                               (1, 0, 2))                      # (H, D, 3*hd)
        return dict(
            ln1_g=blk["ln1_g"].astype(cd), ln1_b=blk["ln1_b"].astype(cd),
            wqkv_h=wqkv_h.astype(cd),
            wo_h=blk["wo"].reshape(num_heads, hd, D).astype(cd),
            bo=blk["bo"].astype(cd),
            ln2_g=blk["ln2_g"].astype(cd), ln2_b=blk["ln2_b"].astype(cd),
            w1=blk["w1"].astype(cd), b1=blk["b1"].astype(cd),
            w2=blk["w2"].astype(cd), b2=blk["b2"].astype(cd))

    return dict(
        tok_emb=params["tok_emb"].astype(cd),
        pos_emb=params["pos_emb"].astype(cd),
        blocks=[prep_block(b) for b in params["blocks"]],
        final_g=params["final_g"].astype(cd),
        final_b=params["final_b"].astype(cd),
        w_vocab=params["w_vocab"].astype(cd),
        b_vocab=params["b_vocab"].astype(cd))


# ------------------------ pure-JAX reference (check) ------------------------
def _ref_ln(x, g, b):
    mu = jnp.mean(x, axis=-1, keepdims=True)
    var = jnp.mean((x - mu) ** 2, axis=-1, keepdims=True)
    return (x - mu) / jnp.sqrt(var + LN_EPS) * g + b


def ref_forward(params, context, num_heads):
    B, S = context.shape
    D = params["tok_emb"].shape[1]
    hd = D // num_heads
    x = params["tok_emb"][context] + params["pos_emb"][jnp.arange(S)][None]
    causal = jnp.tril(jnp.ones((S, S), bool))
    for blk in params["blocks"]:
        xn = _ref_ln(x, blk["ln1_g"], blk["ln1_b"])
        q, k, v = xn @ blk["wq"], xn @ blk["wk"], xn @ blk["wv"]
        outs = []
        for h in range(num_heads):
            sl = slice(h * hd, (h + 1) * hd)
            s = q[..., sl] @ jnp.swapaxes(k[..., sl], -1, -2) / (hd ** 0.5)
            s = jnp.where(causal, s, -jnp.inf)
            s = jax.nn.softmax(s, axis=-1)
            outs.append(s @ v[..., sl])
        att = jnp.concatenate(outs, axis=-1) @ blk["wo"] + blk["bo"]
        x = x + att
        xn = _ref_ln(x, blk["ln2_g"], blk["ln2_b"])
        h1 = jax.nn.relu(xn @ blk["w1"] + blk["b1"])
        x = x + h1 @ blk["w2"] + blk["b2"]
    xn = _ref_ln(x, params["final_g"], params["final_b"])
    return xn @ params["w_vocab"] + params["b_vocab"]


# --------------------------------- main --------------------------------------
if __name__ == "__main__":
    vocab_size, context_length, model_dim = 64, 8, 32
    num_blocks, num_heads, batch = 2, 4, 2

    key = jax.random.PRNGKey(0)
    pkey, ckey = jax.random.split(key)
    params = init_params(pkey, vocab_size, context_length, model_dim, num_blocks)
    context = jax.random.randint(ckey, (batch, context_length), 0, vocab_size,
                                 dtype=jnp.int32)

    forward = jax.jit(gpt_forward, static_argnums=(2,))
    expected = ref_forward(params, context, num_heads)

    # f32 path: tight check against the pure-JAX reference.
    logits = jax.block_until_ready(
        forward(prepare_params(params, num_heads, jnp.float32),
                context, num_heads))
    assert logits.shape == (batch, context_length, vocab_size)
    assert jnp.allclose(logits, expected, atol=1e-4, rtol=1e-4), \
        float(jnp.max(jnp.abs(logits - expected)))

    # bf16 path (2x MXU rate, half the weight/logit DMA): loose check.
    logits_bf16 = jax.block_until_ready(
        forward(prepare_params(params, num_heads, jnp.bfloat16),
                context, num_heads))
    assert jnp.allclose(logits_bf16.astype(jnp.float32), expected,
                        atol=5e-2, rtol=5e-2)

    print("KERNEL_OK")
</pallas_src>

<mosaic_0001>
module attributes {stable_mosaic.version = 11 : i64} {
  func.func @qkv_proj_kernel(%arg0: i32, %arg1: i32, %arg2: i32, %arg3: memref<1x8x32xf32, #tpu.memory_space<vmem>>, %arg4: memref<1x32xf32, #tpu.memory_space<vmem>>, %arg5: memref<1x32xf32, #tpu.memory_space<vmem>>, %arg6: memref<1x32x24xf32, #tpu.memory_space<vmem>>, %arg7: memref<1x8x8xf32, #tpu.memory_space<vmem>>, %arg8: memref<1x8x8xf32, #tpu.memory_space<vmem>>, %arg9: memref<1x8x8xf32, #tpu.memory_space<vmem>>, %arg10: memref<8x32xf32, #tpu.memory_space<vmem>>) attributes {dimension_semantics = [#tpu.dimension_semantics<parallel>, #tpu.dimension_semantics<parallel>, #tpu.dimension_semantics<arbitrary>], iteration_bounds = array<i64: 2, 1, 4>, scalar_prefetch = 0 : i64, scratch_operands = 1 : i64, tpu.core_type = #tpu.core_type<tc>, window_params = [{transform_indices = @transform_0, window_bounds = array<i64: 1, 8, 32>}, {pipeline_mode = #tpu.pipeline_mode<synchronous>, transform_indices = @transform_1, window_bounds = array<i64: 1, 32>}, {pipeline_mode = #tpu.pipeline_mode<synchronous>, transform_indices = @transform_2, window_bounds = array<i64: 1, 32>}, {transform_indices = @transform_3, window_bounds = array<i64: 1, 32, 24>}, {transform_indices = @transform_4, window_bounds = array<i64: 1, 8, 8>}, {transform_indices = @transform_5, window_bounds = array<i64: 1, 8, 8>}, {transform_indices = @transform_6, window_bounds = array<i64: 1, 8, 8>}]} {
    %c0_i32 = arith.constant 0 : i32
    %0 = arith.cmpi eq, %arg2, %c0_i32 : i32
    %1 = arith.extui %0 : i1 to i32
    %c0_i32_0 = arith.constant 0 : i32
    %2 = arith.cmpi ne, %1, %c0_i32_0 : i32
    scf.if %2 {
      %c0_14 = arith.constant 0 : index
      %c0_15 = arith.constant 0 : index
      %c0_16 = arith.constant 0 : index
      %19 = vector.load %arg3[%c0_14, %c0_15, %c0_16] : memref<1x8x32xf32, #tpu.memory_space<vmem>>, vector<1x8x32xf32>
      %20 = vector.shape_cast %19 : vector<1x8x32xf32> to vector<8x32xf32>
      %c0_17 = arith.constant 0 : index
      %c0_18 = arith.constant 0 : index
      %21 = vector.load %arg4[%c0_17, %c0_18] : memref<1x32xf32, #tpu.memory_space<vmem>>, vector<1x32xf32>
      %c0_19 = arith.constant 0 : index
      %c0_20 = arith.constant 0 : index
      %22 = vector.load %arg5[%c0_19, %c0_20] : memref<1x32xf32, #tpu.memory_space<vmem>>, vector<1x32xf32>
      %cst_21 = arith.constant dense<0.000000e+00> : vector<8xf32>
      %23 = vector.multi_reduction <add>, %20, %cst_21 [1] : vector<8x32xf32> to vector<8xf32>
      %24 = vector.shape_cast %23 : vector<8xf32> to vector<8x1xf32>
      %cst_22 = arith.constant 3.200000e+01 : f32
      %25 = vector.broadcast %cst_22 : f32 to vector<8x1xf32>
      %26 = arith.divf %24, %25 : vector<8x1xf32>
      %27 = vector.broadcast %26 : vector<8x1xf32> to vector<8x32xf32>
      %28 = arith.subf %20, %27 : vector<8x32xf32>
      %29 = arith.mulf %28, %28 : vector<8x32xf32>
      %cst_23 = arith.constant dense<0.000000e+00> : vector<8xf32>
      %30 = vector.multi_reduction <add>, %29, %cst_23 [1] : vector<8x32xf32> to vector<8xf32>
      %31 = vector.shape_cast %30 : vector<8xf32> to vector<8x1xf32>
      %cst_24 = arith.constant 3.200000e+01 : f32
      %32 = vector.broadcast %cst_24 : f32 to vector<8x1xf32>
      %33 = arith.divf %31, %32 : vector<8x1xf32>
      %34 = vector.broadcast %26 : vector<8x1xf32> to vector<8x32xf32>
      %35 = arith.subf %20, %34 : vector<8x32xf32>
      %cst_25 = arith.constant 9.99999974E-6 : f32
      %36 = vector.broadcast %cst_25 : f32 to vector<8x1xf32>
      %37 = arith.addf %33, %36 : vector<8x1xf32>
      %38 = math.rsqrt %37 : vector<8x1xf32>
      %39 = vector.broadcast %38 : vector<8x1xf32> to vector<8x32xf32>
      %40 = arith.mulf %35, %39 : vector<8x32xf32>
      %41 = vector.broadcast %21 : vector<1x32xf32> to vector<8x32xf32>
      %42 = arith.mulf %40, %41 : vector<8x32xf32>
      %43 = vector.broadcast %22 : vector<1x32xf32> to vector<8x32xf32>
      %44 = arith.addf %42, %43 : vector<8x32xf32>
      %c0_26 = arith.constant 0 : index
      %c0_27 = arith.constant 0 : index
      %45 = vector.load %arg10[%c0_26, %c0_27] : memref<8x32xf32, #tpu.memory_space<vmem>>, vector<8x32xf32>
      tpu.vector_store %arg10[%c0_26, %c0_27], %44 {strides = array<i32>} : memref<8x32xf32, #tpu.memory_space<vmem>>, vector<8x32xf32>,
    } else {
    }
    %c0 = arith.constant 0 : index
    %c0_1 = arith.constant 0 : index
    %3 = vector.load %arg10[%c0, %c0_1] : memref<8x32xf32, #tpu.memory_space<vmem>>, vector<8x32xf32>
    %c0_2 = arith.constant 0 : index
    %c0_3 = arith.constant 0 : index
    %c0_4 = arith.constant 0 : index
    %4 = vector.load %arg6[%c0_2, %c0_3, %c0_4] : memref<1x32x24xf32, #tpu.memory_space<vmem>>, vector<1x32x24xf32>
    %5 = vector.shape_cast %4 : vector<1x32x24xf32> to vector<32x24xf32>
    %cst = arith.constant dense<0.000000e+00> : vector<8x24xf32>
    %6 = tpu.matmul %3, %5, %cst {dimension_numbers = #tpu.dot_dimension_numbers<[1], [0], [0], [1], [0, 0, 1, 1], [], []>} : vector<8x32xf32>, vector<32x24xf32>, vector<8x24xf32> -> vector<8x24xf32>
    %7 = vector.extract_strided_slice %6 {offsets = [0, 0], sizes = [8, 8], strides = [1, 1]} : vector<8x24xf32> to vector<8x8xf32>
    %c0_5 = arith.constant 0 : index
    %c0_6 = arith.constant 0 : index
    %c0_7 = arith.constant 0 : index
    %8 = vector.load %arg7[%c0_5, %c0_6, %c0_7] : memref<1x8x8xf32, #tpu.memory_space<vmem>>, vector<1x8x8xf32>
    %9 = vector.shape_cast %8 : vector<1x8x8xf32> to vector<8x8xf32>
    %10 = vector.shape_cast %7 : vector<8x8xf32> to vector<1x8x8xf32>
    tpu.vector_store %arg7[%c0_5, %c0_6, %c0_7], %10 {strides = array<i32>} : memref<1x8x8xf32, #tpu.memory_space<vmem>>, vector<1x8x8xf32>,
    %11 = vector.extract_strided_slice %6 {offsets = [0, 8], sizes = [8, 8], strides = [1, 1]} : vector<8x24xf32> to vector<8x8xf32>
    %c0_8 = arith.constant 0 : index
    %c0_9 = arith.constant 0 : index
    %c0_10 = arith.constant 0 : index
    %12 = vector.load %arg8[%c0_8, %c0_9, %c0_10] : memref<1x8x8xf32, #tpu.memory_space<vmem>>, vector<1x8x8xf32>
    %13 = vector.shape_cast %12 : vector<1x8x8xf32> to vector<8x8xf32>
    %14 = vector.shape_cast %11 : vector<8x8xf32> to vector<1x8x8xf32>
    tpu.vector_store %arg8[%c0_8, %c0_9, %c0_10], %14 {strides = array<i32>} : memref<1x8x8xf32, #tpu.memory_space<vmem>>, vector<1x8x8xf32>,
    %15 = vector.extract_strided_slice %6 {offsets = [0, 16], sizes = [8, 8], strides = [1, 1]} : vector<8x24xf32> to vector<8x8xf32>
    %c0_11 = arith.constant 0 : index
    %c0_12 = arith.constant 0 : index
    %c0_13 = arith.constant 0 : index
    %16 = vector.load %arg9[%c0_11, %c0_12, %c0_13] : memref<1x8x8xf32, #tpu.memory_space<vmem>>, vector<1x8x8xf32>
    %17 = vector.shape_cast %16 : vector<1x8x8xf32> to vector<8x8xf32>
    %18 = vector.shape_cast %15 : vector<8x8xf32> to vector<1x8x8xf32>
    tpu.vector_store %arg9[%c0_11, %c0_12, %c0_13], %18 {strides = array<i32>} : memref<1x8x8xf32, #tpu.memory_space<vmem>>, vector<1x8x8xf32>,
    return
  }
  func.func @transform_0(%arg0: i32, %arg1: i32, %arg2: i32) -> (i32, i32, i32) {
    %c0_i32 = arith.constant 0 : i32
    %c0_i32_0 = arith.constant 0 : i32
    return %arg0, %arg1, %c0_i32 : i32, i32, i32
  }
  func.func @transform_1(%arg0: i32, %arg1: i32, %arg2: i32) -> (i32, i32) {
    %c0_i32 = arith.constant 0 : i32
    %c0_i32_0 = arith.constant 0 : i32
    %c0_i32_1 = arith.constant 0 : i32
    return %c0_i32, %c0_i32_0 : i32, i32
  }
  func.func @transform_2(%arg0: i32, %arg1: i32, %arg2: i32) -> (i32, i32) {
    %c0_i32 = arith.constant 0 : i32
    %c0_i32_0 = arith.constant 0 : i32
    %c0_i32_1 = arith.constant 0 : i32
    return %c0_i32, %c0_i32_0 : i32, i32
  }
  func.func @transform_3(%arg0: i32, %arg1: i32, %arg2: i32) -> (i32, i32, i32) {
    %c0_i32 = arith.constant 0 : i32
    %c0_i32_0 = arith.constant 0 : i32
    %c0_i32_1 = arith.constant 0 : i32
    return %arg2, %c0_i32, %c0_i32_0 : i32, i32, i32
  }
  func.func @transform_4(%arg0: i32, %arg1: i32, %arg2: i32) -> (i32, i32, i32) {
    %c4_i32 = arith.constant 4 : i32
    %0 = arith.muli %arg0, %c4_i32 : i32
    %1 = arith.addi %0, %arg2 : i32
    %c0_i32 = arith.constant 0 : i32
    %c0_i32_0 = arith.constant 0 : i32
    return %1, %arg1, %c0_i32 : i32, i32, i32
  }
  func.func @transform_5(%arg0: i32, %arg1: i32, %arg2: i32) -> (i32, i32, i32) {
    %c4_i32 = arith.constant 4 : i32
    %0 = arith.muli %arg0, %c4_i32 : i32
    %1 = arith.addi %0, %arg2 : i32
    %c0_i32 = arith.constant 0 : i32
    %c0_i32_0 = arith.constant 0 : i32
    return %1, %arg1, %c0_i32 : i32, i32, i32
  }
  func.func @transform_6(%arg0: i32, %arg1: i32, %arg2: i32) -> (i32, i32, i32) {
    %c4_i32 = arith.constant 4 : i32
    %0 = arith.muli %arg0, %c4_i32 : i32
    %1 = arith.addi %0, %arg2 : i32
    %c0_i32 = arith.constant 0 : i32
    %c0_i32_0 = arith.constant 0 : i32
    return %1, %arg1, %c0_i32 : i32, i32, i32
  }
}

module attributes {stable_mosaic.version = 11 : i64} {
  func.func @flash_attn_kernel(%arg0: i32, %arg1: i32, %arg2: i32, %arg3: i32, %arg4: memref<1x8x32xf32, #tpu.memory_space<vmem>>, %arg5: memref<1x8x8xf32, #tpu.memory_space<vmem>>, %arg6: memref<1x8x8xf32, #tpu.memory_space<vmem>>, %arg7: memref<1x8x8xf32, #tpu.memory_space<vmem>>, %arg8: memref<1x8x32xf32, #tpu.memory_space<vmem>>, %arg9: memref<1x32xf32, #tpu.memory_space<vmem>>, %arg10: memref<1x8x32xf32, #tpu.memory_space<vmem>>, %arg11: memref<8x1xf32, #tpu.memory_space<vmem>>, %arg12: memref<8x1xf32, #tpu.memory_space<vmem>>, %arg13: memref<8x8xf32, #tpu.memory_space<vmem>>, %arg14: memref<8x32xf32, #tpu.memory_space<vmem>>) attributes {dimension_semantics = [#tpu.dimension_semantics<parallel>, #tpu.dimension_semantics<parallel>, #tpu.dimension_semantics<arbitrary>, #tpu.dimension_semantics<arbitrary>], iteration_bounds = array<i64: 2, 1, 4, 1>, scalar_prefetch = 0 : i64, scratch_operands = 4 : i64, tpu.core_type = #tpu.core_type<tc>, window_params = [{transform_indices = @transform_0, window_bounds = array<i64: 1, 8, 32>}, {transform_indices = @transform_1, window_bounds = array<i64: 1, 8, 8>}, {transform_indices = @transform_2, window_bounds = array<i64: 1, 8, 8>}, {transform_indices = @transform_3, window_bounds = array<i64: 1, 8, 8>}, {transform_indices = @transform_4, window_bounds = array<i64: 1, 8, 32>}, {pipeline_mode = #tpu.pipeline_mode<synchronous>, transform_indices = @transform_5, window_bounds = array<i64: 1, 32>}, {transform_indices = @transform_6, window_bounds = array<i64: 1, 8, 32>}]} {
    %c0_i32 = arith.constant 0 : i32
    %0 = arith.cmpi eq, %arg3, %c0_i32 : i32
    %1 = arith.extui %0 : i1 to i32
    %c0_i32_0 = arith.constant 0 : i32
    %2 = arith.cmpi ne, %1, %c0_i32_0 : i32
    scf.if %2 {
      %cst = arith.constant -1.000000e+30 : f32
      %22 = vector.broadcast %cst : f32 to vector<8x1xf32>
      %c0 = arith.constant 0 : index
      %c0_10 = arith.constant 0 : index
      %23 = vector.load %arg11[%c0, %c0_10] : memref<8x1xf32, #tpu.memory_space<vmem>>, vector<8x1xf32>
      tpu.vector_store %arg11[%c0, %c0_10], %22 {strides = array<i32>} : memref<8x1xf32, #tpu.memory_space<vmem>>, vector<8x1xf32>,
      %cst_11 = arith.constant 0.000000e+00 : f32
      %24 = vector.broadcast %cst_11 : f32 to vector<8x1xf32>
      %c0_12 = arith.constant 0 : index
      %c0_13 = arith.constant 0 : index
      %25 = vector.load %arg12[%c0_12, %c0_13] : memref<8x1xf32, #tpu.memory_space<vmem>>, vector<8x1xf32>
      tpu.vector_store %arg12[%c0_12, %c0_13], %24 {strides = array<i32>} : memref<8x1xf32, #tpu.memory_space<vmem>>, vector<8x1xf32>,
      %cst_14 = arith.constant 0.000000e+00 : f32
      %26 = vector.broadcast %cst_14 : f32 to vector<8x8xf32>
      %c0_15 = arith.constant 0 : index
      %c0_16 = arith.constant 0 : index
      %27 = vector.load %arg13[%c0_15, %c0_16] : memref<8x8xf32, #tpu.memory_space<vmem>>, vector<8x8xf32>
      tpu.vector_store %arg13[%c0_15, %c0_16], %26 {strides = array<i32>} : memref<8x8xf32, #tpu.memory_space<vmem>>, vector<8x8xf32>,
    } else {
    }
    %c0_i32_1 = arith.constant 0 : i32
    %3 = arith.cmpi eq, %arg3, %c0_i32_1 : i32
    %c0_i32_2 = arith.constant 0 : i32
    %4 = arith.cmpi eq, %arg2, %c0_i32_2 : i32
    %5 = arith.andi %3, %4 : i1
    %6 = arith.extui %5 : i1 to i32
    %c0_i32_3 = arith.constant 0 : i32
    %7 = arith.cmpi ne, %6, %c0_i32_3 : i32
    scf.if %7 {
      %cst = arith.constant 0.000000e+00 : f32
      %22 = vector.broadcast %cst : f32 to vector<8x32xf32>
      %c0 = arith.constant 0 : index
      %c0_10 = arith.constant 0 : index
      %23 = vector.load %arg14[%c0, %c0_10] : memref<8x32xf32, #tpu.memory_space<vmem>>, vector<8x32xf32>
      tpu.vector_store %arg14[%c0, %c0_10], %22 {strides = array<i32>} : memref<8x32xf32, #tpu.memory_space<vmem>>, vector<8x32xf32>,
    } else {
    }
    %8 = arith.cmpi slt, %arg3, %arg1 : i32
    %9 = arith.extui %8 : i1 to i32
    %c0_i32_4 = arith.constant 0 : i32
    %10 = arith.cmpi ne, %9, %c0_i32_4 : i32
    scf.if %10 {
      %c0 = arith.constant 0 : index
      %c0_10 = arith.constant 0 : index
      %c0_11 = arith.constant 0 : index
      %22 = vector.load %arg5[%c0, %c0_10, %c0_11] : memref<1x8x8xf32, #tpu.memory_space<vmem>>, vector<1x8x8xf32>
      %23 = vector.shape_cast %22 : vector<1x8x8xf32> to vector<8x8xf32>
      %c0_12 = arith.constant 0 : index
      %c0_13 = arith.constant 0 : index
      %c0_14 = arith.constant 0 : index
      %24 = vector.load %arg6[%c0_12, %c0_13, %c0_14] : memref<1x8x8xf32, #tpu.memory_space<vmem>>, vector<1x8x8xf32>
      %25 = vector.shape_cast %24 : vector<1x8x8xf32> to vector<8x8xf32>
      %cst = arith.constant dense<0.000000e+00> : vector<8x8xf32>
      %26 = tpu.matmul %23, %25, %cst {dimension_numbers = #tpu.dot_dimension_numbers<[1], [1], [0], [0], [0, 0, 1, 0], [], []>} : vector<8x8xf32>, vector<8x8xf32>, vector<8x8xf32> -> vector<8x8xf32>
      %c0_15 = arith.constant 0 : index
      %c0_16 = arith.constant 0 : index
      %27 = vector.load %arg11[%c0_15, %c0_16] : memref<8x1xf32, #tpu.memory_space<vmem>>, vector<8x1xf32>
      %cst_17 = arith.constant dense<0xFF800000> : vector<8xf32>
      %28 = vector.multi_reduction <maximumf>, %26, %cst_17 [1] : vector<8x8xf32> to vector<8xf32>
      %29 = vector.shape_cast %28 : vector<8xf32> to vector<8x1xf32>
      %30 = arith.maximumf %27, %29 : vector<8x1xf32>
      %31 = arith.subf %27, %30 : vector<8x1xf32>
      %32 = math.exp %31 : vector<8x1xf32>
      %33 = vector.broadcast %30 : vector<8x1xf32> to vector<8x8xf32>
      %34 = arith.subf %26, %33 : vector<8x8xf32>
      %35 = math.exp %34 : vector<8x8xf32>
      %c0_18 = arith.constant 0 : index
      %c0_19 = arith.constant 0 : index
      %36 = vector.load %arg12[%c0_18, %c0_19] : memref<8x1xf32, #tpu.memory_space<vmem>>, vector<8x1xf32>
      %37 = arith.mulf %32, %36 : vector<8x1xf32>
      %cst_20 = arith.constant dense<0.000000e+00> : vector<8xf32>
      %38 = vector.multi_reduction <add>, %35, %cst_20 [1] : vector<8x8xf32> to vector<8xf32>
      %39 = vector.shape_cast %38 : vector<8xf32> to vector<8x1xf32>
      %40 = arith.addf %37, %39 : vector<8x1xf32>
      %c0_21 = arith.constant 0 : index
      %c0_22 = arith.constant 0 : index
      %41 = vector.load %arg12[%c0_21, %c0_22] : memref<8x1xf32, #tpu.memory_space<vmem>>, vector<8x1xf32>
      tpu.vector_store %arg12[%c0_21, %c0_22], %40 {strides = array<i32>} : memref<8x1xf32, #tpu.memory_space<vmem>>, vector<8x1xf32>,
      %c0_23 = arith.constant 0 : index
      %c0_24 = arith.constant 0 : index
      %42 = vector.load %arg13[%c0_23, %c0_24] : memref<8x8xf32, #tpu.memory_space<vmem>>, vector<8x8xf32>
      %43 = vector.broadcast %32 : vector<8x1xf32> to vector<8x8xf32>
      %44 = arith.mulf %43, %42 : vector<8x8xf32>
      %c0_25 = arith.constant 0 : index
      %c0_26 = arith.constant 0 : index
      %c0_27 = arith.constant 0 : index
      %45 = vector.load %arg7[%c0_25, %c0_26, %c0_27] : memref<1x8x8xf32, #tpu.memory_space<vmem>>, vector<1x8x8xf32>
      %46 = vector.shape_cast %45 : vector<1x8x8xf32> to vector<8x8xf32>
      %cst_28 = arith.constant dense<0.000000e+00> : vector<8x8xf32>
      %47 = tpu.matmul %35, %46, %cst_28 {dimension_numbers = #tpu.dot_dimension_numbers<[1], [0], [0], [1], [0, 0, 1, 1], [], []>} : vector<8x8xf32>, vector<8x8xf32>, vector<8x8xf32> -> vector<8x8xf32>
      %48 = arith.addf %44, %47 : vector<8x8xf32>
      %c0_29 = arith.constant 0 : index
      %c0_30 = arith.constant 0 : index
      %49 = vector.load %arg13[%c0_29, %c0_30] : memref<8x8xf32, #tpu.memory_space<vmem>>, vector<8x8xf32>
      tpu.vector_store %arg13[%c0_29, %c0_30], %48 {strides = array<i32>} : memref<8x8xf32, #tpu.memory_space<vmem>>, vector<8x8xf32>,
      %c0_31 = arith.constant 0 : index
      %c0_32 = arith.constant 0 : index
      %50 = vector.load %arg11[%c0_31, %c0_32] : memref<8x1xf32, #tpu.memory_space<vmem>>, vector<8x1xf32>
      tpu.vector_store %arg11[%c0_31, %c0_32], %30 {strides = array<i32>} : memref<8x1xf32, #tpu.memory_space<vmem>>, vector<8x1xf32>,
    } else {
    }
    %11 = arith.cmpi eq, %arg3, %arg1 : i32
    %12 = arith.extui %11 : i1 to i32
    %c0_i32_5 = arith.constant 0 : i32
    %13 = arith.cmpi ne, %12, %c0_i32_5 : i32
    scf.if %13 {
      %c0 = arith.constant 0 : index
      %c0_10 = arith.constant 0 : index
      %c0_11 = arith.constant 0 : index
      %22 = vector.load %arg5[%c0, %c0_10, %c0_11] : memref<1x8x8xf32, #tpu.memory_space<vmem>>, vector<1x8x8xf32>
      %23 = vector.shape_cast %22 : vector<1x8x8xf32> to vector<8x8xf32>
      %c0_12 = arith.constant 0 : index
      %c0_13 = arith.constant 0 : index
      %c0_14 = arith.constant 0 : index
      %24 = vector.load %arg6[%c0_12, %c0_13, %c0_14] : memref<1x8x8xf32, #tpu.memory_space<vmem>>, vector<1x8x8xf32>
      %25 = vector.shape_cast %24 : vector<1x8x8xf32> to vector<8x8xf32>
      %cst = arith.constant dense<0.000000e+00> : vector<8x8xf32>
      %26 = tpu.matmul %23, %25, %cst {dimension_numbers = #tpu.dot_dimension_numbers<[1], [1], [0], [0], [0, 0, 1, 0], [], []>} : vector<8x8xf32>, vector<8x8xf32>, vector<8x8xf32> -> vector<8x8xf32>
      %27 = tpu.iota {dimensions = array<i32: 0>} : vector<8x8xi32>
      %28 = tpu.iota {dimensions = array<i32: 1>} : vector<8x8xi32>
      %29 = arith.cmpi sle, %28, %27 : vector<8x8xi32>
      %cst_15 = arith.constant 0.000000e+00 : f32
      %cst_16 = arith.constant -1.000000e+30 : f32
      %30 = vector.broadcast %cst_15 : f32 to vector<8x8xf32>
      %31 = vector.broadcast %cst_16 : f32 to vector<8x8xf32>
      %32 = arith.select %29, %30, %31 : vector<8x8xi1>, vector<8x8xf32>
      %33 = arith.addf %26, %32 : vector<8x8xf32>
      %c0_17 = arith.constant 0 : index
      %c0_18 = arith.constant 0 : index
      %34 = vector.load %arg11[%c0_17, %c0_18] : memref<8x1xf32, #tpu.memory_space<vmem>>, vector<8x1xf32>
      %cst_19 = arith.constant dense<0xFF800000> : vector<8xf32>
      %35 = vector.multi_reduction <maximumf>, %33, %cst_19 [1] : vector<8x8xf32> to vector<8xf32>
      %36 = vector.shape_cast %35 : vector<8xf32> to vector<8x1xf32>
      %37 = arith.maximumf %34, %36 : vector<8x1xf32>
      %38 = arith.subf %34, %37 : vector<8x1xf32>
      %39 = math.exp %38 : vector<8x1xf32>
      %40 = vector.broadcast %37 : vector<8x1xf32> to vector<8x8xf32>
      %41 = arith.subf %33, %40 : vector<8x8xf32>
      %42 = math.exp %41 : vector<8x8xf32>
      %c0_20 = arith.constant 0 : index
      %c0_21 = arith.constant 0 : index
      %43 = vector.load %arg12[%c0_20, %c0_21] : memref<8x1xf32, #tpu.memory_space<vmem>>, vector<8x1xf32>
      %44 = arith.mulf %39, %43 : vector<8x1xf32>
      %cst_22 = arith.constant dense<0.000000e+00> : vector<8xf32>
      %45 = vector.multi_reduction <add>, %42, %cst_22 [1] : vector<8x8xf32> to vector<8xf32>
      %46 = vector.shape_cast %45 : vector<8xf32> to vector<8x1xf32>
      %47 = arith.addf %44, %46 : vector<8x1xf32>
      %c0_23 = arith.constant 0 : index
      %c0_24 = arith.constant 0 : index
      %48 = vector.load %arg12[%c0_23, %c0_24] : memref<8x1xf32, #tpu.memory_space<vmem>>, vector<8x1xf32>
      tpu.vector_store %arg12[%c0_23, %c0_24], %47 {strides = array<i32>} : memref<8x1xf32, #tpu.memory_space<vmem>>, vector<8x1xf32>,
      %c0_25 = arith.constant 0 : index
      %c0_26 = arith.constant 0 : index
      %49 = vector.load %arg13[%c0_25, %c0_26] : memref<8x8xf32, #tpu.memory_space<vmem>>, vector<8x8xf32>
      %50 = vector.broadcast %39 : vector<8x1xf32> to vector<8x8xf32>
      %51 = arith.mulf %50, %49 : vector<8x8xf32>
      %c0_27 = arith.constant 0 : index
      %c0_28 = arith.constant 0 : index
      %c0_29 = arith.constant 0 : index
      %52 = vector.load %arg7[%c0_27, %c0_28, %c0_29] : memref<1x8x8xf32, #tpu.memory_space<vmem>>, vector<1x8x8xf32>
      %53 = vector.shape_cast %52 : vector<1x8x8xf32> to vector<8x8xf32>
      %cst_30 = arith.constant dense<0.000000e+00> : vector<8x8xf32>
      %54 = tpu.matmul %42, %53, %cst_30 {dimension_numbers = #tpu.dot_dimension_numbers<[1], [0], [0], [1], [0, 0, 1, 1], [], []>} : vector<8x8xf32>, vector<8x8xf32>, vector<8x8xf32> -> vector<8x8xf32>
      %55 = arith.addf %51, %54 : vector<8x8xf32>
      %c0_31 = arith.constant 0 : index
      %c0_32 = arith.constant 0 : index
      %56 = vector.load %arg13[%c0_31, %c0_32] : memref<8x8xf32, #tpu.memory_space<vmem>>, vector<8x8xf32>
      tpu.vector_store %arg13[%c0_31, %c0_32], %55 {strides = array<i32>} : memref<8x8xf32, #tpu.memory_space<vmem>>, vector<8x8xf32>,
      %c0_33 = arith.constant 0 : index
      %c0_34 = arith.constant 0 : index
      %57 = vector.load %arg11[%c0_33, %c0_34] : memref<8x1xf32, #tpu.memory_space<vmem>>, vector<8x1xf32>
      tpu.vector_store %arg11[%c0_33, %c0_34], %37 {strides = array<i32>} : memref<8x1xf32, #tpu.memory_space<vmem>>, vector<8x1xf32>,
    } else {
    }
    %c0_i32_6 = arith.constant 0 : i32
    %14 = arith.cmpi eq, %arg3, %c0_i32_6 : i32
    %15 = arith.extui %14 : i1 to i32
    %c0_i32_7 = arith.constant 0 : i32
    %16 = arith.cmpi ne, %15, %c0_i32_7 : i32
    scf.if %16 {
      %c0 = arith.constant 0 : index
      %c0_10 = arith.constant 0 : index
      %22 = vector.load %arg12[%c0, %c0_10] : memref<8x1xf32, #tpu.memory_space<vmem>>, vector<8x1xf32>
      %23 = tpu.reciprocal %22 : vector<8x1xf32> -> vector<8x1xf32>
      %c0_11 = arith.constant 0 : index
      %c0_12 = arith.constant 0 : index
      %24 = vector.load %arg13[%c0_11, %c0_12] : memref<8x8xf32, #tpu.memory_space<vmem>>, vector<8x8xf32>
      %25 = vector.broadcast %23 : vector<8x1xf32> to vector<8x8xf32>
      %26 = arith.mulf %24, %25 : vector<8x8xf32>
      %c0_13 = arith.constant 0 : index
      %c0_14 = arith.constant 0 : index
      %27 = vector.load %arg14[%c0_13, %c0_14] : memref<8x32xf32, #tpu.memory_space<vmem>>, vector<8x32xf32>
      %c0_15 = arith.constant 0 : index
      %c0_16 = arith.constant 0 : index
      %c0_17 = arith.constant 0 : index
      %28 = vector.load %arg8[%c0_15, %c0_16, %c0_17] : memref<1x8x32xf32, #tpu.memory_space<vmem>>, vector<1x8x32xf32>
      %29 = vector.shape_cast %28 : vector<1x8x32xf32> to vector<8x32xf32>
      %cst = arith.constant dense<0.000000e+00> : vector<8x32xf32>
      %30 = tpu.matmul %26, %29, %cst {dimension_numbers = #tpu.dot_dimension_numbers<[1], [0], [0], [1], [0, 0, 1, 1], [], []>} : vector<8x8xf32>, vector<8x32xf32>, vector<8x32xf32> -> vector<8x32xf32>
      %31 = arith.addf %27, %30 : vector<8x32xf32>
      %c0_18 = arith.constant 0 : index
      %c0_19 = arith.constant 0 : index
      %32 = vector.load %arg14[%c0_18, %c0_19] : memref<8x32xf32, #tpu.memory_space<vmem>>, vector<8x32xf32>
      tpu.vector_store %arg14[%c0_18, %c0_19], %31 {strides = array<i32>} : memref<8x32xf32, #tpu.memory_space<vmem>>, vector<8x32xf32>,
    } else {
    }
    %c0_i32_8 = arith.constant 0 : i32
    %17 = arith.cmpi eq, %arg3, %c0_i32_8 : i32
    %c3_i32 = arith.constant 3 : i32
    %18 = arith.cmpi eq, %arg2, %c3_i32 : i32
    %19 = arith.andi %17, %18 : i1
    %20 = arith.extui %19 : i1 to i32
    %c0_i32_9 = arith.constant 0 : i32
    %21 = arith.cmpi ne, %20, %c0_i32_9 : i32
    scf.if %21 {
      %c0 = arith.constant 0 : index
      %c0_10 = arith.constant 0 : index
      %c0_11 = arith.constant 0 : index
      %22 = vector.load %arg4[%c0, %c0_10, %c0_11] : memref<1x8x32xf32, #tpu.memory_space<vmem>>, vector<1x8x32xf32>
      %23 = vector.shape_cast %22 : vector<1x8x32xf32> to vector<8x32xf32>
      %c0_12 = arith.constant 0 : index
      %c0_13 = arith.constant 0 : index
      %24 = vector.load %arg14[%c0_12, %c0_13] : memref<8x32xf32, #tpu.memory_space<vmem>>, vector<8x32xf32>
      %25 = arith.addf %23, %24 : vector<8x32xf32>
      %c0_14 = arith.constant 0 : index
      %c0_15 = arith.constant 0 : index
      %26 = vector.load %arg9[%c0_14, %c0_15] : memref<1x32xf32, #tpu.memory_space<vmem>>, vector<1x32xf32>
      %27 = vector.broadcast %26 : vector<1x32xf32> to vector<8x32xf32>
      %28 = arith.addf %25, %27 : vector<8x32xf32>
      %c0_16 = arith.constant 0 : index
      %c0_17 = arith.constant 0 : index
      %c0_18 = arith.constant 0 : index
      %29 = vector.load %arg10[%c0_16, %c0_17, %c0_18] : memref<1x8x32xf32, #tpu.memory_space<vmem>>, vector<1x8x32xf32>
      %30 = vector.shape_cast %29 : vector<1x8x32xf32> to vector<8x32xf32>
      %31 = vector.shape_cast %28 : vector<8x32xf32> to vector<1x8x32xf32>
      tpu.vector_store %arg10[%c0_16, %c0_17, %c0_18], %31 {strides = array<i32>} : memref<1x8x32xf32, #tpu.memory_space<vmem>>, vector<1x8x32xf32>,
    } else {
    }
    return
  }
  func.func @transform_0(%arg0: i32, %arg1: i32, %arg2: i32, %arg3: i32) -> (i32, i32, i32) {
    %c0_i32 = arith.constant 0 : i32
    %c0_i32_0 = arith.constant 0 : i32
    return %arg0, %arg1, %c0_i32 : i32, i32, i32
  }
  func.func @transform_1(%arg0: i32, %arg1: i32, %arg2: i32, %arg3: i32) -> (i32, i32, i32) {
    %c4_i32 = arith.constant 4 : i32
    %0 = arith.muli %arg0, %c4_i32 : i32
    %1 = arith.addi %0, %arg2 : i32
    %c0_i32 = arith.constant 0 : i32
    %c0_i32_0 = arith.constant 0 : i32
    return %1, %arg1, %c0_i32 : i32, i32, i32
  }
  func.func @transform_2(%arg0: i32, %arg1: i32, %arg2: i32, %arg3: i32) -> (i32, i32, i32) {
    %c4_i32 = arith.constant 4 : i32
    %0 = arith.muli %arg0, %c4_i32 : i32
    %1 = arith.addi %0, %arg2 : i32
    %2 = arith.minsi %arg3, %arg1 : i32
    %c0_i32 = arith.constant 0 : i32
    %c0_i32_0 = arith.constant 0 : i32
    return %1, %2, %c0_i32 : i32, i32, i32
  }
  func.func @transform_3(%arg0: i32, %arg1: i32, %arg2: i32, %arg3: i32) -> (i32, i32, i32) {
    %c4_i32 = arith.constant 4 : i32
    %0 = arith.muli %arg0, %c4_i32 : i32
    %1 = arith.addi %0, %arg2 : i32
    %2 = arith.minsi %arg3, %arg1 : i32
    %c0_i32 = arith.constant 0 : i32
    %c0_i32_0 = arith.constant 0 : i32
    return %1, %2, %c0_i32 : i32, i32, i32
  }
  func.func @transform_4(%arg0: i32, %arg1: i32, %arg2: i32, %arg3: i32) -> (i32, i32, i32) {
    %c0_i32 = arith.constant 0 : i32
    %c0_i32_0 = arith.constant 0 : i32
    %c0_i32_1 = arith.constant 0 : i32
    return %arg2, %c0_i32, %c0_i32_0 : i32, i32, i32
  }
  func.func @transform_5(%arg0: i32, %arg1: i32, %arg2: i32, %arg3: i32) -> (i32, i32) {
    %c0_i32 = arith.constant 0 : i32
    %c0_i32_0 = arith.constant 0 : i32
    %c0_i32_1 = arith.constant 0 : i32
    return %c0_i32, %c0_i32_0 : i32, i32
  }
  func.func @transform_6(%arg0: i32, %arg1: i32, %arg2: i32, %arg3: i32) -> (i32, i32, i32) {
    %c0_i32 = arith.constant 0 : i32
    %c0_i32_0 = arith.constant 0 : i32
    return %arg0, %arg1, %c0_i32 : i32, i32, i32
  }
}

module attributes {stable_mosaic.version = 11 : i64} {
  func.func @ffn_kernel(%arg0: i32, %arg1: i32, %arg2: memref<16x32xf32, #tpu.memory_space<vmem>>, %arg3: memref<1x32xf32, #tpu.memory_space<vmem>>, %arg4: memref<1x32xf32, #tpu.memory_space<vmem>>, %arg5: memref<32x128xf32, #tpu.memory_space<vmem>>, %arg6: memref<1x128xf32, #tpu.memory_space<vmem>>, %arg7: memref<128x32xf32, #tpu.memory_space<vmem>>, %arg8: memref<1x32xf32, #tpu.memory_space<vmem>>, %arg9: memref<16x32xf32, #tpu.memory_space<vmem>>, %arg10: memref<16x32xf32, #tpu.memory_space<vmem>>, %arg11: memref<16x32xf32, #tpu.memory_space<vmem>>) attributes {dimension_semantics = [#tpu.dimension_semantics<parallel>, #tpu.dimension_semantics<arbitrary>], iteration_bounds = array<i64: 1, 1>, scalar_prefetch = 0 : i64, scratch_operands = 2 : i64, tpu.core_type = #tpu.core_type<tc>, window_params = [{transform_indices = @transform_0, window_bounds = array<i64: 16, 32>}, {pipeline_mode = #tpu.pipeline_mode<synchronous>, transform_indices = @transform_1, window_bounds = array<i64: 1, 32>}, {pipeline_mode = #tpu.pipeline_mode<synchronous>, transform_indices = @transform_2, window_bounds = array<i64: 1, 32>}, {transform_indices = @transform_3, window_bounds = array<i64: 32, 128>}, {transform_indices = @transform_4, window_bounds = array<i64: 1, 128>}, {transform_indices = @transform_5, window_bounds = array<i64: 128, 32>}, {pipeline_mode = #tpu.pipeline_mode<synchronous>, transform_indices = @transform_6, window_bounds = array<i64: 1, 32>}, {transform_indices = @transform_7, window_bounds = array<i64: 16, 32>}]} {
    %c0_i32 = arith.constant 0 : i32
    %0 = arith.cmpi eq, %arg1, %c0_i32 : i32
    %1 = arith.extui %0 : i1 to i32
    %c0_i32_0 = arith.constant 0 : i32
    %2 = arith.cmpi ne, %1, %c0_i32_0 : i32
    scf.if %2 {
      %c0_16 = arith.constant 0 : index
      %c0_17 = arith.constant 0 : index
      %19 = vector.load %arg2[%c0_16, %c0_17] : memref<16x32xf32, #tpu.memory_space<vmem>>, vector<16x32xf32>
      %c0_18 = arith.constant 0 : index
      %c0_19 = arith.constant 0 : index
      %20 = vector.load %arg3[%c0_18, %c0_19] : memref<1x32xf32, #tpu.memory_space<vmem>>, vector<1x32xf32>
      %c0_20 = arith.constant 0 : index
      %c0_21 = arith.constant 0 : index
      %21 = vector.load %arg4[%c0_20, %c0_21] : memref<1x32xf32, #tpu.memory_space<vmem>>, vector<1x32xf32>
      %cst_22 = arith.constant dense<0.000000e+00> : vector<16xf32>
      %22 = vector.multi_reduction <add>, %19, %cst_22 [1] : vector<16x32xf32> to vector<16xf32>
      %23 = vector.shape_cast %22 : vector<16xf32> to vector<16x1xf32>
      %cst_23 = arith.constant 3.200000e+01 : f32
      %24 = vector.broadcast %cst_23 : f32 to vector<16x1xf32>
      %25 = arith.divf %23, %24 : vector<16x1xf32>
      %26 = vector.broadcast %25 : vector<16x1xf32> to vector<16x32xf32>
      %27 = arith.subf %19, %26 : vector<16x32xf32>
      %28 = arith.mulf %27, %27 : vector<16x32xf32>
      %cst_24 = arith.constant dense<0.000000e+00> : vector<16xf32>
      %29 = vector.multi_reduction <add>, %28, %cst_24 [1] : vector<16x32xf32> to vector<16xf32>
      %30 = vector.shape_cast %29 : vector<16xf32> to vector<16x1xf32>
      %cst_25 = arith.constant 3.200000e+01 : f32
      %31 = vector.broadcast %cst_25 : f32 to vector<16x1xf32>
      %32 = arith.divf %30, %31 : vector<16x1xf32>
      %33 = vector.broadcast %25 : vector<16x1xf32> to vector<16x32xf32>
      %34 = arith.subf %19, %33 : vector<16x32xf32>
      %cst_26 = arith.constant 9.99999974E-6 : f32
      %35 = vector.broadcast %cst_26 : f32 to vector<16x1xf32>
      %36 = arith.addf %32, %35 : vector<16x1xf32>
      %37 = math.rsqrt %36 : vector<16x1xf32>
      %38 = vector.broadcast %37 : vector<16x1xf32> to vector<16x32xf32>
      %39 = arith.mulf %34, %38 : vector<16x32xf32>
      %40 = vector.broadcast %20 : vector<1x32xf32> to vector<16x32xf32>
      %41 = arith.mulf %39, %40 : vector<16x32xf32>
      %42 = vector.broadcast %21 : vector<1x32xf32> to vector<16x32xf32>
      %43 = arith.addf %41, %42 : vector<16x32xf32>
      %c0_27 = arith.constant 0 : index
      %c0_28 = arith.constant 0 : index
      %44 = vector.load %arg10[%c0_27, %c0_28] : memref<16x32xf32, #tpu.memory_space<vmem>>, vector<16x32xf32>
      tpu.vector_store %arg10[%c0_27, %c0_28], %43 {strides = array<i32>} : memref<16x32xf32, #tpu.memory_space<vmem>>, vector<16x32xf32>,
      %cst_29 = arith.constant 0.000000e+00 : f32
      %45 = vector.broadcast %cst_29 : f32 to vector<16x32xf32>
      %c0_30 = arith.constant 0 : index
      %c0_31 = arith.constant 0 : index
      %46 = vector.load %arg11[%c0_30, %c0_31] : memref<16x32xf32, #tpu.memory_space<vmem>>, vector<16x32xf32>
      tpu.vector_store %arg11[%c0_30, %c0_31], %45 {strides = array<i32>} : memref<16x32xf32, #tpu.memory_space<vmem>>, vector<16x32xf32>,
    } else {
    }
    %c0 = arith.constant 0 : index
    %c0_1 = arith.constant 0 : index
    %3 = vector.load %arg10[%c0, %c0_1] : memref<16x32xf32, #tpu.memory_space<vmem>>, vector<16x32xf32>
    %c0_2 = arith.constant 0 : index
    %c0_3 = arith.constant 0 : index
    %4 = vector.load %arg5[%c0_2, %c0_3] : memref<32x128xf32, #tpu.memory_space<vmem>>, vector<32x128xf32>
    %cst = arith.constant dense<0.000000e+00> : vector<16x128xf32>
    %5 = tpu.matmul %3, %4, %cst {dimension_numbers = #tpu.dot_dimension_numbers<[1], [0], [0], [1], [0, 0, 1, 1], [], []>} : vector<16x32xf32>, vector<32x128xf32>, vector<16x128xf32> -> vector<16x128xf32>
    %c0_4 = arith.constant 0 : index
    %c0_5 = arith.constant 0 : index
    %6 = vector.load %arg6[%c0_4, %c0_5] : memref<1x128xf32, #tpu.memory_space<vmem>>, vector<1x128xf32>
    %7 = vector.broadcast %6 : vector<1x128xf32> to vector<16x128xf32>
    %8 = arith.addf %5, %7 : vector<16x128xf32>
    %cst_6 = arith.constant 0.000000e+00 : f32
    %9 = vector.broadcast %cst_6 : f32 to vector<16x128xf32>
    %10 = arith.maximumf %8, %9 : vector<16x128xf32>
    %c0_7 = arith.constant 0 : index
    %c0_8 = arith.constant 0 : index
    %11 = vector.load %arg11[%c0_7, %c0_8] : memref<16x32xf32, #tpu.memory_space<vmem>>, vector<16x32xf32>
    %c0_9 = arith.constant 0 : index
    %c0_10 = arith.constant 0 : index
    %12 = vector.load %arg7[%c0_9, %c0_10] : memref<128x32xf32, #tpu.memory_space<vmem>>, vector<128x32xf32>
    %cst_11 = arith.constant dense<0.000000e+00> : vector<16x32xf32>
    %13 = tpu.matmul %10, %12, %cst_11 {dimension_numbers = #tpu.dot_dimension_numbers<[1], [0], [0], [1], [0, 0, 1, 1], [], []>} : vector<16x128xf32>, vector<128x32xf32>, vector<16x32xf32> -> vector<16x32xf32>
    %14 = arith.addf %11, %13 : vector<16x32xf32>
    %c0_12 = arith.constant 0 : index
    %c0_13 = arith.constant 0 : index
    %15 = vector.load %arg11[%c0_12, %c0_13] : memref<16x32xf32, #tpu.memory_space<vmem>>, vector<16x32xf32>
    tpu.vector_store %arg11[%c0_12, %c0_13], %14 {strides = array<i32>} : memref<16x32xf32, #tpu.memory_space<vmem>>, vector<16x32xf32>,
    %c0_i32_14 = arith.constant 0 : i32
    %16 = arith.cmpi eq, %arg1, %c0_i32_14 : i32
    %17 = arith.extui %16 : i1 to i32
    %c0_i32_15 = arith.constant 0 : i32
    %18 = arith.cmpi ne, %17, %c0_i32_15 : i32
    scf.if %18 {
      %c0_16 = arith.constant 0 : index
      %c0_17 = arith.constant 0 : index
      %19 = vector.load %arg2[%c0_16, %c0_17] : memref<16x32xf32, #tpu.memory_space<vmem>>, vector<16x32xf32>
      %c0_18 = arith.constant 0 : index
      %c0_19 = arith.constant 0 : index
      %20 = vector.load %arg11[%c0_18, %c0_19] : memref<16x32xf32, #tpu.memory_space<vmem>>, vector<16x32xf32>
      %21 = arith.addf %19, %20 : vector<16x32xf32>
      %c0_20 = arith.constant 0 : index
      %c0_21 = arith.constant 0 : index
      %22 = vector.load %arg8[%c0_20, %c0_21] : memref<1x32xf32, #tpu.memory_space<vmem>>, vector<1x32xf32>
      %23 = vector.broadcast %22 : vector<1x32xf32> to vector<16x32xf32>
      %24 = arith.addf %21, %23 : vector<16x32xf32>
      %c0_22 = arith.constant 0 : index
      %c0_23 = arith.constant 0 : index
      %25 = vector.load %arg9[%c0_22, %c0_23] : memref<16x32xf32, #tpu.memory_space<vmem>>, vector<16x32xf32>
      tpu.vector_store %arg9[%c0_22, %c0_23], %24 {strides = array<i32>} : memref<16x32xf32, #tpu.memory_space<vmem>>, vector<16x32xf32>,
    } else {
    }
    return
  }
  func.func @transform_0(%arg0: i32, %arg1: i32) -> (i32, i32) {
    %c0_i32 = arith.constant 0 : i32
    %c0_i32_0 = arith.constant 0 : i32
    return %arg0, %c0_i32 : i32, i32
  }
  func.func @transform_1(%arg0: i32, %arg1: i32) -> (i32, i32) {
    %c0_i32 = arith.constant 0 : i32
    %c0_i32_0 = arith.constant 0 : i32
    %c0_i32_1 = arith.constant 0 : i32
    return %c0_i32, %c0_i32_0 : i32, i32
  }
  func.func @transform_2(%arg0: i32, %arg1: i32) -> (i32, i32) {
    %c0_i32 = arith.constant 0 : i32
    %c0_i32_0 = arith.constant 0 : i32
    %c0_i32_1 = arith.constant 0 : i32
    return %c0_i32, %c0_i32_0 : i32, i32
  }
  func.func @transform_3(%arg0: i32, %arg1: i32) -> (i32, i32) {
    %c0_i32 = arith.constant 0 : i32
    %c0_i32_0 = arith.constant 0 : i32
    return %c0_i32, %arg1 : i32, i32
  }
  func.func @transform_4(%arg0: i32, %arg1: i32) -> (i32, i32) {
    %c0_i32 = arith.constant 0 : i32
    %c0_i32_0 = arith.constant 0 : i32
    return %c0_i32, %arg1 : i32, i32
  }
  func.func @transform_5(%arg0: i32, %arg1: i32) -> (i32, i32) {
    %c0_i32 = arith.constant 0 : i32
    %c0_i32_0 = arith.constant 0 : i32
    return %arg1, %c0_i32 : i32, i32
  }
  func.func @transform_6(%arg0: i32, %arg1: i32) -> (i32, i32) {
    %c0_i32 = arith.constant 0 : i32
    %c0_i32_0 = arith.constant 0 : i32
    %c0_i32_1 = arith.constant 0 : i32
    return %c0_i32, %c0_i32_0 : i32, i32
  }
  func.func @transform_7(%arg0: i32, %arg1: i32) -> (i32, i32) {
    %c0_i32 = arith.constant 0 : i32
    %c0_i32_0 = arith.constant 0 : i32
    return %arg0, %c0_i32 : i32, i32
  }
}

module attributes {stable_mosaic.version = 11 : i64} {
  func.func @final_ln_kernel(%arg0: i32, %arg1: memref<16x32xf32, #tpu.memory_space<vmem>>, %arg2: memref<1x32xf32, #tpu.memory_space<vmem>>, %arg3: memref<1x32xf32, #tpu.memory_space<vmem>>, %arg4: memref<16x32xf32, #tpu.memory_space<vmem>>) attributes {dimension_semantics = [#tpu.dimension_semantics<parallel>], iteration_bounds = array<i64: 1>, scalar_prefetch = 0 : i64, scratch_operands = 0 : i64, tpu.core_type = #tpu.core_type<tc>, window_params = [{transform_indices = @transform_0, window_bounds = array<i64: 16, 32>}, {pipeline_mode = #tpu.pipeline_mode<synchronous>, transform_indices = @transform_1, window_bounds = array<i64: 1, 32>}, {pipeline_mode = #tpu.pipeline_mode<synchronous>, transform_indices = @transform_2, window_bounds = array<i64: 1, 32>}, {transform_indices = @transform_3, window_bounds = array<i64: 16, 32>}]} {
    %c0 = arith.constant 0 : index
    %c0_0 = arith.constant 0 : index
    %0 = vector.load %arg1[%c0, %c0_0] : memref<16x32xf32, #tpu.memory_space<vmem>>, vector<16x32xf32>
    %c0_1 = arith.constant 0 : index
    %c0_2 = arith.constant 0 : index
    %1 = vector.load %arg2[%c0_1, %c0_2] : memref<1x32xf32, #tpu.memory_space<vmem>>, vector<1x32xf32>
    %c0_3 = arith.constant 0 : index
    %c0_4 = arith.constant 0 : index
    %2 = vector.load %arg3[%c0_3, %c0_4] : memref<1x32xf32, #tpu.memory_space<vmem>>, vector<1x32xf32>
    %cst = arith.constant dense<0.000000e+00> : vector<16xf32>
    %3 = vector.multi_reduction <add>, %0, %cst [1] : vector<16x32xf32> to vector<16xf32>
    %4 = vector.shape_cast %3 : vector<16xf32> to vector<16x1xf32>
    %cst_5 = arith.constant 3.200000e+01 : f32
    %5 = vector.broadcast %cst_5 : f32 to vector<16x1xf32>
    %6 = arith.divf %4, %5 : vector<16x1xf32>
    %7 = vector.broadcast %6 : vector<16x1xf32> to vector<16x32xf32>
    %8 = arith.subf %0, %7 : vector<16x32xf32>
    %9 = arith.mulf %8, %8 : vector<16x32xf32>
    %cst_6 = arith.constant dense<0.000000e+00> : vector<16xf32>
    %10 = vector.multi_reduction <add>, %9, %cst_6 [1] : vector<16x32xf32> to vector<16xf32>
    %11 = vector.shape_cast %10 : vector<16xf32> to vector<16x1xf32>
    %cst_7 = arith.constant 3.200000e+01 : f32
    %12 = vector.broadcast %cst_7 : f32 to vector<16x1xf32>
    %13 = arith.divf %11, %12 : vector<16x1xf32>
    %14 = vector.broadcast %6 : vector<16x1xf32> to vector<16x32xf32>
    %15 = arith.subf %0, %14 : vector<16x32xf32>
    %cst_8 = arith.constant 9.99999974E-6 : f32
    %16 = vector.broadcast %cst_8 : f32 to vector<16x1xf32>
    %17 = arith.addf %13, %16 : vector<16x1xf32>
    %18 = math.rsqrt %17 : vector<16x1xf32>
    %19 = vector.broadcast %18 : vector<16x1xf32> to vector<16x32xf32>
    %20 = arith.mulf %15, %19 : vector<16x32xf32>
    %21 = vector.broadcast %1 : vector<1x32xf32> to vector<16x32xf32>
    %22 = arith.mulf %20, %21 : vector<16x32xf32>
    %23 = vector.broadcast %2 : vector<1x32xf32> to vector<16x32xf32>
    %24 = arith.addf %22, %23 : vector<16x32xf32>
    %c0_9 = arith.constant 0 : index
    %c0_10 = arith.constant 0 : index
    %25 = vector.load %arg4[%c0_9, %c0_10] : memref<16x32xf32, #tpu.memory_space<vmem>>, vector<16x32xf32>
    tpu.vector_store %arg4[%c0_9, %c0_10], %24 {strides = array<i32>} : memref<16x32xf32, #tpu.memory_space<vmem>>, vector<16x32xf32>,
    return
  }
  func.func @transform_0(%arg0: i32) -> (i32, i32) {
    %c0_i32 = arith.constant 0 : i32
    %c0_i32_0 = arith.constant 0 : i32
    return %arg0, %c0_i32 : i32, i32
  }
  func.func @transform_1(%arg0: i32) -> (i32, i32) {
    %c0_i32 = arith.constant 0 : i32
    %c0_i32_0 = arith.constant 0 : i32
    %c0_i32_1 = arith.constant 0 : i32
    return %c0_i32, %c0_i32_0 : i32, i32
  }
  func.func @transform_2(%arg0: i32) -> (i32, i32) {
    %c0_i32 = arith.constant 0 : i32
    %c0_i32_0 = arith.constant 0 : i32
    %c0_i32_1 = arith.constant 0 : i32
    return %c0_i32, %c0_i32_0 : i32, i32
  }
  func.func @transform_3(%arg0: i32) -> (i32, i32) {
    %c0_i32 = arith.constant 0 : i32
    %c0_i32_0 = arith.constant 0 : i32
    return %arg0, %c0_i32 : i32, i32
  }
}

module attributes {stable_mosaic.version = 11 : i64} {
  func.func @lm_head_kernel(%arg0: i32, %arg1: i32, %arg2: memref<16x32xf32, #tpu.memory_space<vmem>>, %arg3: memref<32x64xf32, #tpu.memory_space<vmem>>, %arg4: memref<1x64xf32, #tpu.memory_space<vmem>>, %arg5: memref<16x64xf32, #tpu.memory_space<vmem>>) attributes {dimension_semantics = [#tpu.dimension_semantics<parallel>, #tpu.dimension_semantics<parallel>], iteration_bounds = array<i64: 1, 1>, scalar_prefetch = 0 : i64, scratch_operands = 0 : i64, tpu.core_type = #tpu.core_type<tc>, window_params = [{transform_indices = @transform_0, window_bounds = array<i64: 16, 32>}, {transform_indices = @transform_1, window_bounds = array<i64: 32, 64>}, {transform_indices = @transform_2, window_bounds = array<i64: 1, 64>}, {transform_indices = @transform_3, window_bounds = array<i64: 16, 64>}]} {
    %c0 = arith.constant 0 : index
    %c0_0 = arith.constant 0 : index
    %0 = vector.load %arg2[%c0, %c0_0] : memref<16x32xf32, #tpu.memory_space<vmem>>, vector<16x32xf32>
    %c0_1 = arith.constant 0 : index
    %c0_2 = arith.constant 0 : index
    %1 = vector.load %arg3[%c0_1, %c0_2] : memref<32x64xf32, #tpu.memory_space<vmem>>, vector<32x64xf32>
    %cst = arith.constant dense<0.000000e+00> : vector<16x64xf32>
    %2 = tpu.matmul %0, %1, %cst {dimension_numbers = #tpu.dot_dimension_numbers<[1], [0], [0], [1], [0, 0, 1, 1], [], []>} : vector<16x32xf32>, vector<32x64xf32>, vector<16x64xf32> -> vector<16x64xf32>
    %c0_3 = arith.constant 0 : index
    %c0_4 = arith.constant 0 : index
    %3 = vector.load %arg4[%c0_3, %c0_4] : memref<1x64xf32, #tpu.memory_space<vmem>>, vector<1x64xf32>
    %4 = vector.broadcast %3 : vector<1x64xf32> to vector<16x64xf32>
    %5 = arith.addf %2, %4 : vector<16x64xf32>
    %c0_5 = arith.constant 0 : index
    %c0_6 = arith.constant 0 : index
    %6 = vector.load %arg5[%c0_5, %c0_6] : memref<16x64xf32, #tpu.memory_space<vmem>>, vector<16x64xf32>
    tpu.vector_store %arg5[%c0_5, %c0_6], %5 {strides = array<i32>} : memref<16x64xf32, #tpu.memory_space<vmem>>, vector<16x64xf32>,
    return
  }
  func.func @transform_0(%arg0: i32, %arg1: i32) -> (i32, i32) {
    %c0_i32 = arith.constant 0 : i32
    %c0_i32_0 = arith.constant 0 : i32
    return %arg1, %c0_i32 : i32, i32
  }
  func.func @transform_1(%arg0: i32, %arg1: i32) -> (i32, i32) {
    %c0_i32 = arith.constant 0 : i32
    %c0_i32_0 = arith.constant 0 : i32
    return %c0_i32, %arg0 : i32, i32
  }
  func.func @transform_2(%arg0: i32, %arg1: i32) -> (i32, i32) {
    %c0_i32 = arith.constant 0 : i32
    %c0_i32_0 = arith.constant 0 : i32
    return %c0_i32, %arg0 : i32, i32
  }
  func.func @transform_3(%arg0: i32, %arg1: i32) -> (i32, i32) {
    %c0_i32 = arith.constant 0 : i32
    return %arg1, %arg0 : i32, i32
  }
}

</mosaic_0001>

<llo_original>
// kernel: gpt_forward.14
$region0: #{gpt_forward.14}
  #allocation0 [shape = 'u32[]', space=smem, size = 0x4, offset = 0x4, fixed_abs, tag = 'smem constant byte address 0x4 - core index']
  #allocation1 [shape = 'u32[144,128]{1,0:T(1,128)}', space=vmem, size = 0x12000, scoped, tag = 'internal scratch']
  %s0 = inlined_call_operand.vmem [shape: f32[16,32], index: 0, kind: input, shape index: {}]
  %s1 = inlined_call_operand.vmem [shape: f32[1,32], index: 1, kind: input, shape index: {}]
  %s2 = inlined_call_operand.vmem [shape: f32[1,32], index: 2, kind: input, shape index: {}]
  %s3 = inlined_call_operand.vmem [shape: f32[16,32], index: 3, kind: output, shape index: {}]
  %s4 = sld [smem:[#allocation0]]
  $region22: #{gpt_forward.14} parent=0
    _
  %s6 = ssub.s32 1, %s4
  %s7 = scalar_select 0, %s6, %s4
  // Predicated region
  $region2: #{gpt_forward.14} parent=0 // pred_check
    _
  $region3: #{gpt_forward.14} parent=0 // pred_check_branch
    %9 = sbr.rel (0) target = $region5
  $region4: #{gpt_forward.14} parent=0 // pred_region
    _
  $region5: #{gpt_forward.14} parent=0 // pred_fallthru
    _
  // Predicated region
  $region6: #{gpt_forward.14} parent=0 // pred_check
    _
  $region7: #{gpt_forward.14} parent=0 // pred_check_branch
    %11 = sbr.rel (0) target = $region9
  $region8: #{gpt_forward.14} parent=0 // pred_region
    _
  $region9: #{gpt_forward.14} parent=0 // pred_fallthru
    _
  // Predicated region
  $region10: #{gpt_forward.14} parent=0 // pred_check
    _
  $region11: #{gpt_forward.14} parent=0 // pred_check_branch
    %13 = sbr.rel (0) target = $region13
  $region12: #{gpt_forward.14} parent=0 // pred_region
    _
  $region13: #{gpt_forward.14} parent=0 // pred_fallthru
    _
  %v14 = vld [vmem:[%s0] sm:$0xff]
  %v15 = vld [vmem:[%s0 + $0x8] sm:$0xff]
  %v16 = vld [vmem:[%s1] sm:$0x1]
  %v17 = vld [vmem:[%s2] sm:$0x1]
  %vm18 = vcmask 261120
  %v19 = vsel %vm18, %v14, 0.0
  %20 = vadd.xlane.f32.xlu0 %v19
  %v21 = vpop.xlane.xlu0 %20
  %v22 = vsel %vm18, %v15, 0.0
  %23 = vadd.xlane.f32.xlu0 %v22
  %v24 = vpop.xlane.xlu0 %23
  %v25 = vrcp.pop 32.0
  %v26 = vmul.f32 %v21, %v25
  %v27 = vmul.f32 %v24, %v25
  %v28 = vsub.f32 %v14, %v26
  %v29 = vsub.f32 %v15, %v27
  %v30 = vmul.f32 %v28, %v28
  %v31 = vmul.f32 %v29, %v29
  %v32 = vsel %vm18, %v30, 0.0
  %33 = vadd.xlane.f32.xlu0 %v32
  %v34 = vpop.xlane.xlu0 %33
  %v35 = vsel %vm18, %v31, 0.0
  %36 = vadd.xlane.f32.xlu0 %v35
  %v37 = vpop.xlane.xlu0 %36
  %v38 = vmul.f32 %v34, %v25
  %v39 = vmul.f32 %v37, %v25
  %v40 = vadd.f32 %v38, 1e-05
  %v41 = vadd.f32 %v39, 1e-05
  %v42 = vrsqrt.pop %v40
  %v43 = vrsqrt.pop %v41
  %v44 = vmul.f32 %v28, %v42
  %v45 = vmul.f32 %v29, %v43
  %v47 = vlaneseq
  %v48 = vshrl.u32 %v47, 7
  %v49 = vsub.s32 0, %v48
  %v50 = vrot.slane %v16, %v49
  %v52 = vmul.f32 %v44, %v50
  %v53 = vmul.f32 %v45, %v50
  %v55 = vlaneseq
  %v56 = vshrl.u32 %v55, 7
  %v57 = vsub.s32 0, %v56
  %v58 = vrot.slane %v17, %v57
  %v60 = vadd.f32 %v52, %v58
  %v61 = vadd.f32 %v53, %v58
  %62 = vst.msk [vmem:[%s3] sm:$0xff] %vm18, %v60
  %63 = vst.msk [vmem:[%s3 + $0x8] sm:$0xff] %vm18, %v61
  // Predicated region
  $region14: #{gpt_forward.14} parent=0 // pred_check
    _
  $region15: #{gpt_forward.14} parent=0 // pred_check_branch
    %65 = sbr.rel (0) target = $region17
  $region16: #{gpt_forward.14} parent=0 // pred_region
    _
  $region17: #{gpt_forward.14} parent=0 // pred_fallthru
    _
  // Predicated region
  $region18: #{gpt_forward.14} parent=0 // pred_check
    _
  $region19: #{gpt_forward.14} parent=0 // pred_check_branch
    %67 = sbr.rel (0) target = $region21
  $region20: #{gpt_forward.14} parent=0 // pred_region
    _
  $region21: #{gpt_forward.14} parent=0 // pred_fallthru
    _

// kernel: gpt_forward.8
$region0: #{gpt_forward.8}
  #allocation0 [shape = 'u32[]', space=smem, size = 0x4, offset = 0x4, fixed_abs, tag = 'smem constant byte address 0x4 - core index']
  #allocation1 [shape = 'u32[144,128]{1,0:T(1,128)}', space=vmem, size = 0x12000, scoped, tag = 'internal scratch']
  #allocation2 [shape = 'f32[8,32]{1,0:T(8,128)}', space=vmem, size = 0x1000, scoped, tag = 'scratch operand']
  %s0 = inlined_call_operand.vmem [shape: f32[2,8,32], index: 0, kind: input, shape index: {}]
  %s1 = inlined_call_operand.vmem [shape: f32[1,32], index: 1, kind: input, shape index: {}]
  %s2 = inlined_call_operand.vmem [shape: f32[1,32], index: 2, kind: input, shape index: {}]
  %s3 = inlined_call_operand.vmem [shape: f32[4,32,24], index: 3, kind: input, shape index: {}]
  %s4 = inlined_call_operand.vmem [shape: f32[8,8,8], index: 4, kind: output, shape index: {0}]
  %s5 = inlined_call_operand.vmem [shape: f32[8,8,8], index: 5, kind: output, shape index: {1}]
  %s6 = inlined_call_operand.vmem [shape: f32[8,8,8], index: 6, kind: output, shape index: {2}]
  %7 = xla_tuple %s4, %s5, %s6
  %s8 = sld [smem:[#allocation0]]
  $region69: #{gpt_forward.8} parent=0
    _
  %s10 = ssub.s32 1, %s8
  %s11 = scalar_select 0, %s10, %s8
  loop: start=0, step=1, limit=10
  $region2: #{gpt_forward.8} parent=0 // loop_pre_header
    _
  $region3: #{gpt_forward.8} parent=0 // loop_header
    %s13 = sphi 0, %s17
    %p14 = scmp.ge.s32.totalorder %s13, 10
    %s20 = sphi 0, %s39
    %s21 = sphi 0, %s35
    %s22 = sphi 0, %s31
    %s23 = sphi 0, %s20
    %s24 = sphi 0, %s21
    %s25 = sphi 0, %s22
    %s26 = sphi 0, %s23
    %s27 = sphi 0, %s24
    %s28 = sphi 0, %s25
    %s44 = sphi 0, %s46
    %s47 = sphi 0, %s44
    %s48 = sphi 0, %s47
    %s64 = sphi 0, %s48
    %s68 = sphi 0, %s68
    %s70 = sphi 0, %s68
    %s71 = sphi 0, %s70
    %s85 = sphi 0, %s71
    %s89 = sphi 0, %s89
    %s91 = sphi 0, %s89
    %s92 = sphi 0, %s91
    %s106 = sphi 0, %s92
    %s112 = sphi 0, %s114
    %s115 = sphi 0, %s112
    %s116 = sphi 0, %s115
    %s132 = sphi 0, %s116
    %s144 = sphi 0, %s146
    %s147 = sphi 0, %s144
    %s148 = sphi 0, %s147
    %s164 = sphi 0, %s148
    %s176 = sphi 0, %s178
    %s179 = sphi 0, %s176
    %s180 = sphi 0, %s179
    %s196 = sphi 0, %s180
    %s208 = sphi 0, %s210
    %s211 = sphi 0, %s208
    %s212 = sphi 0, %s211
    %s228 = sphi 0, %s212
  $region4: #{gpt_forward.8} parent=0 // loop_header_branch
    %16 = sbr.rel (%p14) target = $region8
  $region5: #{gpt_forward.8} parent=0 // loop_body
    %s18 = ssub.s32 %s13, 1
    %s19 = ssub.s32 %s13, 2
    %s29 = sadd.s32 1, %s22
    %p30 = scmp.ge.s32.totalorder %s29, 4
    %s31 = scalar_select %p30, 0, %s29
    %s32 = sadd.s32 1, %s21
    %s33 = scalar_select %p30, %s32, %s21
    %p34 = scmp.ge.s32.totalorder %s33, 1
    %s35 = scalar_select %p34, 0, %s33
    %s36 = sadd.s32 1, %s20
    %s37 = scalar_select %p34, %s36, %s20
    %p38 = scmp.ge.s32.totalorder %s37, 2
    %s39 = scalar_select %p38, 0, %s37
    %s40 = ssub.s32 %s20, %s39
    %s41 = ssub.s32 %s21, %s35
    %s42 = sor.u32 %s40, %s41
    %p43 = scmp.eq.s32.totalorder %s42, 0
    %s45 = sadd.s32 %s44, 1
    %s46 = scalar_select %p43, %s44, %s45
    %p49 = pneg %p43
    %p50 = scmp.eq.s32.totalorder %s13, 7
    %p51 = por %p49, %p50
    %p52 = scmp.ne.s32.totalorder %s44, %s47
    %p53 = scmp.eq.s32.totalorder %s13, 0
    %p54 = por %p52, %p53
    %p55 = scmp.ne.s32.totalorder %s44, %s47
    %p56 = scmp.eq.s32.totalorder %s18, 7
    %p57 = por %p55, %p56
    %p58 = scmp.ne.s32.totalorder %s47, %s48
    %p59 = scmp.eq.s32.totalorder %s18, 0
    %p60 = por %p58, %p59
    %p61 = scmp.ne.s32.totalorder %s47, %s48
    %p62 = scmp.eq.s32.totalorder %s19, 7
    %p63 = por %p61, %p62
    %p65 = scmp.ne.s32.totalorder %s48, %s64
    %p66 = scmp.eq.s32.totalorder %s19, 0
    %p67 = por %p65, %p66
    %s69 = sadd.s32 %s68, 1
    %p72 = scmp.eq.s32.totalorder %s13, 7
    %p73 = scmp.ne.s32.totalorder %s68, %s70
    %p74 = scmp.eq.s32.totalorder %s13, 0
    %p75 = por %p73, %p74
    %p76 = scmp.ne.s32.totalorder %s68, %s70
    %p77 = scmp.eq.s32.totalorder %s18, 7
    %p78 = por %p76, %p77
    %p79 = scmp.ne.s32.totalorder %s70, %s71
    %p80 = scmp.eq.s32.totalorder %s18, 0
    %p81 = por %p79, %p80
    %p82 = scmp.ne.s32.totalorder %s70, %s71
    %p83 = scmp.eq.s32.totalorder %s19, 7
    %p84 = por %p82, %p83
    %p86 = scmp.ne.s32.totalorder %s71, %s85
    %p87 = scmp.eq.s32.totalorder %s19, 0
    %p88 = por %p86, %p87
    %s90 = sadd.s32 %s89, 1
    %p93 = scmp.eq.s32.totalorder %s13, 7
    %p94 = scmp.ne.s32.totalorder %s89, %s91
    %p95 = scmp.eq.s32.totalorder %s13, 0
    %p96 = por %p94, %p95
    %p97 = scmp.ne.s32.totalorder %s89, %s91
    %p98 = scmp.eq.s32.totalorder %s18, 7
    %p99 = por %p97, %p98
    %p100 = scmp.ne.s32.totalorder %s91, %s92
    %p101 = scmp.eq.s32.totalorder %s18, 0
    %p102 = por %p100, %p101
    %p103 = scmp.ne.s32.totalorder %s91, %s92
    %p104 = scmp.eq.s32.totalorder %s19, 7
    %p105 = por %p103, %p104
    %p107 = scmp.ne.s32.totalorder %s92, %s106
    %p108 = scmp.eq.s32.totalorder %s19, 0
    %p109 = por %p107, %p108
    %s110 = ssub.s32 %s22, %s31
    %p111 = scmp.eq.s32.totalorder %s110, 0
    %s113 = sadd.s32 %s112, 1
    %s114 = scalar_select %p111, %s112, %s113
    %p117 = pneg %p111
    %p118 = scmp.eq.s32.totalorder %s13, 7
    %p119 = por %p117, %p118
    %p120 = scmp.ne.s32.totalorder %s112, %s115
    %p121 = scmp.eq.s32.totalorder %s13, 0
    %p122 = por %p120, %p121
    %p123 = scmp.ne.s32.totalorder %s112, %s115
    %p124 = scmp.eq.s32.totalorder %s18, 7
    %p125 = por %p123, %p124
    %p126 = scmp.ne.s32.totalorder %s115, %s116
    %p127 = scmp.eq.s32.totalorder %s18, 0
    %p128 = por %p126, %p127
    %p129 = scmp.ne.s32.totalorder %s115, %s116
    %p130 = scmp.eq.s32.totalorder %s19, 7
    %p131 = por %p129, %p130
    %p133 = scmp.ne.s32.totalorder %s116, %s132
    %p134 = scmp.eq.s32.totalorder %s19, 0
    %p135 = por %p133, %p134
    %s136 = smul.u32 %s20, 4
    %s137 = sadd.s32 %s136, %s22
    %s138 = smul.u32 %s39, 4
    %s139 = sadd.s32 %s138, %s31
    %s140 = ssub.s32 %s137, %s139
    %s141 = ssub.s32 %s21, %s35
    %s142 = sor.u32 %s140, %s141
    %p143 = scmp.eq.s32.totalorder %s142, 0
    %s145 = sadd.s32 %s144, 1
    %s146 = scalar_select %p143, %s144, %s145
    %p149 = pneg %p143
    %p150 = scmp.eq.s32.totalorder %s13, 7
    %p151 = por %p149, %p150
    %p152 = scmp.ne.s32.totalorder %s144, %s147
    %p153 = scmp.eq.s32.totalorder %s13, 0
    %p154 = por %p152, %p153
    %p155 = scmp.ne.s32.totalorder %s144, %s147
    %p156 = scmp.eq.s32.totalorder %s18, 7
    %p157 = por %p155, %p156
    %p158 = scmp.ne.s32.totalorder %s147, %s148
    %p159 = scmp.eq.s32.totalorder %s18, 0
    %p160 = por %p158, %p159
    %p161 = scmp.ne.s32.totalorder %s147, %s148
    %p162 = scmp.eq.s32.totalorder %s19, 7
    %p163 = por %p161, %p162
    %p165 = scmp.ne.s32.totalorder %s148, %s164
    %p166 = scmp.eq.s32.totalorder %s19, 0
    %p167 = por %p165, %p166
    %s168 = smul.u32 %s20, 4
    %s169 = sadd.s32 %s168, %s22
    %s170 = smul.u32 %s39, 4
    %s171 = sadd.s32 %s170, %s31
    %s172 = ssub.s32 %s169, %s171
    %s173 = ssub.s32 %s21, %s35
    %s174 = sor.u32 %s172, %s173
    %p175 = scmp.eq.s32.totalorder %s174, 0
    %s177 = sadd.s32 %s176, 1
    %s178 = scalar_select %p175, %s176, %s177
    %p181 = pneg %p175
    %p182 = scmp.eq.s32.totalorder %s13, 7
    %p183 = por %p181, %p182
    %p184 = scmp.ne.s32.totalorder %s176, %s179
    %p185 = scmp.eq.s32.totalorder %s13, 0
    %p186 = por %p184, %p185
    %p187 = scmp.ne.s32.totalorder %s176, %s179
    %p188 = scmp.eq.s32.totalorder %s18, 7
    %p189 = por %p187, %p188
    %p190 = scmp.ne.s32.totalorder %s179, %s180
    %p191 = scmp.eq.s32.totalorder %s18, 0
    %p192 = por %p190, %p191
    %p193 = scmp.ne.s32.totalorder %s179, %s180
    %p194 = scmp.eq.s32.totalorder %s19, 7
    %p195 = por %p193, %p194
    %p197 = scmp.ne.s32.totalorder %s180, %s196
    %p198 = scmp.eq.s32.totalorder %s19, 0
    %p199 = por %p197, %p198
    %s200 = smul.u32 %s20, 4
    %s201 = sadd.s32 %s200, %s22
    %s202 = smul.u32 %s39, 4
    %s203 = sadd.s32 %s202, %s31
    %s204 = ssub.s32 %s201, %s203
    %s205 = ssub.s32 %s21, %s35
    %s206 = sor.u32 %s204, %s205
    %p207 = scmp.eq.s32.totalorder %s206, 0
    %s209 = sadd.s32 %s208, 1
    %s210 = scalar_select %p207, %s208, %s209
    %p213 = pneg %p207
    %p214 = scmp.eq.s32.totalorder %s13, 7
    %p215 = por %p213, %p214
    %p216 = scmp.ne.s32.totalorder %s208, %s211
    %p217 = scmp.eq.s32.totalorder %s13, 0
    %p218 = por %p216, %p217
    %p219 = scmp.ne.s32.totalorder %s208, %s211
    %p220 = scmp.eq.s32.totalorder %s18, 7
    %p221 = por %p219, %p220
    %p222 = scmp.ne.s32.totalorder %s211, %s212
    %p223 = scmp.eq.s32.totalorder %s18, 0
    %p224 = por %p222, %p223
    %p225 = scmp.ne.s32.totalorder %s211, %s212
    %p226 = scmp.eq.s32.totalorder %s19, 7
    %p227 = por %p225, %p226
    %p229 = scmp.ne.s32.totalorder %s212, %s228
    %p230 = scmp.eq.s32.totalorder %s19, 0
    %p231 = por %p229, %p230
    %p232 = scmp.le.s32.totalorder 1, %s13
    %p233 = scmp.lt.s32.totalorder %s13, 9
    %p234 = pnand %p232, %p233
    %p235 = pneg %p234
    // Predicated region
    $region9: #{gpt_forward.8} parent=5 // pred_check
      _
    $region10: #{gpt_forward.8} parent=5 // pred_check_branch
      %237 = sbr.rel (%p234) target = $region12
    $region11: #{gpt_forward.8} parent=5 // pred_region
      %s238 = ssub.s32 %s13, 1
      // Predicated region
      $region13: #{gpt_forward.8} parent=11 // pred_check
        %p239 = pneg %p81
      $region14: #{gpt_forward.8} parent=11 // pred_check_branch
        %241 = sbr.rel (%p239) target = $region16
      $region15: #{gpt_forward.8} parent=11 // pred_region
        _
      $region16: #{gpt_forward.8} parent=11 // pred_fallthru
        _
      // Predicated region
      $region17: #{gpt_forward.8} parent=11 // pred_check
        %p242 = pneg %p102
      $region18: #{gpt_forward.8} parent=11 // pred_check_branch
        %244 = sbr.rel (%p242) target = $region20
      $region19: #{gpt_forward.8} parent=11 // pred_region
        _
      $region20: #{gpt_forward.8} parent=11 // pred_fallthru
        _
    $region12: #{gpt_forward.8} parent=5 // pred_fallthru
      _
    %p245 = scmp.lt.s32.totalorder %s13, 8
    // Predicated region
    $region21: #{gpt_forward.8} parent=5 // pred_check
      %p246 = pneg %p245
    $region22: #{gpt_forward.8} parent=5 // pred_check_branch
      %248 = sbr.rel (%p246) target = $region24
    $region23: #{gpt_forward.8} parent=5 // pred_region
      // Predicated region
      $region25: #{gpt_forward.8} parent=23 // pred_check
        %p249 = pneg %p54
      $region26: #{gpt_forward.8} parent=23 // pred_check_branch
        %251 = sbr.rel (%p249) target = $region28
      $region27: #{gpt_forward.8} parent=23 // pred_region
        %p252 = scmp.lt.s32.totalorder %s20, 1
        %s253 = scalar_select %p252, %s20, 1
        %p254 = scmp.lt.s32.totalorder %s21, 0
        %s255 = scalar_select %p254, %s21, 0
        %s256 = sadd.s32 %s255, %s253
        %s257 = smul.addr %s256, 8
        %s258 = scalar_lea.vmem %s0, %s257
      $region28: #{gpt_forward.8} parent=23 // pred_fallthru
        _
      // Predicated region
      $region29: #{gpt_forward.8} parent=23 // pred_check
        %p259 = pneg %p122
      $region30: #{gpt_forward.8} parent=23 // pred_check_branch
        %261 = sbr.rel (%p259) target = $region32
      $region31: #{gpt_forward.8} parent=23 // pred_region
        %p262 = scmp.lt.s32.totalorder %s22, 3
        %s263 = scalar_select %p262, %s22, 3
        %s264 = smul.addr %s263, 4
        %s265 = smul.addr %s264, 8
        %s266 = scalar_lea.vmem %s3, %s265
      $region32: #{gpt_forward.8} parent=23 // pred_fallthru
        _
    $region24: #{gpt_forward.8} parent=5 // pred_fallthru
      _
    %p267 = scmp.le.s32.totalorder 1, %s13
    %p268 = scmp.lt.s32.totalorder %s13, 9
    %p269 = pnand %p267, %p268
    %p270 = pneg %p269
    // Predicated region
    $region33: #{gpt_forward.8} parent=5 // pred_check
      _
    $region34: #{gpt_forward.8} parent=5 // pred_check_branch
      %272 = sbr.rel (%p269) target = $region36
    $region35: #{gpt_forward.8} parent=5 // pred_region
      %s273 = ssub.s32 %s13, 1
      %p274 = scmp.lt.s32.totalorder %s23, 1
      %s275 = scalar_select %p274, %s23, 1
      %p276 = scmp.lt.s32.totalorder %s24, 0
      %s277 = scalar_select %p276, %s24, 0
      %s278 = sadd.s32 %s277, %s275
      %s279 = smul.addr %s278, 8
      %s280 = scalar_lea.vmem %s0, %s279
      %p281 = pneg %p60
      %p282 = pneg %p57
      %p283 = pneg %p81
      %p284 = pneg %p78
      %p285 = pneg %p102
      %p286 = pneg %p99
      %p287 = scmp.lt.s32.totalorder %s25, 3
      %s288 = scalar_select %p287, %s25, 3
      %s289 = smul.addr %s288, 4
      %s290 = smul.addr %s289, 8
      %s291 = scalar_lea.vmem %s3, %s290
      %p292 = pneg %p128
      %p293 = pneg %p125
      %p294 = pneg %p160
      %p295 = pneg %p157
      %s296 = smul.u32 %s23, 4
      %s297 = sadd.s32 %s296, %s25
      %p298 = scmp.lt.s32.totalorder %s297, 7
      %s299 = scalar_select %p298, %s297, 7
      %p300 = scmp.lt.s32.totalorder %s24, 0
      %s301 = scalar_select %p300, %s24, 0
      %s302 = sadd.s32 %s301, %s299
      %s303 = smul.addr %s302, 8
      %s304 = scalar_lea.vmem %s4, %s303
      %p305 = pneg %p192
      %p306 = pneg %p189
      %s307 = smul.u32 %s23, 4
      %s308 = sadd.s32 %s307, %s25
      %p309 = scmp.lt.s32.totalorder %s308, 7
      %s310 = scalar_select %p309, %s308, 7
      %p311 = scmp.lt.s32.totalorder %s24, 0
      %s312 = scalar_select %p311, %s24, 0
      %s313 = sadd.s32 %s312, %s310
      %s314 = smul.addr %s313, 8
      %s315 = scalar_lea.vmem %s5, %s314
      %p316 = pneg %p224
      %p317 = pneg %p221
      %s318 = smul.u32 %s23, 4
      %s319 = sadd.s32 %s318, %s25
      %p320 = scmp.lt.s32.totalorder %s319, 7
      %s321 = scalar_select %p320, %s319, 7
      %p322 = scmp.lt.s32.totalorder %s24, 0
      %s323 = scalar_select %p322, %s24, 0
      %s324 = sadd.s32 %s323, %s321
      %s325 = smul.addr %s324, 8
      %s326 = scalar_lea.vmem %s6, %s325
      %p327 = scmp.lt.s32.totalorder %s23, 1
      %s328 = scalar_select %p327, %s23, 1
      %p329 = scmp.lt.s32.totalorder %s24, 0
      %s330 = scalar_select %p329, %s24, 0
      %s331 = sadd.s32 %s330, %s328
      %s332 = smul.addr %s331, 8
      %s333 = scalar_lea.vmem %s0, %s332
      %p334 = scmp.lt.s32.totalorder %s25, 3
      %s335 = scalar_select %p334, %s25, 3
      %s336 = smul.addr %s335, 4
      %s337 = smul.addr %s336, 8
      %s338 = scalar_lea.vmem %s3, %s337
      %s339 = smul.u32 %s23, 4
      %s340 = sadd.s32 %s339, %s25
      %p341 = scmp.lt.s32.totalorder %s340, 7
      %s342 = scalar_select %p341, %s340, 7
      %p343 = scmp.lt.s32.totalorder %s24, 0
      %s344 = scalar_select %p343, %s24, 0
      %s345 = sadd.s32 %s344, %s342
      %s346 = smul.addr %s345, 8
      %s347 = scalar_lea.vmem %s4, %s346
      %s348 = smul.u32 %s23, 4
      %s349 = sadd.s32 %s348, %s25
      %s350 = smul.u32 %s23, 4
      %s351 = sadd.s32 %s350, %s25
      %p352 = scmp.lt.s32.totalorder %s351, 7
      %s353 = scalar_select %p352, %s351, 7
      %p354 = scmp.lt.s32.totalorder %s24, 0
      %s355 = scalar_select %p354, %s24, 0
      %s356 = sadd.s32 %s355, %s353
      %s357 = smul.addr %s356, 8
      %s358 = scalar_lea.vmem %s5, %s357
      %s359 = smul.u32 %s23, 4
      %s360 = sadd.s32 %s359, %s25
      %s361 = smul.u32 %s23, 4
      %s362 = sadd.s32 %s361, %s25
      %p363 = scmp.lt.s32.totalorder %s362, 7
      %s364 = scalar_select %p363, %s362, 7
      %p365 = scmp.lt.s32.totalorder %s24, 0
      %s366 = scalar_select %p365, %s24, 0
      %s367 = sadd.s32 %s366, %s364
      %s368 = smul.addr %s367, 8
      %s369 = scalar_lea.vmem %s6, %s368
      %s370 = smul.u32 %s23, 4
      %s371 = sadd.s32 %s370, %s25
      %p372 = scmp.eq.s32.totalorder %s25, 0
      // Predicated region
      $region37: #{gpt_forward.8} parent=35 // pred_check
        %p373 = pneg %p372
      $region38: #{gpt_forward.8} parent=35 // pred_check_branch
        %375 = sbr.rel (%p373) target = $region40
      $region39: #{gpt_forward.8} parent=35 // pred_region
        %v376 = vld [vmem:[%s333] sm:$0xff]
        %v377 = vld [vmem:[%s1] sm:$0x1]
        %v378 = vld [vmem:[%s2] sm:$0x1]
        %vm379 = vcmask 261120
        %v380 = vsel %vm379, %v376, 0.0
        %381 = vadd.xlane.f32.xlu0 %v380
        %v382 = vpop.xlane.xlu0 %381
        %v383 = vrcp.pop 32.0
        %v384 = vmul.f32 %v382, %v383
        %v385 = vsub.f32 %v376, %v384
        %v386 = vmul.f32 %v385, %v385
        %v387 = vsel %vm379, %v386, 0.0
        %388 = vadd.xlane.f32.xlu0 %v387
        %v389 = vpop.xlane.xlu0 %388
        %v390 = vmul.f32 %v389, %v383
        %v391 = vadd.f32 %v390, 1e-05
        %v392 = vrsqrt.pop %v391
        %v393 = vmul.f32 %v385, %v392
        %v395 = vlaneseq
        %v396 = vshrl.u32 %v395, 7
        %v397 = vsub.s32 0, %v396
        %v398 = vrot.slane %v377, %v397
        %v400 = vmul.f32 %v393, %v398
        %v402 = vlaneseq
        %v403 = vshrl.u32 %v402, 7
        %v404 = vsub.s32 0, %v403
        %v405 = vrot.slane %v378, %v404
        %v407 = vadd.f32 %v400, %v405
        %408 = vst.msk [vmem:[#allocation2] sm:$0xff] %vm379, %v407
      $region40: #{gpt_forward.8} parent=35 // pred_fallthru
        _
      %v409 = vld [vmem:[#allocation2] sm:$0xff]
      %v410 = vld [vmem:[%s338] sm:$0xff]
      %v411 = vld [vmem:[%s338 + $0x8] sm:$0xff]
      %v412 = vld [vmem:[%s338 + $0x10] sm:$0xff]
      %v413 = vld [vmem:[%s338 + $0x18] sm:$0xff]
      %vm414 = vcmask 261120
      %v416 = vsel %vm414, %v409, 0
      %418 = vmatprep.subr.mxu0 0.0
      %419 = vmatpush1.msra.mxu0 %v410
      %420 = vmatprep.subr.mxu0 0.0
      %421 = vmatpush1.msra.mxu0 %v411
      %422 = vmatprep.subr.mxu0 0.0
      %423 = vmatpush1.msra.mxu0 %v412
      %424 = vmatprep.subr.mxu0 0.0
      %425 = vmatpush1.msra.mxu0 %v413
      %426 = vmatprep.subr.mxu0 0.0
      %427 = vmatpush1.msra.mxu0 0.0
      %428 = vmatprep.subr.mxu0 0.0
      %429 = vmatpush1.msra.mxu0 0.0
      %430 = vmatprep.subr.mxu0 0.0
      %431 = vmatpush1.msra.mxu0 0.0
      %432 = vmatprep.subr.mxu0 0.0
      %433 = vmatpush1.msra.mxu0 0.0
      %434 = vmatprep.subr.mxu0 0.0
      %435 = vmatpush1.msra.mxu0 0.0
      %436 = vmatprep.subr.mxu0 0.0
      %437 = vmatpush1.msra.mxu0 0.0
      %438 = vmatprep.subr.mxu0 0.0
      %439 = vmatpush1.msra.mxu0 0.0
      %440 = vmatprep.subr.mxu0 0.0
      %441 = vmatpush1.msra.mxu0 0.0
      %442 = vmatprep.subr.mxu0 0.0
      %443 = vmatpush1.msra.mxu0 0.0
      %444 = vmatprep.subr.mxu0 0.0
      %445 = vmatpush1.msra.mxu0 0.0
      %446 = vmatprep.subr.mxu0 0.0
      %447 = vmatpush1.msra.mxu0 0.0
      %448 = vmatprep.subr.mxu0 0.0
      %449 = vmatpush1.msra.mxu0 0.0
      %450 = vmatprep.subr.mxu0 0.0
      %451 = vmatpush1.msra.mxu0 0.0
      %452 = vmatprep.subr.mxu0 0.0
      %453 = vmatpush1.msra.mxu0 0.0
      %454 = vmatprep.subr.mxu0 0.0
      %455 = vmatpush1.msra.mxu0 0.0
      %456 = vmatprep.subr.mxu0 0.0
      %457 = vmatpush1.msra.mxu0 0.0
      %458 = vmatprep.subr.mxu0 0.0
      %459 = vmatpush1.msra.mxu0 0.0
      %460 = vmatprep.subr.mxu0 0.0
      %461 = vmatpush1.msra.mxu0 0.0
      %462 = vmatprep.subr.mxu0 0.0
      %463 = vmatpush1.msra.mxu0 0.0
      %464 = vmatprep.subr.mxu0 0.0
      %465 = vmatpush1.msra.mxu0 0.0
      %466 = vmatprep.subr.mxu0 0.0
      %467 = vmatpush1.msra.mxu0 0.0
      %468 = vmatprep.subr.mxu0 0.0
      %469 = vmatpush1.msra.mxu0 0.0
      %470 = vmatprep.subr.mxu0 0.0
      %471 = vmatpush1.msra.mxu0 0.0
      %472 = vmatprep.subr.mxu0 0.0
      %473 = vmatpush1.msra.mxu0 0.0
      %474 = vmatprep.subr.mxu0 0.0
      %475 = vmatpush1.msra.mxu0 0.0
      %476 = vmatprep.subr.mxu0 0.0
      %477 = vmatpush1.msra.mxu0 0.0
      %478 = vmatprep.subr.mxu0 0.0
      %479 = vmatpush1.msra.mxu0 0.0
      %480 = vmatprep.subr.mxu0 0.0
      %481 = vmatpush1.msra.mxu0 0.0
      %482 = vmatprep.mubr.f32.mxu0 0.0
      %483 = vmatmul.mubr.f32.gmra.mrb[0].mxu0 %v416
      %v484 = vpop.f32.mrb[0].mxu0
      %v485 = vadd.f32 0.0, %v484
      %v486 = vpop.f32.mrb[0].mxu0
      %487 = vdwg.mxu0
      %vm488 = vcmask 64512
      %489 = vst.msk [vmem:[%s347] sm:$0xff] %vm488, %v485
      %491 = vrot.lane.b32.xlu0 %v485, 120
      %v492 = vpop.permute.xlu0 %491
      %494 = vst.msk [vmem:[%s358] sm:$0xff] %vm488, %v492
      %495 = vrot.lane.b32.xlu0 %v485, 112
      %v496 = vpop.permute.xlu0 %495
      %498 = vst.msk [vmem:[%s369] sm:$0xff] %vm488, %v496
      %s499 = smul.u32 %s23, 4
      %s500 = sadd.s32 %s499, %s25
      %p501 = scmp.lt.s32.totalorder %s500, 7
      %s502 = scalar_select %p501, %s500, 7
      %p503 = scmp.lt.s32.totalorder %s24, 0
      %s504 = scalar_select %p503, %s24, 0
      %s505 = sadd.s32 %s504, %s502
      %s506 = smul.addr %s505, 8
      %s507 = scalar_lea.vmem %s4, %s506
      %s508 = smul.u32 %s23, 4
      %s509 = sadd.s32 %s508, %s25
      %p510 = scmp.lt.s32.totalorder %s509, 7
      %s511 = scalar_select %p510, %s509, 7
      %p512 = scmp.lt.s32.totalorder %s24, 0
      %s513 = scalar_select %p512, %s24, 0
      %s514 = sadd.s32 %s513, %s511
      %s515 = smul.addr %s514, 8
      %s516 = scalar_lea.vmem %s5, %s515
      %s517 = smul.u32 %s23, 4
      %s518 = sadd.s32 %s517, %s25
      %p519 = scmp.lt.s32.totalorder %s518, 7
      %s520 = scalar_select %p519, %s518, 7
      %p521 = scmp.lt.s32.totalorder %s24, 0
      %s522 = scalar_select %p521, %s24, 0
      %s523 = sadd.s32 %s522, %s520
      %s524 = smul.addr %s523, 8
      %s525 = scalar_lea.vmem %s6, %s524
      // Predicated region
      $region41: #{gpt_forward.8} parent=35 // pred_check
        %p526 = pneg %p157
      $region42: #{gpt_forward.8} parent=35 // pred_check_branch
        %528 = sbr.rel (%p526) target = $region44
      $region43: #{gpt_forward.8} parent=35 // pred_region
        %s529 = smul.u32 %s23, 4
        %s530 = sadd.s32 %s529, %s25
      $region44: #{gpt_forward.8} parent=35 // pred_fallthru
        _
      // Predicated region
      $region45: #{gpt_forward.8} parent=35 // pred_check
        %p531 = pneg %p189
      $region46: #{gpt_forward.8} parent=35 // pred_check_branch
        %533 = sbr.rel (%p531) target = $region48
      $region47: #{gpt_forward.8} parent=35 // pred_region
        %s534 = smul.u32 %s23, 4
        %s535 = sadd.s32 %s534, %s25
      $region48: #{gpt_forward.8} parent=35 // pred_fallthru
        _
      // Predicated region
      $region49: #{gpt_forward.8} parent=35 // pred_check
        %p536 = pneg %p221
      $region50: #{gpt_forward.8} parent=35 // pred_check_branch
        %538 = sbr.rel (%p536) target = $region52
      $region51: #{gpt_forward.8} parent=35 // pred_region
        %s539 = smul.u32 %s23, 4
        %s540 = sadd.s32 %s539, %s25
      $region52: #{gpt_forward.8} parent=35 // pred_fallthru
        _
    $region36: #{gpt_forward.8} parent=5 // pred_fallthru
      _
    %p541 = scmp.le.s32.totalorder 2, %s13
    // Predicated region
    $region53: #{gpt_forward.8} parent=5 // pred_check
      %p542 = pneg %p541
    $region54: #{gpt_forward.8} parent=5 // pred_check_branch
      %544 = sbr.rel (%p542) target = $region56
    $region55: #{gpt_forward.8} parent=5 // pred_region
      %s545 = ssub.s32 %s13, 2
      // Predicated region
      $region57: #{gpt_forward.8} parent=55 // pred_check
        %p546 = pneg %p163
      $region58: #{gpt_forward.8} parent=55 // pred_check_branch
        %548 = sbr.rel (%p546) target = $region60
      $region59: #{gpt_forward.8} parent=55 // pred_region
        %s549 = smul.u32 %s26, 4
        %s550 = sadd.s32 %s549, %s28
        %p551 = scmp.lt.s32.totalorder %s550, 7
        %s552 = scalar_select %p551, %s550, 7
        %p553 = scmp.lt.s32.totalorder %s27, 0
        %s554 = scalar_select %p553, %s27, 0
        %s555 = sadd.s32 %s554, %s552
        %s556 = smul.addr %s555, 8
        %s557 = scalar_lea.vmem %s4, %s556
      $region60: #{gpt_forward.8} parent=55 // pred_fallthru
        _
      // Predicated region
      $region61: #{gpt_forward.8} parent=55 // pred_check
        %p558 = pneg %p195
      $region62: #{gpt_forward.8} parent=55 // pred_check_branch
        %560 = sbr.rel (%p558) target = $region64
      $region63: #{gpt_forward.8} parent=55 // pred_region
        %s561 = smul.u32 %s26, 4
        %s562 = sadd.s32 %s561, %s28
        %p563 = scmp.lt.s32.totalorder %s562, 7
        %s564 = scalar_select %p563, %s562, 7
        %p565 = scmp.lt.s32.totalorder %s27, 0
        %s566 = scalar_select %p565, %s27, 0
        %s567 = sadd.s32 %s566, %s564
        %s568 = smul.addr %s567, 8
        %s569 = scalar_lea.vmem %s5, %s568
      $region64: #{gpt_forward.8} parent=55 // pred_fallthru
        _
      // Predicated region
      $region65: #{gpt_forward.8} parent=55 // pred_check
        %p570 = pneg %p227
      $region66: #{gpt_forward.8} parent=55 // pred_check_branch
        %572 = sbr.rel (%p570) target = $region68
      $region67: #{gpt_forward.8} parent=55 // pred_region
        %s573 = smul.u32 %s26, 4
        %s574 = sadd.s32 %s573, %s28
        %p575 = scmp.lt.s32.totalorder %s574, 7
        %s576 = scalar_select %p575, %s574, 7
        %p577 = scmp.lt.s32.totalorder %s27, 0
        %s578 = scalar_select %p577, %s27, 0
        %s579 = sadd.s32 %s578, %s576
        %s580 = smul.addr %s579, 8
        %s581 = scalar_lea.vmem %s6, %s580
      $region68: #{gpt_forward.8} parent=55 // pred_fallthru
        _
    $region56: #{gpt_forward.8} parent=5 // pred_fallthru
      _
  $region6: #{gpt_forward.8} parent=0 // loop_footer
    %s17 = sadd.s32 1, %s13
  $region7: #{gpt_forward.8} parent=0 // loop_footer_branch
    %12 = sbr.rel target = $region3
  $region8: #{gpt_forward.8} parent=0 // loop_exit
    _

// kernel: gpt_forward.10
$region0: #{gpt_forward.10}
  #allocation0 [shape = 'u32[]', space=smem, size = 0x4, offset = 0x4, fixed_abs, tag = 'smem constant byte address 0x4 - core index']
  #allocation1 [shape = 'u32[144,128]{1,0:T(1,128)}', space=vmem, size = 0x12000, scoped, tag = 'internal scratch']
  #allocation2 [shape = 'f32[16,32]{1,0:T(8,128)}', space=vmem, size = 0x2000, scoped, tag = 'scratch operand']
  #allocation3 [shape = 'f32[16,32]{1,0:T(8,128)}', space=vmem, size = 0x2000, scoped, tag = 'scratch operand']
  %s0 = inlined_call_operand.vmem [shape: f32[16,32], index: 0, kind: input, shape index: {}, may-alias: {0,7}]
  %s1 = inlined_call_operand.vmem [shape: f32[1,32], index: 1, kind: input, shape index: {}]
  %s2 = inlined_call_operand.vmem [shape: f32[1,32], index: 2, kind: input, shape index: {}]
  %s3 = inlined_call_operand.vmem [shape: f32[32,128], index: 3, kind: input, shape index: {}]
  %s4 = inlined_call_operand.vmem [shape: f32[1,128], index: 4, kind: input, shape index: {}]
  %s5 = inlined_call_operand.vmem [shape: f32[128,32], index: 5, kind: input, shape index: {}]
  %s6 = inlined_call_operand.vmem [shape: f32[1,32], index: 6, kind: input, shape index: {}]
  %s7 = inlined_call_operand.vmem [shape: f32[16,32], index: 7, kind: output, shape index: {}, may-alias: {0,7}]
  %s8 = sld [smem:[#allocation0]]
  $region46: #{gpt_forward.10} parent=0
    _
  %s10 = ssub.s32 1, %s8
  %s11 = scalar_select 0, %s10, %s8
  // Predicated region
  $region2: #{gpt_forward.10} parent=0 // pred_check
    _
  $region3: #{gpt_forward.10} parent=0 // pred_check_branch
    %13 = sbr.rel (0) target = $region5
  $region4: #{gpt_forward.10} parent=0 // pred_region
    _
  $region5: #{gpt_forward.10} parent=0 // pred_fallthru
    _
  // Predicated region
  $region6: #{gpt_forward.10} parent=0 // pred_check
    _
  $region7: #{gpt_forward.10} parent=0 // pred_check_branch
    %15 = sbr.rel (0) target = $region9
  $region8: #{gpt_forward.10} parent=0 // pred_region
    _
  $region9: #{gpt_forward.10} parent=0 // pred_fallthru
    _
  // Predicated region
  $region10: #{gpt_forward.10} parent=0 // pred_check
    _
  $region11: #{gpt_forward.10} parent=0 // pred_check_branch
    %17 = sbr.rel (0) target = $region13
  $region12: #{gpt_forward.10} parent=0 // pred_region
    _
  $region13: #{gpt_forward.10} parent=0 // pred_fallthru
    _
  // Predicated region
  $region14: #{gpt_forward.10} parent=0 // pred_check
    _
  $region15: #{gpt_forward.10} parent=0 // pred_check_branch
    %19 = sbr.rel (0) target = $region17
  $region16: #{gpt_forward.10} parent=0 // pred_region
    _
  $region17: #{gpt_forward.10} parent=0 // pred_fallthru
    _
  // Predicated region
  $region18: #{gpt_forward.10} parent=0 // pred_check
    _
  $region19: #{gpt_forward.10} parent=0 // pred_check_branch
    %21 = sbr.rel (0) target = $region21
  $region20: #{gpt_forward.10} parent=0 // pred_region
    _
  $region21: #{gpt_forward.10} parent=0 // pred_fallthru
    _
  // Predicated region
  $region22: #{gpt_forward.10} parent=0 // pred_check
    _
  $region23: #{gpt_forward.10} parent=0 // pred_check_branch
    %23 = sbr.rel (0) target = $region25
  $region24: #{gpt_forward.10} parent=0 // pred_region
    _
  $region25: #{gpt_forward.10} parent=0 // pred_fallthru
    _
  // Predicated region
  $region26: #{gpt_forward.10} parent=0 // pred_check
    _
  $region27: #{gpt_forward.10} parent=0 // pred_check_branch
    %25 = sbr.rel (0) target = $region29
  $region28: #{gpt_forward.10} parent=0 // pred_region
    _
  $region29: #{gpt_forward.10} parent=0 // pred_fallthru
    _
  %p26 = scmp.eq.s32.totalorder 0, 0
  // Predicated region
  $region30: #{gpt_forward.10} parent=0 // pred_check
    %p27 = pneg %p26
  $region31: #{gpt_forward.10} parent=0 // pred_check_branch
    %29 = sbr.rel (%p27) target = $region33
  $region32: #{gpt_forward.10} parent=0 // pred_region
    %v30 = vld [vmem:[%s0] sm:$0xff]
    %v31 = vld [vmem:[%s0 + $0x8] sm:$0xff]
    %v32 = vld [vmem:[%s1] sm:$0x1]
    %v33 = vld [vmem:[%s2] sm:$0x1]
    %vm34 = vcmask 261120
    %v35 = vsel %vm34, %v30, 0.0
    %36 = vadd.xlane.f32.xlu0 %v35
    %v37 = vpop.xlane.xlu0 %36
    %v38 = vsel %vm34, %v31, 0.0
    %39 = vadd.xlane.f32.xlu0 %v38
    %v40 = vpop.xlane.xlu0 %39
    %v41 = vrcp.pop 32.0
    %v42 = vmul.f32 %v37, %v41
    %v43 = vmul.f32 %v40, %v41
    %v44 = vsub.f32 %v30, %v42
    %v45 = vsub.f32 %v31, %v43
    %v46 = vmul.f32 %v44, %v44
    %v47 = vmul.f32 %v45, %v45
    %v48 = vsel %vm34, %v46, 0.0
    %49 = vadd.xlane.f32.xlu0 %v48
    %v50 = vpop.xlane.xlu0 %49
    %v51 = vsel %vm34, %v47, 0.0
    %52 = vadd.xlane.f32.xlu0 %v51
    %v53 = vpop.xlane.xlu0 %52
    %v54 = vmul.f32 %v50, %v41
    %v55 = vmul.f32 %v53, %v41
    %v56 = vadd.f32 %v54, 1e-05
    %v57 = vadd.f32 %v55, 1e-05
    %v58 = vrsqrt.pop %v56
    %v59 = vrsqrt.pop %v57
    %v60 = vmul.f32 %v44, %v58
    %v61 = vmul.f32 %v45, %v59
    %v63 = vlaneseq
    %v64 = vshrl.u32 %v63, 7
    %v65 = vsub.s32 0, %v64
    %v66 = vrot.slane %v32, %v65
    %v68 = vmul.f32 %v60, %v66
    %v69 = vmul.f32 %v61, %v66
    %v71 = vlaneseq
    %v72 = vshrl.u32 %v71, 7
    %v73 = vsub.s32 0, %v72
    %v74 = vrot.slane %v33, %v73
    %v76 = vadd.f32 %v68, %v74
    %v77 = vadd.f32 %v69, %v74
    %78 = vst.msk [vmem:[#allocation2] sm:$0xff] %vm34, %v76
    %79 = vst.msk [vmem:[#allocation2 + $0x8] sm:$0xff] %vm34, %v77
    %80 = vst.msk [vmem:[#allocation3] sm:$0xff] %vm34, 0.0
    %81 = vst.msk [vmem:[#allocation3 + $0x8] sm:$0xff] %vm34, 0.0
  $region33: #{gpt_forward.10} parent=0 // pred_fallthru
    _
  %v82 = vld [vmem:[#allocation2] sm:$0xff]
  %v83 = vld [vmem:[#allocation2 + $0x8] sm:$0xff]
  %v84 = vld [vmem:[%s3] sm:$0xff]
  %v85 = vld [vmem:[%s3 + $0x8] sm:$0xff]
  %v86 = vld [vmem:[%s3 + $0x10] sm:$0xff]
  %v87 = vld [vmem:[%s3 + $0x18] sm:$0xff]
  %v88 = vld [vmem:[%s4] sm:$0x1]
  %v90 = vlaneseq
  %v91 = vshrl.u32 %v90, 7
  %v92 = vsub.s32 0, %v91
  %v93 = vrot.slane %v88, %v92
  %vm95 = vcmask 261120
  %v97 = vsel %vm95, %v82, 0
  %v100 = vsel %vm95, %v83, 0
  %102 = vmatprep.subr.mxu0 0.0
  %103 = vmatpush1.msra.mxu0 %v84
  %104 = vmatprep.subr.mxu0 0.0
  %105 = vmatpush1.msra.mxu0 %v85
  %106 = vmatprep.subr.mxu0 0.0
  %107 = vmatpush1.msra.mxu0 %v86
  %108 = vmatprep.subr.mxu0 0.0
  %109 = vmatpush1.msra.mxu0 %v87
  %110 = vmatprep.subr.mxu0 0.0
  %111 = vmatpush1.msra.mxu0 0.0
  %112 = vmatprep.subr.mxu0 0.0
  %113 = vmatpush1.msra.mxu0 0.0
  %114 = vmatprep.subr.mxu0 0.0
  %115 = vmatpush1.msra.mxu0 0.0
  %116 = vmatprep.subr.mxu0 0.0
  %117 = vmatpush1.msra.mxu0 0.0
  %118 = vmatprep.subr.mxu0 0.0
  %119 = vmatpush1.msra.mxu0 0.0
  %120 = vmatprep.subr.mxu0 0.0
  %121 = vmatpush1.msra.mxu0 0.0
  %122 = vmatprep.subr.mxu0 0.0
  %123 = vmatpush1.msra.mxu0 0.0
  %124 = vmatprep.subr.mxu0 0.0
  %125 = vmatpush1.msra.mxu0 0.0
  %126 = vmatprep.subr.mxu0 0.0
  %127 = vmatpush1.msra.mxu0 0.0
  %128 = vmatprep.subr.mxu0 0.0
  %129 = vmatpush1.msra.mxu0 0.0
  %130 = vmatprep.subr.mxu0 0.0
  %131 = vmatpush1.msra.mxu0 0.0
  %132 = vmatprep.subr.mxu0 0.0
  %133 = vmatpush1.msra.mxu0 0.0
  %134 = vmatprep.subr.mxu0 0.0
  %135 = vmatpush1.msra.mxu0 0.0
  %136 = vmatprep.subr.mxu0 0.0
  %137 = vmatpush1.msra.mxu0 0.0
  %138 = vmatprep.subr.mxu0 0.0
  %139 = vmatpush1.msra.mxu0 0.0
  %140 = vmatprep.subr.mxu0 0.0
  %141 = vmatpush1.msra.mxu0 0.0
  %142 = vmatprep.subr.mxu0 0.0
  %143 = vmatpush1.msra.mxu0 0.0
  %144 = vmatprep.subr.mxu0 0.0
  %145 = vmatpush1.msra.mxu0 0.0
  %146 = vmatprep.subr.mxu0 0.0
  %147 = vmatpush1.msra.mxu0 0.0
  %148 = vmatprep.subr.mxu0 0.0
  %149 = vmatpush1.msra.mxu0 0.0
  %150 = vmatprep.subr.mxu0 0.0
  %151 = vmatpush1.msra.mxu0 0.0
  %152 = vmatprep.subr.mxu0 0.0
  %153 = vmatpush1.msra.mxu0 0.0
  %154 = vmatprep.subr.mxu0 0.0
  %155 = vmatpush1.msra.mxu0 0.0
  %156 = vmatprep.subr.mxu0 0.0
  %157 = vmatpush1.msra.mxu0 0.0
  %158 = vmatprep.subr.mxu0 0.0
  %159 = vmatpush1.msra.mxu0 0.0
  %160 = vmatprep.subr.mxu0 0.0
  %161 = vmatpush1.msra.mxu0 0.0
  %162 = vmatprep.subr.mxu0 0.0
  %163 = vmatpush1.msra.mxu0 0.0
  %164 = vmatprep.subr.mxu0 0.0
  %165 = vmatpush1.msra.mxu0 0.0
  %166 = vmatprep.mubr.f32.mxu0 0.0
  %167 = vmatmul.mubr.f32.gmra.mrb[0].mxu0 %v97
  %v168 = vpop.f32.mrb[0].mxu0
  %v169 = vadd.f32 %v93, %v168
  %v170 = vpop.f32.mrb[0].mxu0
  %171 = vmatprep.mubr.f32.mxu0 0.0
  %172 = vmatmul.mubr.f32.gmra.mrb[0].mxu0 %v100
  %v173 = vpop.f32.mrb[0].mxu0
  %v174 = vadd.f32 %v93, %v173
  %v175 = vpop.f32.mrb[0].mxu0
  %176 = vdwg.mxu0
  %v177 = vmax.f32 %v169, 0.0
  %v178 = vmax.f32 %v174, 0.0
  %v179 = vld [vmem:[#allocation3] sm:$0xff]
  %v180 = vld [vmem:[#allocation3 + $0x8] sm:$0xff]
  %v181 = vld [vmem:[%s5] sm:$0xff]
  %v182 = vld [vmem:[%s5 + $0x8] sm:$0xff]
  %v183 = vld [vmem:[%s5 + $0x10] sm:$0xff]
  %v184 = vld [vmem:[%s5 + $0x18] sm:$0xff]
  %v185 = vld [vmem:[%s5 + $0x20] sm:$0xff]
  %v186 = vld [vmem:[%s5 + $0x28] sm:$0xff]
  %v187 = vld [vmem:[%s5 + $0x30] sm:$0xff]
  %v188 = vld [vmem:[%s5 + $0x38] sm:$0xff]
  %v189 = vld [vmem:[%s5 + $0x40] sm:$0xff]
  %v190 = vld [vmem:[%s5 + $0x48] sm:$0xff]
  %v191 = vld [vmem:[%s5 + $0x50] sm:$0xff]
  %v192 = vld [vmem:[%s5 + $0x58] sm:$0xff]
  %v193 = vld [vmem:[%s5 + $0x60] sm:$0xff]
  %v194 = vld [vmem:[%s5 + $0x68] sm:$0xff]
  %v195 = vld [vmem:[%s5 + $0x70] sm:$0xff]
  %v196 = vld [vmem:[%s5 + $0x78] sm:$0xff]
  %197 = vmatprep.subr.mxu0 0.0
  %198 = vmatpush1.msra.mxu0 %v181
  %199 = vmatprep.subr.mxu0 0.0
  %200 = vmatpush1.msra.mxu0 %v182
  %201 = vmatprep.subr.mxu0 0.0
  %202 = vmatpush1.msra.mxu0 %v183
  %203 = vmatprep.subr.mxu0 0.0
  %204 = vmatpush1.msra.mxu0 %v184
  %205 = vmatprep.subr.mxu0 0.0
  %206 = vmatpush1.msra.mxu0 %v185
  %207 = vmatprep.subr.mxu0 0.0
  %208 = vmatpush1.msra.mxu0 %v186
  %209 = vmatprep.subr.mxu0 0.0
  %210 = vmatpush1.msra.mxu0 %v187
  %211 = vmatprep.subr.mxu0 0.0
  %212 = vmatpush1.msra.mxu0 %v188
  %213 = vmatprep.subr.mxu0 0.0
  %214 = vmatpush1.msra.mxu0 %v189
  %215 = vmatprep.subr.mxu0 0.0
  %216 = vmatpush1.msra.mxu0 %v190
  %217 = vmatprep.subr.mxu0 0.0
  %218 = vmatpush1.msra.mxu0 %v191
  %219 = vmatprep.subr.mxu0 0.0
  %220 = vmatpush1.msra.mxu0 %v192
  %221 = vmatprep.subr.mxu0 0.0
  %222 = vmatpush1.msra.mxu0 %v193
  %223 = vmatprep.subr.mxu0 0.0
  %224 = vmatpush1.msra.mxu0 %v194
  %225 = vmatprep.subr.mxu0 0.0
  %226 = vmatpush1.msra.mxu0 %v195
  %227 = vmatprep.subr.mxu0 0.0
  %228 = vmatpush1.msra.mxu0 %v196
  %229 = vmatprep.subr.mxu0 0.0
  %230 = vmatpush1.msra.mxu0 0.0
  %231 = vmatprep.subr.mxu0 0.0
  %232 = vmatpush1.msra.mxu0 0.0
  %233 = vmatprep.subr.mxu0 0.0
  %234 = vmatpush1.msra.mxu0 0.0
  %235 = vmatprep.subr.mxu0 0.0
  %236 = vmatpush1.msra.mxu0 0.0
  %237 = vmatprep.subr.mxu0 0.0
  %238 = vmatpush1.msra.mxu0 0.0
  %239 = vmatprep.subr.mxu0 0.0
  %240 = vmatpush1.msra.mxu0 0.0
  %241 = vmatprep.subr.mxu0 0.0
  %242 = vmatpush1.msra.mxu0 0.0
  %243 = vmatprep.subr.mxu0 0.0
  %244 = vmatpush1.msra.mxu0 0.0
  %245 = vmatprep.subr.mxu0 0.0
  %246 = vmatpush1.msra.mxu0 0.0
  %247 = vmatprep.subr.mxu0 0.0
  %248 = vmatpush1.msra.mxu0 0.0
  %249 = vmatprep.subr.mxu0 0.0
  %250 = vmatpush1.msra.mxu0 0.0
  %251 = vmatprep.subr.mxu0 0.0
  %252 = vmatpush1.msra.mxu0 0.0
  %253 = vmatprep.subr.mxu0 0.0
  %254 = vmatpush1.msra.mxu0 0.0
  %255 = vmatprep.subr.mxu0 0.0
  %256 = vmatpush1.msra.mxu0 0.0
  %257 = vmatprep.subr.mxu0 0.0
  %258 = vmatpush1.msra.mxu0 0.0
  %259 = vmatprep.subr.mxu0 0.0
  %260 = vmatpush1.msra.mxu0 0.0
  %261 = vmatprep.mubr.f32.mxu0 0.0
  %262 = vmatmul.mubr.f32.gmra.mrb[0].mxu0 %v177
  %v263 = vpop.f32.mrb[0].mxu0
  %v264 = vadd.f32 0.0, %v263
  %v265 = vpop.f32.mrb[0].mxu0
  %266 = vmatprep.mubr.f32.mxu0 0.0
  %267 = vmatmul.mubr.f32.gmra.mrb[0].mxu0 %v178
  %v268 = vpop.f32.mrb[0].mxu0
  %v269 = vadd.f32 0.0, %v268
  %v270 = vpop.f32.mrb[0].mxu0
  %271 = vdwg.mxu0
  %v272 = vadd.f32 %v179, %v264
  %v273 = vadd.f32 %v180, %v269
  %274 = vst.msk [vmem:[#allocation3] sm:$0xff] %vm95, %v272
  %275 = vst.msk [vmem:[#allocation3 + $0x8] sm:$0xff] %vm95, %v273
  // Predicated region
  $region34: #{gpt_forward.10} parent=0 // pred_check
    %p276 = pneg %p26
  $region35: #{gpt_forward.10} parent=0 // pred_check_branch
    %278 = sbr.rel (%p276) target = $region37
  $region36: #{gpt_forward.10} parent=0 // pred_region
    %v279 = vld [vmem:[%s0] sm:$0xff]
    %v280 = vld [vmem:[%s0 + $0x8] sm:$0xff]
    %v281 = vld [vmem:[#allocation3] sm:$0xff]
    %v282 = vld [vmem:[#allocation3 + $0x8] sm:$0xff]
    %v283 = vadd.f32 %v279, %v281
    %v284 = vadd.f32 %v280, %v282
    %v285 = vld [vmem:[%s6] sm:$0x1]
    %v287 = vlaneseq
    %v288 = vshrl.u32 %v287, 7
    %v289 = vsub.s32 0, %v288
    %v290 = vrot.slane %v285, %v289
    %v292 = vadd.f32 %v283, %v290
    %v293 = vadd.f32 %v284, %v290
    %294 = vst.msk [vmem:[%s7] sm:$0xff] %vm95, %v292
    %295 = vst.msk [vmem:[%s7 + $0x8] sm:$0xff] %vm95, %v293
  $region37: #{gpt_forward.10} parent=0 // pred_fallthru
    _
  // Predicated region
  $region38: #{gpt_forward.10} parent=0 // pred_check
    _
  $region39: #{gpt_forward.10} parent=0 // pred_check_branch
    %297 = sbr.rel (0) target = $region41
  $region40: #{gpt_forward.10} parent=0 // pred_region
    _
  $region41: #{gpt_forward.10} parent=0 // pred_fallthru
    _
  // Predicated region
  $region42: #{gpt_forward.10} parent=0 // pred_check
    _
  $region43: #{gpt_forward.10} parent=0 // pred_check_branch
    %299 = sbr.rel (0) target = $region45
  $region44: #{gpt_forward.10} parent=0 // pred_region
    _
  $region45: #{gpt_forward.10} parent=0 // pred_fallthru
    _

// kernel: gpt_forward.9
$region0: #{gpt_forward.9}
  #allocation0 [shape = 'u32[]', space=smem, size = 0x4, offset = 0x4, fixed_abs, tag = 'smem constant byte address 0x4 - core index']
  #allocation1 [shape = 'u32[144,128]{1,0:T(1,128)}', space=vmem, size = 0x12000, scoped, tag = 'internal scratch']
  #allocation2 [shape = 'f32[8,1]{1,0:T(8,128)}', space=vmem, size = 0x1000, scoped, tag = 'scratch operand']
  #allocation3 [shape = 'f32[8,1]{1,0:T(8,128)}', space=vmem, size = 0x1000, scoped, tag = 'scratch operand']
  #allocation4 [shape = 'f32[8,8]{1,0:T(8,128)}', space=vmem, size = 0x1000, scoped, tag = 'scratch operand']
  #allocation5 [shape = 'f32[8,32]{1,0:T(8,128)}', space=vmem, size = 0x1000, scoped, tag = 'scratch operand']
  %s0 = inlined_call_operand.vmem [shape: f32[2,8,32], index: 0, kind: input, shape index: {}, may-alias: {0,6}]
  %s1 = inlined_call_operand.vmem [shape: f32[8,8,8], index: 1, kind: input, shape index: {}]
  %s2 = inlined_call_operand.vmem [shape: f32[8,8,8], index: 2, kind: input, shape index: {}]
  %s3 = inlined_call_operand.vmem [shape: f32[8,8,8], index: 3, kind: input, shape index: {}]
  %s4 = inlined_call_operand.vmem [shape: f32[4,8,32], index: 4, kind: input, shape index: {}]
  %s5 = inlined_call_operand.vmem [shape: f32[1,32], index: 5, kind: input, shape index: {}]
  %s6 = inlined_call_operand.vmem [shape: f32[2,8,32], index: 6, kind: output, shape index: {}, may-alias: {0,6}]
  %s7 = sld [smem:[#allocation0]]
  $region81: #{gpt_forward.9} parent=0
    _
  %s9 = ssub.s32 1, %s7
  %s10 = scalar_select 0, %s9, %s7
  loop: start=0, step=1, limit=10
  $region2: #{gpt_forward.9} parent=0 // loop_pre_header
    _
  $region3: #{gpt_forward.9} parent=0 // loop_header
    %s12 = sphi 0, %s16
    %p13 = scmp.ge.s32.totalorder %s12, 10
    %s19 = sphi 0, %s45
    %s20 = sphi 0, %s41
    %s21 = sphi 0, %s37
    %s22 = sphi 0, %s33
    %s23 = sphi 0, %s19
    %s24 = sphi 0, %s20
    %s25 = sphi 0, %s21
    %s26 = sphi 0, %s22
    %s27 = sphi 0, %s23
    %s28 = sphi 0, %s24
    %s29 = sphi 0, %s25
    %s30 = sphi 0, %s26
    %s50 = sphi 0, %s52
    %s53 = sphi 0, %s50
    %s54 = sphi 0, %s53
    %s70 = sphi 0, %s54
    %s82 = sphi 0, %s84
    %s85 = sphi 0, %s82
    %s86 = sphi 0, %s85
    %s102 = sphi 0, %s86
    %s118 = sphi 0, %s120
    %s121 = sphi 0, %s118
    %s122 = sphi 0, %s121
    %s138 = sphi 0, %s122
    %s154 = sphi 0, %s156
    %s157 = sphi 0, %s154
    %s158 = sphi 0, %s157
    %s174 = sphi 0, %s158
    %s180 = sphi 0, %s182
    %s183 = sphi 0, %s180
    %s184 = sphi 0, %s183
    %s200 = sphi 0, %s184
    %s204 = sphi 0, %s204
    %s206 = sphi 0, %s204
    %s207 = sphi 0, %s206
    %s221 = sphi 0, %s207
    %s229 = sphi 0, %s231
    %s232 = sphi 0, %s229
    %s233 = sphi 0, %s232
    %s249 = sphi 0, %s233
  $region4: #{gpt_forward.9} parent=0 // loop_header_branch
    %15 = sbr.rel (%p13) target = $region8
  $region5: #{gpt_forward.9} parent=0 // loop_body
    %s17 = ssub.s32 %s12, 1
    %s18 = ssub.s32 %s12, 2
    %s31 = sadd.s32 1, %s22
    %p32 = scmp.ge.s32.totalorder %s31, 1
    %s33 = scalar_select %p32, 0, %s31
    %s34 = sadd.s32 1, %s21
    %s35 = scalar_select %p32, %s34, %s21
    %p36 = scmp.ge.s32.totalorder %s35, 4
    %s37 = scalar_select %p36, 0, %s35
    %s38 = sadd.s32 1, %s20
    %s39 = scalar_select %p36, %s38, %s20
    %p40 = scmp.ge.s32.totalorder %s39, 1
    %s41 = scalar_select %p40, 0, %s39
    %s42 = sadd.s32 1, %s19
    %s43 = scalar_select %p40, %s42, %s19
    %p44 = scmp.ge.s32.totalorder %s43, 2
    %s45 = scalar_select %p44, 0, %s43
    %s46 = ssub.s32 %s19, %s45
    %s47 = ssub.s32 %s20, %s41
    %s48 = sor.u32 %s46, %s47
    %p49 = scmp.eq.s32.totalorder %s48, 0
    %s51 = sadd.s32 %s50, 1
    %s52 = scalar_select %p49, %s50, %s51
    %p55 = pneg %p49
    %p56 = scmp.eq.s32.totalorder %s12, 7
    %p57 = por %p55, %p56
    %p58 = scmp.ne.s32.totalorder %s50, %s53
    %p59 = scmp.eq.s32.totalorder %s12, 0
    %p60 = por %p58, %p59
    %p61 = scmp.ne.s32.totalorder %s50, %s53
    %p62 = scmp.eq.s32.totalorder %s17, 7
    %p63 = por %p61, %p62
    %p64 = scmp.ne.s32.totalorder %s53, %s54
    %p65 = scmp.eq.s32.totalorder %s17, 0
    %p66 = por %p64, %p65
    %p67 = scmp.ne.s32.totalorder %s53, %s54
    %p68 = scmp.eq.s32.totalorder %s18, 7
    %p69 = por %p67, %p68
    %p71 = scmp.ne.s32.totalorder %s54, %s70
    %p72 = scmp.eq.s32.totalorder %s18, 0
    %p73 = por %p71, %p72
    %s74 = smul.u32 %s19, 4
    %s75 = sadd.s32 %s74, %s21
    %s76 = smul.u32 %s45, 4
    %s77 = sadd.s32 %s76, %s37
    %s78 = ssub.s32 %s75, %s77
    %s79 = ssub.s32 %s20, %s41
    %s80 = sor.u32 %s78, %s79
    %p81 = scmp.eq.s32.totalorder %s80, 0
    %s83 = sadd.s32 %s82, 1
    %s84 = scalar_select %p81, %s82, %s83
    %p87 = pneg %p81
    %p88 = scmp.eq.s32.totalorder %s12, 7
    %p89 = por %p87, %p88
    %p90 = scmp.ne.s32.totalorder %s82, %s85
    %p91 = scmp.eq.s32.totalorder %s12, 0
    %p92 = por %p90, %p91
    %p93 = scmp.ne.s32.totalorder %s82, %s85
    %p94 = scmp.eq.s32.totalorder %s17, 7
    %p95 = por %p93, %p94
    %p96 = scmp.ne.s32.totalorder %s85, %s86
    %p97 = scmp.eq.s32.totalorder %s17, 0
    %p98 = por %p96, %p97
    %p99 = scmp.ne.s32.totalorder %s85, %s86
    %p100 = scmp.eq.s32.totalorder %s18, 7
    %p101 = por %p99, %p100
    %p103 = scmp.ne.s32.totalorder %s86, %s102
    %p104 = scmp.eq.s32.totalorder %s18, 0
    %p105 = por %p103, %p104
    %s106 = smul.u32 %s19, 4
    %s107 = sadd.s32 %s106, %s21
    %p108 = scmp.lt.s32.totalorder %s22, %s20
    %s109 = scalar_select %p108, %s22, %s20
    %s110 = smul.u32 %s45, 4
    %s111 = sadd.s32 %s110, %s37
    %p112 = scmp.lt.s32.totalorder %s33, %s41
    %s113 = scalar_select %p112, %s33, %s41
    %s114 = ssub.s32 %s107, %s111
    %s115 = ssub.s32 %s109, %s113
    %s116 = sor.u32 %s114, %s115
    %p117 = scmp.eq.s32.totalorder %s116, 0
    %s119 = sadd.s32 %s118, 1
    %s120 = scalar_select %p117, %s118, %s119
    %p123 = pneg %p117
    %p124 = scmp.eq.s32.totalorder %s12, 7
    %p125 = por %p123, %p124
    %p126 = scmp.ne.s32.totalorder %s118, %s121
    %p127 = scmp.eq.s32.totalorder %s12, 0
    %p128 = por %p126, %p127
    %p129 = scmp.ne.s32.totalorder %s118, %s121
    %p130 = scmp.eq.s32.totalorder %s17, 7
    %p131 = por %p129, %p130
    %p132 = scmp.ne.s32.totalorder %s121, %s122
    %p133 = scmp.eq.s32.totalorder %s17, 0
    %p134 = por %p132, %p133
    %p135 = scmp.ne.s32.totalorder %s121, %s122
    %p136 = scmp.eq.s32.totalorder %s18, 7
    %p137 = por %p135, %p136
    %p139 = scmp.ne.s32.totalorder %s122, %s138
    %p140 = scmp.eq.s32.totalorder %s18, 0
    %p141 = por %p139, %p140
    %s142 = smul.u32 %s19, 4
    %s143 = sadd.s32 %s142, %s21
    %p144 = scmp.lt.s32.totalorder %s22, %s20
    %s145 = scalar_select %p144, %s22, %s20
    %s146 = smul.u32 %s45, 4
    %s147 = sadd.s32 %s146, %s37
    %p148 = scmp.lt.s32.totalorder %s33, %s41
    %s149 = scalar_select %p148, %s33, %s41
    %s150 = ssub.s32 %s143, %s147
    %s151 = ssub.s32 %s145, %s149
    %s152 = sor.u32 %s150, %s151
    %p153 = scmp.eq.s32.totalorder %s152, 0
    %s155 = sadd.s32 %s154, 1
    %s156 = scalar_select %p153, %s154, %s155
    %p159 = pneg %p153
    %p160 = scmp.eq.s32.totalorder %s12, 7
    %p161 = por %p159, %p160
    %p162 = scmp.ne.s32.totalorder %s154, %s157
    %p163 = scmp.eq.s32.totalorder %s12, 0
    %p164 = por %p162, %p163
    %p165 = scmp.ne.s32.totalorder %s154, %s157
    %p166 = scmp.eq.s32.totalorder %s17, 7
    %p167 = por %p165, %p166
    %p168 = scmp.ne.s32.totalorder %s157, %s158
    %p169 = scmp.eq.s32.totalorder %s17, 0
    %p170 = por %p168, %p169
    %p171 = scmp.ne.s32.totalorder %s157, %s158
    %p172 = scmp.eq.s32.totalorder %s18, 7
    %p173 = por %p171, %p172
    %p175 = scmp.ne.s32.totalorder %s158, %s174
    %p176 = scmp.eq.s32.totalorder %s18, 0
    %p177 = por %p175, %p176
    %s178 = ssub.s32 %s21, %s37
    %p179 = scmp.eq.s32.totalorder %s178, 0
    %s181 = sadd.s32 %s180, 1
    %s182 = scalar_select %p179, %s180, %s181
    %p185 = pneg %p179
    %p186 = scmp.eq.s32.totalorder %s12, 7
    %p187 = por %p185, %p186
    %p188 = scmp.ne.s32.totalorder %s180, %s183
    %p189 = scmp.eq.s32.totalorder %s12, 0
    %p190 = por %p188, %p189
    %p191 = scmp.ne.s32.totalorder %s180, %s183
    %p192 = scmp.eq.s32.totalorder %s17, 7
    %p193 = por %p191, %p192
    %p194 = scmp.ne.s32.totalorder %s183, %s184
    %p195 = scmp.eq.s32.totalorder %s17, 0
    %p196 = por %p194, %p195
    %p197 = scmp.ne.s32.totalorder %s183, %s184
    %p198 = scmp.eq.s32.totalorder %s18, 7
    %p199 = por %p197, %p198
    %p201 = scmp.ne.s32.totalorder %s184, %s200
    %p202 = scmp.eq.s32.totalorder %s18, 0
    %p203 = por %p201, %p202
    %s205 = sadd.s32 %s204, 1
    %p208 = scmp.eq.s32.totalorder %s12, 7
    %p209 = scmp.ne.s32.totalorder %s204, %s206
    %p210 = scmp.eq.s32.totalorder %s12, 0
    %p211 = por %p209, %p210
    %p212 = scmp.ne.s32.totalorder %s204, %s206
    %p213 = scmp.eq.s32.totalorder %s17, 7
    %p214 = por %p212, %p213
    %p215 = scmp.ne.s32.totalorder %s206, %s207
    %p216 = scmp.eq.s32.totalorder %s17, 0
    %p217 = por %p215, %p216
    %p218 = scmp.ne.s32.totalorder %s206, %s207
    %p219 = scmp.eq.s32.totalorder %s18, 7
    %p220 = por %p218, %p219
    %p222 = scmp.ne.s32.totalorder %s207, %s221
    %p223 = scmp.eq.s32.totalorder %s18, 0
    %p224 = por %p222, %p223
    %s225 = ssub.s32 %s19, %s45
    %s226 = ssub.s32 %s20, %s41
    %s227 = sor.u32 %s225, %s226
    %p228 = scmp.eq.s32.totalorder %s227, 0
    %s230 = sadd.s32 %s229, 1
    %s231 = scalar_select %p228, %s229, %s230
    %p234 = pneg %p228
    %p235 = scmp.eq.s32.totalorder %s12, 7
    %p236 = por %p234, %p235
    %p237 = scmp.ne.s32.totalorder %s229, %s232
    %p238 = scmp.eq.s32.totalorder %s12, 0
    %p239 = por %p237, %p238
    %p240 = scmp.ne.s32.totalorder %s229, %s232
    %p241 = scmp.eq.s32.totalorder %s17, 7
    %p242 = por %p240, %p241
    %p243 = scmp.ne.s32.totalorder %s232, %s233
    %p244 = scmp.eq.s32.totalorder %s17, 0
    %p245 = por %p243, %p244
    %p246 = scmp.ne.s32.totalorder %s232, %s233
    %p247 = scmp.eq.s32.totalorder %s18, 7
    %p248 = por %p246, %p247
    %p250 = scmp.ne.s32.totalorder %s233, %s249
    %p251 = scmp.eq.s32.totalorder %s18, 0
    %p252 = por %p250, %p251
    %p253 = scmp.le.s32.totalorder 1, %s12
    %p254 = scmp.lt.s32.totalorder %s12, 9
    %p255 = pnand %p253, %p254
    %p256 = pneg %p255
    // Predicated region
    $region9: #{gpt_forward.9} parent=5 // pred_check
      _
    $region10: #{gpt_forward.9} parent=5 // pred_check_branch
      %258 = sbr.rel (%p255) target = $region12
    $region11: #{gpt_forward.9} parent=5 // pred_region
      %s259 = ssub.s32 %s12, 1
      // Predicated region
      $region13: #{gpt_forward.9} parent=11 // pred_check
        %p260 = pneg %p217
      $region14: #{gpt_forward.9} parent=11 // pred_check_branch
        %262 = sbr.rel (%p260) target = $region16
      $region15: #{gpt_forward.9} parent=11 // pred_region
        _
      $region16: #{gpt_forward.9} parent=11 // pred_fallthru
        _
    $region12: #{gpt_forward.9} parent=5 // pred_fallthru
      _
    %p263 = scmp.lt.s32.totalorder %s12, 8
    // Predicated region
    $region17: #{gpt_forward.9} parent=5 // pred_check
      %p264 = pneg %p263
    $region18: #{gpt_forward.9} parent=5 // pred_check_branch
      %266 = sbr.rel (%p264) target = $region20
    $region19: #{gpt_forward.9} parent=5 // pred_region
      // Predicated region
      $region21: #{gpt_forward.9} parent=19 // pred_check
        %p267 = pneg %p60
      $region22: #{gpt_forward.9} parent=19 // pred_check_branch
        %269 = sbr.rel (%p267) target = $region24
      $region23: #{gpt_forward.9} parent=19 // pred_region
        %p270 = scmp.lt.s32.totalorder %s19, 1
        %s271 = scalar_select %p270, %s19, 1
        %p272 = scmp.lt.s32.totalorder %s20, 0
        %s273 = scalar_select %p272, %s20, 0
        %s274 = sadd.s32 %s273, %s271
        %s275 = smul.addr %s274, 8
        %s276 = scalar_lea.vmem %s0, %s275
      $region24: #{gpt_forward.9} parent=19 // pred_fallthru
        _
      // Predicated region
      $region25: #{gpt_forward.9} parent=19 // pred_check
        %p277 = pneg %p92
      $region26: #{gpt_forward.9} parent=19 // pred_check_branch
        %279 = sbr.rel (%p277) target = $region28
      $region27: #{gpt_forward.9} parent=19 // pred_region
        %s280 = smul.u32 %s19, 4
        %s281 = sadd.s32 %s280, %s21
        %p282 = scmp.lt.s32.totalorder %s281, 7
        %s283 = scalar_select %p282, %s281, 7
        %p284 = scmp.lt.s32.totalorder %s20, 0
        %s285 = scalar_select %p284, %s20, 0
        %s286 = sadd.s32 %s285, %s283
        %s287 = smul.addr %s286, 8
        %s288 = scalar_lea.vmem %s1, %s287
        %s289 = smul.u32 %s19, 4
        %s290 = sadd.s32 %s289, %s21
      $region28: #{gpt_forward.9} parent=19 // pred_fallthru
        _
      // Predicated region
      $region29: #{gpt_forward.9} parent=19 // pred_check
        %p291 = pneg %p128
      $region30: #{gpt_forward.9} parent=19 // pred_check_branch
        %293 = sbr.rel (%p291) target = $region32
      $region31: #{gpt_forward.9} parent=19 // pred_region
        %s294 = smul.u32 %s19, 4
        %s295 = sadd.s32 %s294, %s21
        %p296 = scmp.lt.s32.totalorder %s22, %s20
        %s297 = scalar_select %p296, %s22, %s20
        %p298 = scmp.lt.s32.totalorder %s295, 7
        %s299 = scalar_select %p298, %s295, 7
        %p300 = scmp.lt.s32.totalorder %s297, 0
        %s301 = scalar_select %p300, %s297, 0
        %s302 = sadd.s32 %s301, %s299
        %s303 = smul.addr %s302, 8
        %s304 = scalar_lea.vmem %s2, %s303
        %s305 = smul.u32 %s19, 4
        %s306 = sadd.s32 %s305, %s21
        %p307 = scmp.lt.s32.totalorder %s22, %s20
        %s308 = scalar_select %p307, %s22, %s20
      $region32: #{gpt_forward.9} parent=19 // pred_fallthru
        _
      // Predicated region
      $region33: #{gpt_forward.9} parent=19 // pred_check
        %p309 = pneg %p164
      $region34: #{gpt_forward.9} parent=19 // pred_check_branch
        %311 = sbr.rel (%p309) target = $region36
      $region35: #{gpt_forward.9} parent=19 // pred_region
        %s312 = smul.u32 %s19, 4
        %s313 = sadd.s32 %s312, %s21
        %p314 = scmp.lt.s32.totalorder %s22, %s20
        %s315 = scalar_select %p314, %s22, %s20
        %p316 = scmp.lt.s32.totalorder %s313, 7
        %s317 = scalar_select %p316, %s313, 7
        %p318 = scmp.lt.s32.totalorder %s315, 0
        %s319 = scalar_select %p318, %s315, 0
        %s320 = sadd.s32 %s319, %s317
        %s321 = smul.addr %s320, 8
        %s322 = scalar_lea.vmem %s3, %s321
        %s323 = smul.u32 %s19, 4
        %s324 = sadd.s32 %s323, %s21
        %p325 = scmp.lt.s32.totalorder %s22, %s20
        %s326 = scalar_select %p325, %s22, %s20
      $region36: #{gpt_forward.9} parent=19 // pred_fallthru
        _
      // Predicated region
      $region37: #{gpt_forward.9} parent=19 // pred_check
        %p327 = pneg %p190
      $region38: #{gpt_forward.9} parent=19 // pred_check_branch
        %329 = sbr.rel (%p327) target = $region40
      $region39: #{gpt_forward.9} parent=19 // pred_region
        %p330 = scmp.lt.s32.totalorder %s21, 3
        %s331 = scalar_select %p330, %s21, 3
        %s332 = smul.addr %s331, 8
        %s333 = scalar_lea.vmem %s4, %s332
      $region40: #{gpt_forward.9} parent=19 // pred_fallthru
        _
    $region20: #{gpt_forward.9} parent=5 // pred_fallthru
      _
    %p334 = scmp.le.s32.totalorder 1, %s12
    %p335 = scmp.lt.s32.totalorder %s12, 9
    %p336 = pnand %p334, %p335
    %p337 = pneg %p336
    // Predicated region
    $region41: #{gpt_forward.9} parent=5 // pred_check
      _
    $region42: #{gpt_forward.9} parent=5 // pred_check_branch
      %339 = sbr.rel (%p336) target = $region44
    $region43: #{gpt_forward.9} parent=5 // pred_region
      %s340 = ssub.s32 %s12, 1
      %p341 = scmp.lt.s32.totalorder %s23, 1
      %s342 = scalar_select %p341, %s23, 1
      %p343 = scmp.lt.s32.totalorder %s24, 0
      %s344 = scalar_select %p343, %s24, 0
      %s345 = sadd.s32 %s344, %s342
      %s346 = smul.addr %s345, 8
      %s347 = scalar_lea.vmem %s0, %s346
      %p348 = pneg %p66
      %p349 = pneg %p63
      %s350 = smul.u32 %s23, 4
      %s351 = sadd.s32 %s350, %s25
      %p352 = scmp.lt.s32.totalorder %s351, 7
      %s353 = scalar_select %p352, %s351, 7
      %p354 = scmp.lt.s32.totalorder %s24, 0
      %s355 = scalar_select %p354, %s24, 0
      %s356 = sadd.s32 %s355, %s353
      %s357 = smul.addr %s356, 8
      %s358 = scalar_lea.vmem %s1, %s357
      %p359 = pneg %p98
      %p360 = pneg %p95
      %s361 = smul.u32 %s23, 4
      %s362 = sadd.s32 %s361, %s25
      %p363 = scmp.lt.s32.totalorder %s26, %s24
      %s364 = scalar_select %p363, %s26, %s24
      %p365 = scmp.lt.s32.totalorder %s362, 7
      %s366 = scalar_select %p365, %s362, 7
      %p367 = scmp.lt.s32.totalorder %s364, 0
      %s368 = scalar_select %p367, %s364, 0
      %s369 = sadd.s32 %s368, %s366
      %s370 = smul.addr %s369, 8
      %s371 = scalar_lea.vmem %s2, %s370
      %p372 = pneg %p134
      %p373 = pneg %p131
      %s374 = smul.u32 %s23, 4
      %s375 = sadd.s32 %s374, %s25
      %p376 = scmp.lt.s32.totalorder %s26, %s24
      %s377 = scalar_select %p376, %s26, %s24
      %p378 = scmp.lt.s32.totalorder %s375, 7
      %s379 = scalar_select %p378, %s375, 7
      %p380 = scmp.lt.s32.totalorder %s377, 0
      %s381 = scalar_select %p380, %s377, 0
      %s382 = sadd.s32 %s381, %s379
      %s383 = smul.addr %s382, 8
      %s384 = scalar_lea.vmem %s3, %s383
      %p385 = pneg %p170
      %p386 = pneg %p167
      %p387 = scmp.lt.s32.totalorder %s25, 3
      %s388 = scalar_select %p387, %s25, 3
      %s389 = smul.addr %s388, 8
      %s390 = scalar_lea.vmem %s4, %s389
      %p391 = pneg %p196
      %p392 = pneg %p193
      %p393 = pneg %p217
      %p394 = pneg %p214
      %p395 = pneg %p245
      %p396 = pneg %p242
      %p397 = scmp.lt.s32.totalorder %s23, 1
      %s398 = scalar_select %p397, %s23, 1
      %p399 = scmp.lt.s32.totalorder %s24, 0
      %s400 = scalar_select %p399, %s24, 0
      %s401 = sadd.s32 %s400, %s398
      %s402 = smul.addr %s401, 8
      %s403 = scalar_lea.vmem %s6, %s402
      %p404 = scmp.lt.s32.totalorder %s23, 1
      %s405 = scalar_select %p404, %s23, 1
      %p406 = scmp.lt.s32.totalorder %s24, 0
      %s407 = scalar_select %p406, %s24, 0
      %s408 = sadd.s32 %s407, %s405
      %s409 = smul.addr %s408, 8
      %s410 = scalar_lea.vmem %s0, %s409
      %s411 = smul.u32 %s23, 4
      %s412 = sadd.s32 %s411, %s25
      %p413 = scmp.lt.s32.totalorder %s412, 7
      %s414 = scalar_select %p413, %s412, 7
      %p415 = scmp.lt.s32.totalorder %s24, 0
      %s416 = scalar_select %p415, %s24, 0
      %s417 = sadd.s32 %s416, %s414
      %s418 = smul.addr %s417, 8
      %s419 = scalar_lea.vmem %s1, %s418
      %s420 = smul.u32 %s23, 4
      %s421 = sadd.s32 %s420, %s25
      %s422 = smul.u32 %s23, 4
      %s423 = sadd.s32 %s422, %s25
      %p424 = scmp.lt.s32.totalorder %s26, %s24
      %s425 = scalar_select %p424, %s26, %s24
      %p426 = scmp.lt.s32.totalorder %s423, 7
      %s427 = scalar_select %p426, %s423, 7
      %p428 = scmp.lt.s32.totalorder %s425, 0
      %s429 = scalar_select %p428, %s425, 0
      %s430 = sadd.s32 %s429, %s427
      %s431 = smul.addr %s430, 8
      %s432 = scalar_lea.vmem %s2, %s431
      %s433 = smul.u32 %s23, 4
      %s434 = sadd.s32 %s433, %s25
      %p435 = scmp.lt.s32.totalorder %s26, %s24
      %s436 = scalar_select %p435, %s26, %s24
      %s437 = smul.u32 %s23, 4
      %s438 = sadd.s32 %s437, %s25
      %p439 = scmp.lt.s32.totalorder %s26, %s24
      %s440 = scalar_select %p439, %s26, %s24
      %p441 = scmp.lt.s32.totalorder %s438, 7
      %s442 = scalar_select %p441, %s438, 7
      %p443 = scmp.lt.s32.totalorder %s440, 0
      %s444 = scalar_select %p443, %s440, 0
      %s445 = sadd.s32 %s444, %s442
      %s446 = smul.addr %s445, 8
      %s447 = scalar_lea.vmem %s3, %s446
      %s448 = smul.u32 %s23, 4
      %s449 = sadd.s32 %s448, %s25
      %p450 = scmp.lt.s32.totalorder %s26, %s24
      %s451 = scalar_select %p450, %s26, %s24
      %p452 = scmp.lt.s32.totalorder %s25, 3
      %s453 = scalar_select %p452, %s25, 3
      %s454 = smul.addr %s453, 8
      %s455 = scalar_lea.vmem %s4, %s454
      %p456 = scmp.lt.s32.totalorder %s23, 1
      %s457 = scalar_select %p456, %s23, 1
      %p458 = scmp.lt.s32.totalorder %s24, 0
      %s459 = scalar_select %p458, %s24, 0
      %s460 = sadd.s32 %s459, %s457
      %s461 = smul.addr %s460, 8
      %s462 = scalar_lea.vmem %s6, %s461
      %p463 = scmp.eq.s32.totalorder %s26, 0
      // Predicated region
      $region45: #{gpt_forward.9} parent=43 // pred_check
        %p464 = pneg %p463
      $region46: #{gpt_forward.9} parent=43 // pred_check_branch
        %466 = sbr.rel (%p464) target = $region48
      $region47: #{gpt_forward.9} parent=43 // pred_region
        %vm467 = vcmask 7168
        %468 = vst.msk [vmem:[#allocation2] sm:$0xff] %vm467, -1e+30
        %469 = vst.msk [vmem:[#allocation3] sm:$0xff] %vm467, 0.0
        %vm470 = vcmask 64512
        %471 = vst.msk [vmem:[#allocation4] sm:$0xff] %vm470, 0.0
      $region48: #{gpt_forward.9} parent=43 // pred_fallthru
        _
      %p472 = scmp.eq.s32.totalorder %s25, 0
      %p473 = pnand %p463, %p472
      %p474 = pneg %p473
      // Predicated region
      $region49: #{gpt_forward.9} parent=43 // pred_check
        _
      $region50: #{gpt_forward.9} parent=43 // pred_check_branch
        %476 = sbr.rel (%p473) target = $region52
      $region51: #{gpt_forward.9} parent=43 // pred_region
        %vm477 = vcmask 261120
        %478 = vst.msk [vmem:[#allocation5] sm:$0xff] %vm477, 0.0
      $region52: #{gpt_forward.9} parent=43 // pred_fallthru
        _
      %p479 = scmp.lt.s32.totalorder %s26, %s24
      // Predicated region
      $region53: #{gpt_forward.9} parent=43 // pred_check
        %p480 = pneg %p479
      $region54: #{gpt_forward.9} parent=43 // pred_check_branch
        %482 = sbr.rel (%p480) target = $region56
      $region55: #{gpt_forward.9} parent=43 // pred_region
        %v483 = vld [vmem:[%s419] sm:$0xff]
        %v484 = vld [vmem:[%s432] sm:$0xff]
        %vm485 = vcmask 64512
        %v487 = vsel %vm485, %v483, 0
        %v490 = vsel %vm485, %v484, 0
        %492 = vmatprep.subr.mxu0 0.0
        %493 = vmatpush1.xpose.msra.mxu0 %v490
        %494 = vmatprep.subr.mxu0 0.0
        %495 = vmatpush1.xpose.msra.mxu0 0.0
        %496 = vmatprep.subr.mxu0 0.0
        %497 = vmatpush1.xpose.msra.mxu0 0.0
        %498 = vmatprep.subr.mxu0 0.0
        %499 = vmatpush1.xpose.msra.mxu0 0.0
        %500 = vmatprep.subr.mxu0 0.0
        %501 = vmatpush1.xpose.msra.mxu0 0.0
        %502 = vmatprep.subr.mxu0 0.0
        %503 = vmatpush1.xpose.msra.mxu0 0.0
        %504 = vmatprep.subr.mxu0 0.0
        %505 = vmatpush1.xpose.msra.mxu0 0.0
        %506 = vmatprep.subr.mxu0 0.0
        %507 = vmatpush1.xpose.msra.mxu0 0.0
        %508 = vmatprep.subr.mxu0 0.0
        %509 = vmatpush1.xpose.msra.mxu0 0.0
        %510 = vmatprep.subr.mxu0 0.0
        %511 = vmatpush1.xpose.msra.mxu0 0.0
        %512 = vmatprep.subr.mxu0 0.0
        %513 = vmatpush1.xpose.msra.mxu0 0.0
        %514 = vmatprep.subr.mxu0 0.0
        %515 = vmatpush1.xpose.msra.mxu0 0.0
        %516 = vmatprep.subr.mxu0 0.0
        %517 = vmatpush1.xpose.msra.mxu0 0.0
        %518 = vmatprep.subr.mxu0 0.0
        %519 = vmatpush1.xpose.msra.mxu0 0.0
        %520 = vmatprep.subr.mxu0 0.0
        %521 = vmatpush1.xpose.msra.mxu0 0.0
        %522 = vmatprep.subr.mxu0 0.0
        %523 = vmatpush1.xpose.msra.mxu0 0.0
        %524 = vmatprep.subr.mxu0 0.0
        %525 = vmatpush1.xpose.msra.mxu0 0.0
        %526 = vmatprep.subr.mxu0 0.0
        %527 = vmatpush1.xpose.msra.mxu0 0.0
        %528 = vmatprep.subr.mxu0 0.0
        %529 = vmatpush1.xpose.msra.mxu0 0.0
        %530 = vmatprep.subr.mxu0 0.0
        %531 = vmatpush1.xpose.msra.mxu0 0.0
        %532 = vmatprep.subr.mxu0 0.0
        %533 = vmatpush1.xpose.msra.mxu0 0.0
        %534 = vmatprep.subr.mxu0 0.0
        %535 = vmatpush1.xpose.msra.mxu0 0.0
        %536 = vmatprep.subr.mxu0 0.0
        %537 = vmatpush1.xpose.msra.mxu0 0.0
        %538 = vmatprep.subr.mxu0 0.0
        %539 = vmatpush1.xpose.msra.mxu0 0.0
        %540 = vmatprep.subr.mxu0 0.0
        %541 = vmatpush1.xpose.msra.mxu0 0.0
        %542 = vmatprep.subr.mxu0 0.0
        %543 = vmatpush1.xpose.msra.mxu0 0.0
        %544 = vmatprep.subr.mxu0 0.0
        %545 = vmatpush1.xpose.msra.mxu0 0.0
        %546 = vmatprep.subr.mxu0 0.0
        %547 = vmatpush1.xpose.msra.mxu0 0.0
        %548 = vmatprep.subr.mxu0 0.0
        %549 = vmatpush1.xpose.msra.mxu0 0.0
        %550 = vmatprep.subr.mxu0 0.0
        %551 = vmatpush1.xpose.msra.mxu0 0.0
        %552 = vmatprep.subr.mxu0 0.0
        %553 = vmatpush1.xpose.msra.mxu0 0.0
        %554 = vmatprep.subr.mxu0 0.0
        %555 = vmatpush1.xpose.msra.mxu0 0.0
        %556 = vmatprep.mubr.f32.mxu0 0.0
        %557 = vmatmul.mubr.f32.gmra.mrb[0].mxu0 %v487
        %v558 = vpop.f32.mrb[0].mxu0
        %v559 = vadd.f32 0.0, %v558
        %v560 = vpop.f32.mrb[0].mxu0
        %561 = vdwg.mxu0
        %v562 = vld [vmem:[#allocation2] sm:$0xff]
        %v563 = vsel %vm485, %v559, -inf
        %564 = vmax.xlane.f32.xlu0 %v563
        %v565 = vpop.xlane.xlu0 %564
        %v566 = vmax.f32 %v562, %v565
        %v567 = vsub.f32 %v562, %v566
        %v568 = vmul.f32 %v567, 1.442695
        %v569 = vpow.pop %v568
        %571 = vset.pattern.permute.xlu0 0
        %572 = vperm.xlu0 %571, %v566
        %v573 = vpop.permute.xlu0 %572
        %v575 = vsub.f32 %v559, %v573
        %v576 = vmul.f32 %v575, 1.442695
        %v577 = vpow.pop %v576
        %v578 = vld [vmem:[#allocation3] sm:$0xff]
        %v579 = vmul.f32 %v569, %v578
        %v580 = vsel %vm485, %v577, 0.0
        %581 = vadd.xlane.f32.xlu0 %v580
        %v582 = vpop.xlane.xlu0 %581
        %v583 = vadd.f32 %v579, %v582
        %vm584 = vcmask 7168
        %585 = vst.msk [vmem:[#allocation3] sm:$0xff] %vm584, %v583
        %v586 = vld [vmem:[#allocation4] sm:$0xff]
        %588 = vset.pattern.permute.xlu0 0
        %589 = vperm.xlu0 %588, %v569
        %v590 = vpop.permute.xlu0 %589
        %v592 = vmul.f32 %v590, %v586
        %v593 = vld [vmem:[%s447] sm:$0xff]
        %v595 = vsel %vm485, %v577, 0
        %597 = vmatprep.subr.mxu0 0.0
        %598 = vmatpush1.msra.mxu0 %v593
        %599 = vmatprep.subr.mxu0 0.0
        %600 = vmatpush1.msra.mxu0 0.0
        %601 = vmatprep.subr.mxu0 0.0
        %602 = vmatpush1.msra.mxu0 0.0
        %603 = vmatprep.subr.mxu0 0.0
        %604 = vmatpush1.msra.mxu0 0.0
        %605 = vmatprep.subr.mxu0 0.0
        %606 = vmatpush1.msra.mxu0 0.0
        %607 = vmatprep.subr.mxu0 0.0
        %608 = vmatpush1.msra.mxu0 0.0
        %609 = vmatprep.subr.mxu0 0.0
        %610 = vmatpush1.msra.mxu0 0.0
        %611 = vmatprep.subr.mxu0 0.0
        %612 = vmatpush1.msra.mxu0 0.0
        %613 = vmatprep.subr.mxu0 0.0
        %614 = vmatpush1.msra.mxu0 0.0
        %615 = vmatprep.subr.mxu0 0.0
        %616 = vmatpush1.msra.mxu0 0.0
        %617 = vmatprep.subr.mxu0 0.0
        %618 = vmatpush1.msra.mxu0 0.0
        %619 = vmatprep.subr.mxu0 0.0
        %620 = vmatpush1.msra.mxu0 0.0
        %621 = vmatprep.subr.mxu0 0.0
        %622 = vmatpush1.msra.mxu0 0.0
        %623 = vmatprep.subr.mxu0 0.0
        %624 = vmatpush1.msra.mxu0 0.0
        %625 = vmatprep.subr.mxu0 0.0
        %626 = vmatpush1.msra.mxu0 0.0
        %627 = vmatprep.subr.mxu0 0.0
        %628 = vmatpush1.msra.mxu0 0.0
        %629 = vmatprep.subr.mxu0 0.0
        %630 = vmatpush1.msra.mxu0 0.0
        %631 = vmatprep.subr.mxu0 0.0
        %632 = vmatpush1.msra.mxu0 0.0
        %633 = vmatprep.subr.mxu0 0.0
        %634 = vmatpush1.msra.mxu0 0.0
        %635 = vmatprep.subr.mxu0 0.0
        %636 = vmatpush1.msra.mxu0 0.0
        %637 = vmatprep.subr.mxu0 0.0
        %638 = vmatpush1.msra.mxu0 0.0
        %639 = vmatprep.subr.mxu0 0.0
        %640 = vmatpush1.msra.mxu0 0.0
        %641 = vmatprep.subr.mxu0 0.0
        %642 = vmatpush1.msra.mxu0 0.0
        %643 = vmatprep.subr.mxu0 0.0
        %644 = vmatpush1.msra.mxu0 0.0
        %645 = vmatprep.subr.mxu0 0.0
        %646 = vmatpush1.msra.mxu0 0.0
        %647 = vmatprep.subr.mxu0 0.0
        %648 = vmatpush1.msra.mxu0 0.0
        %649 = vmatprep.subr.mxu0 0.0
        %650 = vmatpush1.msra.mxu0 0.0
        %651 = vmatprep.subr.mxu0 0.0
        %652 = vmatpush1.msra.mxu0 0.0
        %653 = vmatprep.subr.mxu0 0.0
        %654 = vmatpush1.msra.mxu0 0.0
        %655 = vmatprep.subr.mxu0 0.0
        %656 = vmatpush1.msra.mxu0 0.0
        %657 = vmatprep.subr.mxu0 0.0
        %658 = vmatpush1.msra.mxu0 0.0
        %659 = vmatprep.subr.mxu0 0.0
        %660 = vmatpush1.msra.mxu0 0.0
        %661 = vmatprep.mubr.f32.mxu0 0.0
        %662 = vmatmul.mubr.f32.gmra.mrb[0].mxu0 %v595
        %v663 = vpop.f32.mrb[0].mxu0
        %v664 = vadd.f32 0.0, %v663
        %v665 = vpop.f32.mrb[0].mxu0
        %666 = vdwg.mxu0
        %v667 = vadd.f32 %v592, %v664
        %668 = vst.msk [vmem:[#allocation4] sm:$0xff] %vm485, %v667
        %669 = vst.msk [vmem:[#allocation2] sm:$0xff] %vm584, %v566
      $region56: #{gpt_forward.9} parent=43 // pred_fallthru
        _
      %p670 = scmp.eq.s32.totalorder %s26, %s24
      // Predicated region
      $region57: #{gpt_forward.9} parent=43 // pred_check
        %p671 = pneg %p670
      $region58: #{gpt_forward.9} parent=43 // pred_check_branch
        %673 = sbr.rel (%p671) target = $region60
      $region59: #{gpt_forward.9} parent=43 // pred_region
        %v674 = vld [vmem:[%s419] sm:$0xff]
        %v675 = vld [vmem:[%s432] sm:$0xff]
        %v676 = vlaneseq
        %v677 = vshrl.u32 %v676, 7
        %v678 = vlaneseq
        %v679 = vand.u32 %v678, 127
        %vm680 = vcmp.le.s32.totalorder %v679, %v677
        %v681 = vsel %vm680, 0.0, -1e+30
        %vm682 = vcmask 64512
        %v684 = vsel %vm682, %v674, 0
        %v687 = vsel %vm682, %v675, 0
        %689 = vmatprep.subr.mxu0 0.0
        %690 = vmatpush1.xpose.msra.mxu0 %v687
        %691 = vmatprep.subr.mxu0 0.0
        %692 = vmatpush1.xpose.msra.mxu0 0.0
        %693 = vmatprep.subr.mxu0 0.0
        %694 = vmatpush1.xpose.msra.mxu0 0.0
        %695 = vmatprep.subr.mxu0 0.0
        %696 = vmatpush1.xpose.msra.mxu0 0.0
        %697 = vmatprep.subr.mxu0 0.0
        %698 = vmatpush1.xpose.msra.mxu0 0.0
        %699 = vmatprep.subr.mxu0 0.0
        %700 = vmatpush1.xpose.msra.mxu0 0.0
        %701 = vmatprep.subr.mxu0 0.0
        %702 = vmatpush1.xpose.msra.mxu0 0.0
        %703 = vmatprep.subr.mxu0 0.0
        %704 = vmatpush1.xpose.msra.mxu0 0.0
        %705 = vmatprep.subr.mxu0 0.0
        %706 = vmatpush1.xpose.msra.mxu0 0.0
        %707 = vmatprep.subr.mxu0 0.0
        %708 = vmatpush1.xpose.msra.mxu0 0.0
        %709 = vmatprep.subr.mxu0 0.0
        %710 = vmatpush1.xpose.msra.mxu0 0.0
        %711 = vmatprep.subr.mxu0 0.0
        %712 = vmatpush1.xpose.msra.mxu0 0.0
        %713 = vmatprep.subr.mxu0 0.0
        %714 = vmatpush1.xpose.msra.mxu0 0.0
        %715 = vmatprep.subr.mxu0 0.0
        %716 = vmatpush1.xpose.msra.mxu0 0.0
        %717 = vmatprep.subr.mxu0 0.0
        %718 = vmatpush1.xpose.msra.mxu0 0.0
        %719 = vmatprep.subr.mxu0 0.0
        %720 = vmatpush1.xpose.msra.mxu0 0.0
        %721 = vmatprep.subr.mxu0 0.0
        %722 = vmatpush1.xpose.msra.mxu0 0.0
        %723 = vmatprep.subr.mxu0 0.0
        %724 = vmatpush1.xpose.msra.mxu0 0.0
        %725 = vmatprep.subr.mxu0 0.0
        %726 = vmatpush1.xpose.msra.mxu0 0.0
        %727 = vmatprep.subr.mxu0 0.0
        %728 = vmatpush1.xpose.msra.mxu0 0.0
        %729 = vmatprep.subr.mxu0 0.0
        %730 = vmatpush1.xpose.msra.mxu0 0.0
        %731 = vmatprep.subr.mxu0 0.0
        %732 = vmatpush1.xpose.msra.mxu0 0.0
        %733 = vmatprep.subr.mxu0 0.0
        %734 = vmatpush1.xpose.msra.mxu0 0.0
        %735 = vmatprep.subr.mxu0 0.0
        %736 = vmatpush1.xpose.msra.mxu0 0.0
        %737 = vmatprep.subr.mxu0 0.0
        %738 = vmatpush1.xpose.msra.mxu0 0.0
        %739 = vmatprep.subr.mxu0 0.0
        %740 = vmatpush1.xpose.msra.mxu0 0.0
        %741 = vmatprep.subr.mxu0 0.0
        %742 = vmatpush1.xpose.msra.mxu0 0.0
        %743 = vmatprep.subr.mxu0 0.0
        %744 = vmatpush1.xpose.msra.mxu0 0.0
        %745 = vmatprep.subr.mxu0 0.0
        %746 = vmatpush1.xpose.msra.mxu0 0.0
        %747 = vmatprep.subr.mxu0 0.0
        %748 = vmatpush1.xpose.msra.mxu0 0.0
        %749 = vmatprep.subr.mxu0 0.0
        %750 = vmatpush1.xpose.msra.mxu0 0.0
        %751 = vmatprep.subr.mxu0 0.0
        %752 = vmatpush1.xpose.msra.mxu0 0.0
        %753 = vmatprep.mubr.f32.mxu0 0.0
        %754 = vmatmul.mubr.f32.gmra.mrb[0].mxu0 %v684
        %v755 = vpop.f32.mrb[0].mxu0
        %v756 = vadd.f32 %v681, %v755
        %v757 = vpop.f32.mrb[0].mxu0
        %758 = vdwg.mxu0
        %v759 = vld [vmem:[#allocation2] sm:$0xff]
        %v760 = vsel %vm682, %v756, -inf
        %761 = vmax.xlane.f32.xlu0 %v760
        %v762 = vpop.xlane.xlu0 %761
        %v763 = vmax.f32 %v759, %v762
        %v764 = vsub.f32 %v759, %v763
        %v765 = vmul.f32 %v764, 1.442695
        %v766 = vpow.pop %v765
        %768 = vset.pattern.permute.xlu0 0
        %769 = vperm.xlu0 %768, %v763
        %v770 = vpop.permute.xlu0 %769
        %v772 = vsub.f32 %v756, %v770
        %v773 = vmul.f32 %v772, 1.442695
        %v774 = vpow.pop %v773
        %v775 = vld [vmem:[#allocation3] sm:$0xff]
        %v776 = vmul.f32 %v766, %v775
        %v777 = vsel %vm682, %v774, 0.0
        %778 = vadd.xlane.f32.xlu0 %v777
        %v779 = vpop.xlane.xlu0 %778
        %v780 = vadd.f32 %v776, %v779
        %vm781 = vcmask 7168
        %782 = vst.msk [vmem:[#allocation3] sm:$0xff] %vm781, %v780
        %v783 = vld [vmem:[#allocation4] sm:$0xff]
        %785 = vset.pattern.permute.xlu0 0
        %786 = vperm.xlu0 %785, %v766
        %v787 = vpop.permute.xlu0 %786
        %v789 = vmul.f32 %v787, %v783
        %v790 = vld [vmem:[%s447] sm:$0xff]
        %v792 = vsel %vm682, %v774, 0
        %794 = vmatprep.subr.mxu0 0.0
        %795 = vmatpush1.msra.mxu0 %v790
        %796 = vmatprep.subr.mxu0 0.0
        %797 = vmatpush1.msra.mxu0 0.0
        %798 = vmatprep.subr.mxu0 0.0
        %799 = vmatpush1.msra.mxu0 0.0
        %800 = vmatprep.subr.mxu0 0.0
        %801 = vmatpush1.msra.mxu0 0.0
        %802 = vmatprep.subr.mxu0 0.0
        %803 = vmatpush1.msra.mxu0 0.0
        %804 = vmatprep.subr.mxu0 0.0
        %805 = vmatpush1.msra.mxu0 0.0
        %806 = vmatprep.subr.mxu0 0.0
        %807 = vmatpush1.msra.mxu0 0.0
        %808 = vmatprep.subr.mxu0 0.0
        %809 = vmatpush1.msra.mxu0 0.0
        %810 = vmatprep.subr.mxu0 0.0
        %811 = vmatpush1.msra.mxu0 0.0
        %812 = vmatprep.subr.mxu0 0.0
        %813 = vmatpush1.msra.mxu0 0.0
        %814 = vmatprep.subr.mxu0 0.0
        %815 = vmatpush1.msra.mxu0 0.0
        %816 = vmatprep.subr.mxu0 0.0
        %817 = vmatpush1.msra.mxu0 0.0
        %818 = vmatprep.subr.mxu0 0.0
        %819 = vmatpush1.msra.mxu0 0.0
        %820 = vmatprep.subr.mxu0 0.0
        %821 = vmatpush1.msra.mxu0 0.0
        %822 = vmatprep.subr.mxu0 0.0
        %823 = vmatpush1.msra.mxu0 0.0
        %824 = vmatprep.subr.mxu0 0.0
        %825 = vmatpush1.msra.mxu0 0.0
        %826 = vmatprep.subr.mxu0 0.0
        %827 = vmatpush1.msra.mxu0 0.0
        %828 = vmatprep.subr.mxu0 0.0
        %829 = vmatpush1.msra.mxu0 0.0
        %830 = vmatprep.subr.mxu0 0.0
        %831 = vmatpush1.msra.mxu0 0.0
        %832 = vmatprep.subr.mxu0 0.0
        %833 = vmatpush1.msra.mxu0 0.0
        %834 = vmatprep.subr.mxu0 0.0
        %835 = vmatpush1.msra.mxu0 0.0
        %836 = vmatprep.subr.mxu0 0.0
        %837 = vmatpush1.msra.mxu0 0.0
        %838 = vmatprep.subr.mxu0 0.0
        %839 = vmatpush1.msra.mxu0 0.0
        %840 = vmatprep.subr.mxu0 0.0
        %841 = vmatpush1.msra.mxu0 0.0
        %842 = vmatprep.subr.mxu0 0.0
        %843 = vmatpush1.msra.mxu0 0.0
        %844 = vmatprep.subr.mxu0 0.0
        %845 = vmatpush1.msra.mxu0 0.0
        %846 = vmatprep.subr.mxu0 0.0
        %847 = vmatpush1.msra.mxu0 0.0
        %848 = vmatprep.subr.mxu0 0.0
        %849 = vmatpush1.msra.mxu0 0.0
        %850 = vmatprep.subr.mxu0 0.0
        %851 = vmatpush1.msra.mxu0 0.0
        %852 = vmatprep.subr.mxu0 0.0
        %853 = vmatpush1.msra.mxu0 0.0
        %854 = vmatprep.subr.mxu0 0.0
        %855 = vmatpush1.msra.mxu0 0.0
        %856 = vmatprep.subr.mxu0 0.0
        %857 = vmatpush1.msra.mxu0 0.0
        %858 = vmatprep.mubr.f32.mxu0 0.0
        %859 = vmatmul.mubr.f32.gmra.mrb[0].mxu0 %v792
        %v860 = vpop.f32.mrb[0].mxu0
        %v861 = vadd.f32 0.0, %v860
        %v862 = vpop.f32.mrb[0].mxu0
        %863 = vdwg.mxu0
        %v864 = vadd.f32 %v789, %v861
        %865 = vst.msk [vmem:[#allocation4] sm:$0xff] %vm682, %v864
        %866 = vst.msk [vmem:[#allocation2] sm:$0xff] %vm781, %v763
      $region60: #{gpt_forward.9} parent=43 // pred_fallthru
        _
      // Predicated region
      $region61: #{gpt_forward.9} parent=43 // pred_check
        %p867 = pneg %p463
      $region62: #{gpt_forward.9} parent=43 // pred_check_branch
        %869 = sbr.rel (%p867) target = $region64
      $region63: #{gpt_forward.9} parent=43 // pred_region
        %v870 = vld [vmem:[#allocation3] sm:$0xff]
        %v871 = vrcp.pop %v870
        %v872 = vld [vmem:[#allocation4] sm:$0xff]
        %874 = vset.pattern.permute.xlu0 0
        %875 = vperm.xlu0 %874, %v871
        %v876 = vpop.permute.xlu0 %875
        %v878 = vmul.f32 %v872, %v876
        %v879 = vld [vmem:[#allocation5] sm:$0xff]
        %v880 = vld [vmem:[%s455] sm:$0xff]
        %vm881 = vcmask 64512
        %v883 = vsel %vm881, %v878, 0
        %885 = vmatprep.subr.mxu0 0.0
        %886 = vmatpush1.msra.mxu0 %v880
        %887 = vmatprep.subr.mxu0 0.0
        %888 = vmatpush1.msra.mxu0 0.0
        %889 = vmatprep.subr.mxu0 0.0
        %890 = vmatpush1.msra.mxu0 0.0
        %891 = vmatprep.subr.mxu0 0.0
        %892 = vmatpush1.msra.mxu0 0.0
        %893 = vmatprep.subr.mxu0 0.0
        %894 = vmatpush1.msra.mxu0 0.0
        %895 = vmatprep.subr.mxu0 0.0
        %896 = vmatpush1.msra.mxu0 0.0
        %897 = vmatprep.subr.mxu0 0.0
        %898 = vmatpush1.msra.mxu0 0.0
        %899 = vmatprep.subr.mxu0 0.0
        %900 = vmatpush1.msra.mxu0 0.0
        %901 = vmatprep.subr.mxu0 0.0
        %902 = vmatpush1.msra.mxu0 0.0
        %903 = vmatprep.subr.mxu0 0.0
        %904 = vmatpush1.msra.mxu0 0.0
        %905 = vmatprep.subr.mxu0 0.0
        %906 = vmatpush1.msra.mxu0 0.0
        %907 = vmatprep.subr.mxu0 0.0
        %908 = vmatpush1.msra.mxu0 0.0
        %909 = vmatprep.subr.mxu0 0.0
        %910 = vmatpush1.msra.mxu0 0.0
        %911 = vmatprep.subr.mxu0 0.0
        %912 = vmatpush1.msra.mxu0 0.0
        %913 = vmatprep.subr.mxu0 0.0
        %914 = vmatpush1.msra.mxu0 0.0
        %915 = vmatprep.subr.mxu0 0.0
        %916 = vmatpush1.msra.mxu0 0.0
        %917 = vmatprep.subr.mxu0 0.0
        %918 = vmatpush1.msra.mxu0 0.0
        %919 = vmatprep.subr.mxu0 0.0
        %920 = vmatpush1.msra.mxu0 0.0
        %921 = vmatprep.subr.mxu0 0.0
        %922 = vmatpush1.msra.mxu0 0.0
        %923 = vmatprep.subr.mxu0 0.0
        %924 = vmatpush1.msra.mxu0 0.0
        %925 = vmatprep.subr.mxu0 0.0
        %926 = vmatpush1.msra.mxu0 0.0
        %927 = vmatprep.subr.mxu0 0.0
        %928 = vmatpush1.msra.mxu0 0.0
        %929 = vmatprep.subr.mxu0 0.0
        %930 = vmatpush1.msra.mxu0 0.0
        %931 = vmatprep.subr.mxu0 0.0
        %932 = vmatpush1.msra.mxu0 0.0
        %933 = vmatprep.subr.mxu0 0.0
        %934 = vmatpush1.msra.mxu0 0.0
        %935 = vmatprep.subr.mxu0 0.0
        %936 = vmatpush1.msra.mxu0 0.0
        %937 = vmatprep.subr.mxu0 0.0
        %938 = vmatpush1.msra.mxu0 0.0
        %939 = vmatprep.subr.mxu0 0.0
        %940 = vmatpush1.msra.mxu0 0.0
        %941 = vmatprep.subr.mxu0 0.0
        %942 = vmatpush1.msra.mxu0 0.0
        %943 = vmatprep.subr.mxu0 0.0
        %944 = vmatpush1.msra.mxu0 0.0
        %945 = vmatprep.subr.mxu0 0.0
        %946 = vmatpush1.msra.mxu0 0.0
        %947 = vmatprep.subr.mxu0 0.0
        %948 = vmatpush1.msra.mxu0 0.0
        %949 = vmatprep.mubr.f32.mxu0 0.0
        %950 = vmatmul.mubr.f32.gmra.mrb[0].mxu0 %v883
        %v951 = vpop.f32.mrb[0].mxu0
        %v952 = vadd.f32 0.0, %v951
        %v953 = vpop.f32.mrb[0].mxu0
        %954 = vdwg.mxu0
        %v955 = vadd.f32 %v879, %v952
        %vm956 = vcmask 261120
        %957 = vst.msk [vmem:[#allocation5] sm:$0xff] %vm956, %v955
      $region64: #{gpt_forward.9} parent=43 // pred_fallthru
        _
      %p958 = scmp.eq.s32.totalorder %s25, 3
      %p959 = pnand %p463, %p958
      %p960 = pneg %p959
      // Predicated region
      $region65: #{gpt_forward.9} parent=43 // pred_check
        _
      $region66: #{gpt_forward.9} parent=43 // pred_check_branch
        %962 = sbr.rel (%p959) target = $region68
      $region67: #{gpt_forward.9} parent=43 // pred_region
        %v963 = vld [vmem:[%s410] sm:$0xff]
        %v964 = vld [vmem:[#allocation5] sm:$0xff]
        %v965 = vadd.f32 %v963, %v964
        %v966 = vld [vmem:[%s5] sm:$0x1]
        %v968 = vlaneseq
        %v969 = vshrl.u32 %v968, 7
        %v970 = vsub.s32 0, %v969
        %v971 = vrot.slane %v966, %v970
        %v973 = vadd.f32 %v965, %v971
        %vm974 = vcmask 261120
        %975 = vst.msk [vmem:[%s462] sm:$0xff] %vm974, %v973
      $region68: #{gpt_forward.9} parent=43 // pred_fallthru
        _
      %p976 = scmp.lt.s32.totalorder %s23, 1
      %s977 = scalar_select %p976, %s23, 1
      %p978 = scmp.lt.s32.totalorder %s24, 0
      %s979 = scalar_select %p978, %s24, 0
      %s980 = sadd.s32 %s979, %s977
      %s981 = smul.addr %s980, 8
      %s982 = scalar_lea.vmem %s6, %s981
      // Predicated region
      $region69: #{gpt_forward.9} parent=43 // pred_check
        %p983 = pneg %p242
      $region70: #{gpt_forward.9} parent=43 // pred_check_branch
        %985 = sbr.rel (%p983) target = $region72
      $region71: #{gpt_forward.9} parent=43 // pred_region
        _
      $region72: #{gpt_forward.9} parent=43 // pred_fallthru
        _
    $region44: #{gpt_forward.9} parent=5 // pred_fallthru
      _
    %p986 = scmp.le.s32.totalorder 2, %s12
    // Predicated region
    $region73: #{gpt_forward.9} parent=5 // pred_check
      %p987 = pneg %p986
    $region74: #{gpt_forward.9} parent=5 // pred_check_branch
      %989 = sbr.rel (%p987) target = $region76
    $region75: #{gpt_forward.9} parent=5 // pred_region
      %s990 = ssub.s32 %s12, 2
      // Predicated region
      $region77: #{gpt_forward.9} parent=75 // pred_check
        %p991 = pneg %p248
      $region78: #{gpt_forward.9} parent=75 // pred_check_branch
        %993 = sbr.rel (%p991) target = $region80
      $region79: #{gpt_forward.9} parent=75 // pred_region
        %p994 = scmp.lt.s32.totalorder %s27, 1
        %s995 = scalar_select %p994, %s27, 1
        %p996 = scmp.lt.s32.totalorder %s28, 0
        %s997 = scalar_select %p996, %s28, 0
        %s998 = sadd.s32 %s997, %s995
        %s999 = smul.addr %s998, 8
        %s1000 = scalar_lea.vmem %s6, %s999
      $region80: #{gpt_forward.9} parent=75 // pred_fallthru
        _
    $region76: #{gpt_forward.9} parent=5 // pred_fallthru
      _
  $region6: #{gpt_forward.9} parent=0 // loop_footer
    %s16 = sadd.s32 1, %s12
  $region7: #{gpt_forward.9} parent=0 // loop_footer_branch
    %11 = sbr.rel target = $region3
  $region8: #{gpt_forward.9} parent=0 // loop_exit
    _

// kernel: gpt_forward.15
$region0: #{gpt_forward.15}
  #allocation0 [shape = 'u32[]', space=smem, size = 0x4, offset = 0x4, fixed_abs, tag = 'smem constant byte address 0x4 - core index']
  #allocation1 [shape = 'u32[144,128]{1,0:T(1,128)}', space=vmem, size = 0x12000, scoped, tag = 'internal scratch']
  %s0 = inlined_call_operand.vmem [shape: f32[16,32], index: 0, kind: input, shape index: {}]
  %s1 = inlined_call_operand.vmem [shape: f32[32,64], index: 1, kind: input, shape index: {}]
  %s2 = inlined_call_operand.vmem [shape: f32[1,64], index: 2, kind: input, shape index: {}]
  %s3 = inlined_call_operand.hbm [shape: f32[16,64], index: 3, kind: output, shape index: {}]
  %s4 = sld [smem:[#allocation0]]
  $region22: #{gpt_forward.15} parent=0
    _
  %s6 = ssub.s32 1, %s4
  %s7 = scalar_select 0, %s6, %s4
  $region1: #{gpt_forward.15} parent=0
    #allocation2 [shape = 'u8[8192]{0}', space=vmem, size = 0x2000, scoped, tag = 'output window, operand 0, single buffered']
    #allocation3 [shape = 's32[1]{0}', space=sflag, size = 0x4, scoped, tag = 'scoped memory for gpt_forward.15']
    %8 = vsyncpa [#allocation3], 0
    // Predicated region
    $region2: #{gpt_forward.15} parent=1 // pred_check
      _
    $region3: #{gpt_forward.15} parent=1 // pred_check_branch
      %10 = sbr.rel (0) target = $region5
    $region4: #{gpt_forward.15} parent=1 // pred_region
      _
    $region5: #{gpt_forward.15} parent=1 // pred_fallthru
      _
    // Predicated region
    $region6: #{gpt_forward.15} parent=1 // pred_check
      _
    $region7: #{gpt_forward.15} parent=1 // pred_check_branch
      %12 = sbr.rel (0) target = $region9
    $region8: #{gpt_forward.15} parent=1 // pred_region
      _
    $region9: #{gpt_forward.15} parent=1 // pred_fallthru
      _
    // Predicated region
    $region10: #{gpt_forward.15} parent=1 // pred_check
      _
    $region11: #{gpt_forward.15} parent=1 // pred_check_branch
      %14 = sbr.rel (0) target = $region13
    $region12: #{gpt_forward.15} parent=1 // pred_region
      _
    $region13: #{gpt_forward.15} parent=1 // pred_fallthru
      _
    %v15 = vld [vmem:[%s0] sm:$0xff]
    %v16 = vld [vmem:[%s0 + $0x8] sm:$0xff]
    %v17 = vld [vmem:[%s1] sm:$0xff]
    %v18 = vld [vmem:[%s1 + $0x8] sm:$0xff]
    %v19 = vld [vmem:[%s1 + $0x10] sm:$0xff]
    %v20 = vld [vmem:[%s1 + $0x18] sm:$0xff]
    %v21 = vld [vmem:[%s2] sm:$0x1]
    %v23 = vlaneseq
    %v24 = vshrl.u32 %v23, 7
    %v25 = vsub.s32 0, %v24
    %v26 = vrot.slane %v21, %v25
    %vm28 = vcmask 261120
    %v30 = vsel %vm28, %v15, 0
    %v33 = vsel %vm28, %v16, 0
    %35 = vmatprep.subr.mxu0 0.0
    %36 = vmatpush1.msra.mxu0 %v17
    %37 = vmatprep.subr.mxu0 0.0
    %38 = vmatpush1.msra.mxu0 %v18
    %39 = vmatprep.subr.mxu0 0.0
    %40 = vmatpush1.msra.mxu0 %v19
    %41 = vmatprep.subr.mxu0 0.0
    %42 = vmatpush1.msra.mxu0 %v20
    %43 = vmatprep.subr.mxu0 0.0
    %44 = vmatpush1.msra.mxu0 0.0
    %45 = vmatprep.subr.mxu0 0.0
    %46 = vmatpush1.msra.mxu0 0.0
    %47 = vmatprep.subr.mxu0 0.0
    %48 = vmatpush1.msra.mxu0 0.0
    %49 = vmatprep.subr.mxu0 0.0
    %50 = vmatpush1.msra.mxu0 0.0
    %51 = vmatprep.subr.mxu0 0.0
    %52 = vmatpush1.msra.mxu0 0.0
    %53 = vmatprep.subr.mxu0 0.0
    %54 = vmatpush1.msra.mxu0 0.0
    %55 = vmatprep.subr.mxu0 0.0
    %56 = vmatpush1.msra.mxu0 0.0
    %57 = vmatprep.subr.mxu0 0.0
    %58 = vmatpush1.msra.mxu0 0.0
    %59 = vmatprep.subr.mxu0 0.0
    %60 = vmatpush1.msra.mxu0 0.0
    %61 = vmatprep.subr.mxu0 0.0
    %62 = vmatpush1.msra.mxu0 0.0
    %63 = vmatprep.subr.mxu0 0.0
    %64 = vmatpush1.msra.mxu0 0.0
    %65 = vmatprep.subr.mxu0 0.0
    %66 = vmatpush1.msra.mxu0 0.0
    %67 = vmatprep.subr.mxu0 0.0
    %68 = vmatpush1.msra.mxu0 0.0
    %69 = vmatprep.subr.mxu0 0.0
    %70 = vmatpush1.msra.mxu0 0.0
    %71 = vmatprep.subr.mxu0 0.0
    %72 = vmatpush1.msra.mxu0 0.0
    %73 = vmatprep.subr.mxu0 0.0
    %74 = vmatpush1.msra.mxu0 0.0
    %75 = vmatprep.subr.mxu0 0.0
    %76 = vmatpush1.msra.mxu0 0.0
    %77 = vmatprep.subr.mxu0 0.0
    %78 = vmatpush1.msra.mxu0 0.0
    %79 = vmatprep.subr.mxu0 0.0
    %80 = vmatpush1.msra.mxu0 0.0
    %81 = vmatprep.subr.mxu0 0.0
    %82 = vmatpush1.msra.mxu0 0.0
    %83 = vmatprep.subr.mxu0 0.0
    %84 = vmatpush1.msra.mxu0 0.0
    %85 = vmatprep.subr.mxu0 0.0
    %86 = vmatpush1.msra.mxu0 0.0
    %87 = vmatprep.subr.mxu0 0.0
    %88 = vmatpush1.msra.mxu0 0.0
    %89 = vmatprep.subr.mxu0 0.0
    %90 = vmatpush1.msra.mxu0 0.0
    %91 = vmatprep.subr.mxu0 0.0
    %92 = vmatpush1.msra.mxu0 0.0
    %93 = vmatprep.subr.mxu0 0.0
    %94 = vmatpush1.msra.mxu0 0.0
    %95 = vmatprep.subr.mxu0 0.0
    %96 = vmatpush1.msra.mxu0 0.0
    %97 = vmatprep.subr.mxu0 0.0
    %98 = vmatpush1.msra.mxu0 0.0
    %99 = vmatprep.mubr.f32.mxu0 0.0
    %100 = vmatmul.mubr.f32.gmra.mrb[0].mxu0 %v30
    %v101 = vpop.f32.mrb[0].mxu0
    %v102 = vadd.f32 %v26, %v101
    %v103 = vpop.f32.mrb[0].mxu0
    %104 = vmatprep.mubr.f32.mxu0 0.0
    %105 = vmatmul.mubr.f32.gmra.mrb[0].mxu0 %v33
    %v106 = vpop.f32.mrb[0].mxu0
    %v107 = vadd.f32 %v26, %v106
    %v108 = vpop.f32.mrb[0].mxu0
    %109 = vdwg.mxu0
    %vm110 = vcmask 523264
    %111 = vst.msk [vmem:[#allocation2] sm:$0xff] %vm110, %v102
    %112 = vst.msk [vmem:[#allocation2 + $0x8] sm:$0xff] %vm110, %v107
    // Predicated region
    $region14: #{gpt_forward.15} parent=1 // pred_check
      _
    $region15: #{gpt_forward.15} parent=1 // pred_check_branch
      %114 = sbr.rel (0) target = $region17
    $region16: #{gpt_forward.15} parent=1 // pred_region
      %s116 = ssub.s32 256, 256
      %117 = vsyncadd [#allocation3], %s116
      %s118 = sshll.u32 [#allocation2], 4
      %s119 = int_to_ptr.vmem [resolvable:$true] %s118
      %124 = dma.vmem_to_hbm [thread:$0]  %s119, 256, %s3, [#allocation3], 128, 128, 8
    $region17: #{gpt_forward.15} parent=1 // pred_fallthru
      _
    // Predicated region
    $region18: #{gpt_forward.15} parent=1 // pred_check
      _
    $region19: #{gpt_forward.15} parent=1 // pred_check_branch
      %126 = sbr.rel (0) target = $region21
    $region20: #{gpt_forward.15} parent=1 // pred_region
      %127 = dma.done [#allocation3], 256
    $region21: #{gpt_forward.15} parent=1 // pred_fallthru
      _
    %128 = vsyncpa [#allocation3], 1

</llo_original>
